<compile_context>
chip_gen: v7x
topology: tpu7x:2x2x1
jax: 0.10.0
libtpu: 0.0.40
codegen_flags: <defaults>
</compile_context>

<pallas_src>
import functools

import jax
import jax.numpy as jnp
from jax import lax
from jax.experimental import pallas as pl
from jax.experimental.pallas import tpu as pltpu


def _layernorm(x, g, b, eps=1e-5):
    # PyTorch nn.LayerNorm: biased variance, eps inside the sqrt. f32 throughout.
    mu = jnp.mean(x, axis=-1, keepdims=True)
    var = jnp.mean((x - mu) ** 2, axis=-1, keepdims=True)
    return (x - mu) * lax.rsqrt(var + eps) * g + b


def attention_block_kernel(num_heads,
                           mask_ref, x_ref, ln1g_ref, ln1b_ref,
                           wqkv_ref, bqkv_ref, wo_ref, bo_ref,
                           ln2g_ref, ln2b_ref, w1_ref, b1_ref, w2_ref, b2_ref,
                           out_ref):
    T, D = x_ref.shape                      # T = TB * seq_len tokens in this tile
    H = num_heads
    HD = D // H
    scale = 1.0 / float(HD) ** 0.5

    x = x_ref[...]                          # f32 [T, D] (TB whole sequences)
    amask = mask_ref[...]                   # f32 [T, T] additive mask (0 / -1e30), precomputed

    # ---- attention sub-block: x + head_proj(attn(LN1(x))) ------------------------
    x1 = _layernorm(x, ln1g_ref[...], ln1b_ref[...])          # f32 elementwise

    # Fused QKV projection: one [T, D] @ [D, 3D] MXU push, bf16 operands, f32 accum.
    qkv = jnp.dot(x1.astype(jnp.bfloat16), wqkv_ref[...],
                  preferred_element_type=jnp.float32) + bqkv_ref[...]
    qkv_bf = qkv.astype(jnp.bfloat16)       # one cast; per-head slices reuse it

    heads = []
    for h in range(H):                      # small static loop; score/AV dots are a tiny FLOP share
        qh = qkv_bf[:, h * HD:(h + 1) * HD]
        kh = qkv_bf[:, D + h * HD:D + (h + 1) * HD]
        vh = qkv_bf[:, 2 * D + h * HD:2 * D + (h + 1) * HD]
        # q @ k^T without materializing a transpose; f32 accumulate.
        s = lax.dot_general(qh, kh, (((1,), (1,)), ((), ())),
                            preferred_element_type=jnp.float32) * scale
        s = s + amask                        # block-diagonal + causal (additive)
        s = s - jnp.max(s, axis=-1, keepdims=True)
        e = jnp.exp(s)                       # f32 softmax math
        att = e * pl.reciprocal(jnp.sum(e, axis=-1, keepdims=True), approx=True)
        # dropout_attention: identity (eval mode)
        heads.append(jnp.dot(att.astype(jnp.bfloat16), vh,
                             preferred_element_type=jnp.float32))   # [T, HD]

    # Concatenate heads at static lane offsets -> one dense K=D output projection.
    o_all = jnp.concatenate(heads, axis=-1).astype(jnp.bfloat16)     # [T, D]
    attn = jnp.dot(o_all, wo_ref[...], preferred_element_type=jnp.float32) + bo_ref[...]
    # dropout_residual: identity (eval mode)
    x2 = x + attn                            # residual around the attention block

    # ---- MLP sub-block: x2 + W2(gelu(W1(LN2(x2)))) --------------------------------
    f = _layernorm(x2, ln2g_ref[...], ln2b_ref[...])
    h1 = jnp.dot(f.astype(jnp.bfloat16), w1_ref[...],
                 preferred_element_type=jnp.float32) + b1_ref[...]
    g = jax.nn.gelu(h1, approximate=True)    # TODO(synk): exact erf GELU in PyTorch
    mlp = jnp.dot(g.astype(jnp.bfloat16), w2_ref[...],
                  preferred_element_type=jnp.float32) + b2_ref[...]
    out_ref[...] = (x2 + mlp).astype(out_ref.dtype)


def _pick_tile_batch(B, S, target_tokens):
    """Largest divisor TB of B with TB*S <= target_tokens (falls back to 1)."""
    best = 1
    for tb in range(1, B + 1):
        if B % tb == 0 and tb * S <= target_tokens:
            best = tb
    return best


def attention_block_forward(x, params, *, num_heads, use_mask=True,
                            target_tokens=256, single_buffer_weights=True):
    B, S, D = x.shape
    assert D % num_heads == 0

    TB = _pick_tile_batch(B, S, max(target_tokens, S))
    T = TB * S
    num_steps = B // TB

    # Additive same-sequence + causal mask, built ONCE outside the kernel.
    r = jnp.arange(T)
    valid = (r[:, None] // S) == (r[None, :] // S)   # sequences packed in one tile stay separate
    if use_mask:
        valid = valid & (r[None, :] <= r[:, None])   # causal within each sequence
    amask = jnp.where(valid, 0.0, -1e30).astype(jnp.float32)

    xf = x.reshape(B * S, D)                 # lane-dense token slab; reshaped back in glue
    p = params
    kernel = functools.partial(attention_block_kernel, num_heads)

    # Constant-index ("weight") specs. When the grid actually pipelines (>1 step),
    # single-buffer them so the weight set is not duplicated in VMEM (v7x: 64 MiB).
    w_kwargs = {}
    if single_buffer_weights and num_steps > 1:
        w_kwargs = dict(pipeline_mode=pl.Buffered(1))

    def full(arr):
        nd = arr.ndim
        return pl.BlockSpec(arr.shape, lambda i, _nd=nd: (0,) * _nd, **w_kwargs)

    out = pl.pallas_call(
        kernel,
        out_shape=jax.ShapeDtypeStruct((B * S, D), x.dtype),
        grid=(num_steps,),
        in_specs=[
            full(amask),
            pl.BlockSpec((T, D), lambda i: (i, 0)),
            full(p["ln1_g"]), full(p["ln1_b"]),
            full(p["wqkv"]), full(p["bqkv"]),
            full(p["wo"]), full(p["bo"]),
            full(p["ln2_g"]), full(p["ln2_b"]),
            full(p["w1"]), full(p["b1"]),
            full(p["w2"]), full(p["b2"]),
        ],
        out_specs=pl.BlockSpec((T, D), lambda i: (i, 0)),
        compiler_params=pltpu.CompilerParams(
            dimension_semantics=("parallel",),          # megacore / v7x dual-TC sharding
            vmem_limit_bytes=32 * 1024 * 1024),         # explicit budget, fits every generation
    )(amask, xf, p["ln1_g"], p["ln1_b"], p["wqkv"], p["bqkv"], p["wo"], p["bo"],
      p["ln2_g"], p["ln2_b"], p["w1"], p["b1"], p["w2"], p["b2"])

    return out.reshape(B, S, D)


def init_params(key, *, embedding_dim):
    D = embedding_dim
    ks = jax.random.split(key, 10)

    def nrm(k, shape, std=0.02):
        return jax.random.normal(k, shape, jnp.float32) * std

    wq, wk, wv = nrm(ks[0], (D, D)), nrm(ks[1], (D, D)), nrm(ks[2], (D, D))
    return dict(
        ln1_g=jnp.ones((1, D), jnp.float32),
        ln1_b=jnp.zeros((1, D), jnp.float32),
        # All Linear weights stored pre-transposed as [in, out] for x @ W + b.
        # Big matmul weights live in bf16 in HBM (half the DMA, full-rate MXU).
        wqkv=jnp.concatenate([wq, wk, wv], axis=1).astype(jnp.bfloat16),   # [D, 3D]
        bqkv=nrm(ks[3], (1, 3 * D)),
        wo=nrm(ks[4], (D, D)).astype(jnp.bfloat16),
        bo=nrm(ks[5], (1, D)),
        ln2_g=jnp.ones((1, D), jnp.float32),
        ln2_b=jnp.zeros((1, D), jnp.float32),
        w1=nrm(ks[6], (D, 4 * D)).astype(jnp.bfloat16),
        b1=nrm(ks[7], (1, 4 * D)),
        w2=nrm(ks[8], (4 * D, D)).astype(jnp.bfloat16),
        b2=nrm(ks[9], (1, D)),
    )


def reference_forward(x, p, *, num_heads, use_mask=True):
    """Pure-JAX f32 reference mirroring the PyTorch AttentionBlock forward."""
    B, S, D = x.shape
    HD = D // num_heads
    f32 = lambda a: a.astype(jnp.float32)

    def ln(v, g, b, eps=1e-5):
        mu = v.mean(-1, keepdims=True)
        var = ((v - mu) ** 2).mean(-1, keepdims=True)
        return (v - mu) / jnp.sqrt(var + eps) * g + b

    x1 = ln(x, p["ln1_g"][0], p["ln1_b"][0])
    qkv = x1 @ f32(p["wqkv"]) + p["bqkv"][0]
    q, k, v = qkv[..., :D], qkv[..., D:2 * D], qkv[..., 2 * D:]
    q = q.reshape(B, S, num_heads, HD).transpose(0, 2, 1, 3)
    k = k.reshape(B, S, num_heads, HD).transpose(0, 2, 1, 3)
    v = v.reshape(B, S, num_heads, HD).transpose(0, 2, 1, 3)
    att = jnp.einsum('bhid,bhjd->bhij', q, k) / jnp.sqrt(jnp.float32(HD))
    if use_mask:
        mask = jnp.tril(jnp.ones((S, S), jnp.float32))
        att = jnp.where(mask[None, None] == 0, -jnp.inf, att)
    att = jax.nn.softmax(att, axis=-1)
    o = jnp.einsum('bhij,bhjd->bhid', att, v)
    o = o.transpose(0, 2, 1, 3).reshape(B, S, D)
    o = o @ f32(p["wo"]) + p["bo"][0]
    x2 = x + o
    f = ln(x2, p["ln2_g"][0], p["ln2_b"][0])
    f = f @ f32(p["w1"]) + p["b1"][0]
    f = jax.nn.gelu(f, approximate=True)
    f = f @ f32(p["w2"]) + p["b2"][0]
    return x2 + f


if __name__ == "__main__":
    # Small config consistent with the module: block_size = 16 tokens, d = 128, 4 heads.
    B, S, D, H = 4, 16, 128, 4

    key = jax.random.PRNGKey(0)
    kx, kp = jax.random.split(key)
    x = jax.random.normal(kx, (B, S, D), jnp.float32)
    params = init_params(kp, embedding_dim=D)

    # Demo config: whole batch in one slab (T = 64, grid = (1,)).
    out = attention_block_forward(x, params, num_heads=H, use_mask=True)
    out = jax.block_until_ready(out)
    ref = reference_forward(x, params, num_heads=H, use_mask=True)

    assert out.shape == (B, S, D), out.shape
    assert bool(jnp.all(jnp.isfinite(out)))
    assert bool(jnp.allclose(out, ref, atol=2e-2, rtol=2e-2)), \
        float(jnp.max(jnp.abs(out - ref)))

    # Larger-slab check: T = 256 tokens per step (the MXU-filling configuration on v6e/v7x).
    B2 = 16
    x_big = jax.random.normal(jax.random.PRNGKey(1), (B2, S, D), jnp.float32)
    out_big = jax.block_until_ready(
        attention_block_forward(x_big, params, num_heads=H, use_mask=True))
    ref_big = reference_forward(x_big, params, num_heads=H, use_mask=True)
    assert bool(jnp.all(jnp.isfinite(out_big)))
    assert bool(jnp.allclose(out_big, ref_big, atol=2e-2, rtol=2e-2)), \
        float(jnp.max(jnp.abs(out_big - ref_big)))

    print("KERNEL_OK")
</pallas_src>

<mosaic_0001>
module attributes {stable_mosaic.version = 11 : i64} {
  func.func @attention_block_kernel(%arg0: i32, %arg1: memref<64x64xf32, #tpu.memory_space<vmem>>, %arg2: memref<64x128xf32, #tpu.memory_space<vmem>>, %arg3: memref<1x128xf32, #tpu.memory_space<vmem>>, %arg4: memref<1x128xf32, #tpu.memory_space<vmem>>, %arg5: memref<128x384xbf16, #tpu.memory_space<vmem>>, %arg6: memref<1x384xf32, #tpu.memory_space<vmem>>, %arg7: memref<128x128xbf16, #tpu.memory_space<vmem>>, %arg8: memref<1x128xf32, #tpu.memory_space<vmem>>, %arg9: memref<1x128xf32, #tpu.memory_space<vmem>>, %arg10: memref<1x128xf32, #tpu.memory_space<vmem>>, %arg11: memref<128x512xbf16, #tpu.memory_space<vmem>>, %arg12: memref<1x512xf32, #tpu.memory_space<vmem>>, %arg13: memref<512x128xbf16, #tpu.memory_space<vmem>>, %arg14: memref<1x128xf32, #tpu.memory_space<vmem>>, %arg15: memref<64x128xf32, #tpu.memory_space<vmem>>) attributes {dimension_semantics = [#tpu.dimension_semantics<parallel>], iteration_bounds = array<i64: 1>, scalar_prefetch = 0 : i64, scratch_operands = 0 : i64, tpu.core_type = #tpu.core_type<tc>, window_params = [{pipeline_mode = #tpu.pipeline_mode<synchronous>, transform_indices = @transform_0, window_bounds = array<i64: 64, 64>}, {transform_indices = @transform_1, window_bounds = array<i64: 64, 128>}, {pipeline_mode = #tpu.pipeline_mode<synchronous>, transform_indices = @transform_2, window_bounds = array<i64: 1, 128>}, {pipeline_mode = #tpu.pipeline_mode<synchronous>, transform_indices = @transform_3, window_bounds = array<i64: 1, 128>}, {pipeline_mode = #tpu.pipeline_mode<synchronous>, transform_indices = @transform_4, window_bounds = array<i64: 128, 384>}, {pipeline_mode = #tpu.pipeline_mode<synchronous>, transform_indices = @transform_5, window_bounds = array<i64: 1, 384>}, {pipeline_mode = #tpu.pipeline_mode<synchronous>, transform_indices = @transform_6, window_bounds = array<i64: 128, 128>}, {pipeline_mode = #tpu.pipeline_mode<synchronous>, transform_indices = @transform_7, window_bounds = array<i64: 1, 128>}, {pipeline_mode = #tpu.pipeline_mode<synchronous>, transform_indices = @transform_8, window_bounds = array<i64: 1, 128>}, {pipeline_mode = #tpu.pipeline_mode<synchronous>, transform_indices = @transform_9, window_bounds = array<i64: 1, 128>}, {pipeline_mode = #tpu.pipeline_mode<synchronous>, transform_indices = @transform_10, window_bounds = array<i64: 128, 512>}, {pipeline_mode = #tpu.pipeline_mode<synchronous>, transform_indices = @transform_11, window_bounds = array<i64: 1, 512>}, {pipeline_mode = #tpu.pipeline_mode<synchronous>, transform_indices = @transform_12, window_bounds = array<i64: 512, 128>}, {pipeline_mode = #tpu.pipeline_mode<synchronous>, transform_indices = @transform_13, window_bounds = array<i64: 1, 128>}, {transform_indices = @transform_14, window_bounds = array<i64: 64, 128>}]} {
    %c0 = arith.constant 0 : index
    %c0_0 = arith.constant 0 : index
    %0 = vector.load %arg2[%c0, %c0_0] : memref<64x128xf32, #tpu.memory_space<vmem>>, vector<64x128xf32>
    %c0_1 = arith.constant 0 : index
    %c0_2 = arith.constant 0 : index
    %1 = vector.load %arg1[%c0_1, %c0_2] : memref<64x64xf32, #tpu.memory_space<vmem>>, vector<64x64xf32>
    %c0_3 = arith.constant 0 : index
    %c0_4 = arith.constant 0 : index
    %2 = vector.load %arg3[%c0_3, %c0_4] : memref<1x128xf32, #tpu.memory_space<vmem>>, vector<1x128xf32>
    %c0_5 = arith.constant 0 : index
    %c0_6 = arith.constant 0 : index
    %3 = vector.load %arg4[%c0_5, %c0_6] : memref<1x128xf32, #tpu.memory_space<vmem>>, vector<1x128xf32>
    %cst = arith.constant dense<0.000000e+00> : vector<64xf32>
    %4 = vector.multi_reduction <add>, %0, %cst [1] : vector<64x128xf32> to vector<64xf32>
    %5 = vector.shape_cast %4 : vector<64xf32> to vector<64x1xf32>
    %cst_7 = arith.constant 1.280000e+02 : f32
    %6 = vector.broadcast %cst_7 : f32 to vector<64x1xf32>
    %7 = arith.divf %5, %6 : vector<64x1xf32>
    %8 = vector.broadcast %7 : vector<64x1xf32> to vector<64x128xf32>
    %9 = arith.subf %0, %8 : vector<64x128xf32>
    %10 = arith.mulf %9, %9 : vector<64x128xf32>
    %cst_8 = arith.constant dense<0.000000e+00> : vector<64xf32>
    %11 = vector.multi_reduction <add>, %10, %cst_8 [1] : vector<64x128xf32> to vector<64xf32>
    %12 = vector.shape_cast %11 : vector<64xf32> to vector<64x1xf32>
    %cst_9 = arith.constant 1.280000e+02 : f32
    %13 = vector.broadcast %cst_9 : f32 to vector<64x1xf32>
    %14 = arith.divf %12, %13 : vector<64x1xf32>
    %15 = vector.broadcast %7 : vector<64x1xf32> to vector<64x128xf32>
    %16 = arith.subf %0, %15 : vector<64x128xf32>
    %cst_10 = arith.constant 9.99999974E-6 : f32
    %17 = vector.broadcast %cst_10 : f32 to vector<64x1xf32>
    %18 = arith.addf %14, %17 : vector<64x1xf32>
    %19 = math.rsqrt %18 : vector<64x1xf32>
    %20 = vector.broadcast %19 : vector<64x1xf32> to vector<64x128xf32>
    %21 = arith.mulf %16, %20 : vector<64x128xf32>
    %22 = vector.broadcast %2 : vector<1x128xf32> to vector<64x128xf32>
    %23 = arith.mulf %21, %22 : vector<64x128xf32>
    %24 = vector.broadcast %3 : vector<1x128xf32> to vector<64x128xf32>
    %25 = arith.addf %23, %24 : vector<64x128xf32>
    %26 = arith.truncf %25 : vector<64x128xf32> to vector<64x128xbf16>
    %c0_11 = arith.constant 0 : index
    %c0_12 = arith.constant 0 : index
    %27 = vector.load %arg5[%c0_11, %c0_12] : memref<128x384xbf16, #tpu.memory_space<vmem>>, vector<128x384xbf16>
    %cst_13 = arith.constant dense<0.000000e+00> : vector<64x384xf32>
    %28 = tpu.matmul %26, %27, %cst_13 {dimension_numbers = #tpu.dot_dimension_numbers<[1], [0], [0], [1], [0, 0, 1, 1], [], []>} : vector<64x128xbf16>, vector<128x384xbf16>, vector<64x384xf32> -> vector<64x384xf32>
    %c0_14 = arith.constant 0 : index
    %c0_15 = arith.constant 0 : index
    %29 = vector.load %arg6[%c0_14, %c0_15] : memref<1x384xf32, #tpu.memory_space<vmem>>, vector<1x384xf32>
    %30 = vector.broadcast %29 : vector<1x384xf32> to vector<64x384xf32>
    %31 = arith.addf %28, %30 : vector<64x384xf32>
    %32 = arith.truncf %31 : vector<64x384xf32> to vector<64x384xbf16>
    %33 = vector.extract_strided_slice %32 {offsets = [0, 0], sizes = [64, 32], strides = [1, 1]} : vector<64x384xbf16> to vector<64x32xbf16>
    %34 = vector.extract_strided_slice %32 {offsets = [0, 128], sizes = [64, 32], strides = [1, 1]} : vector<64x384xbf16> to vector<64x32xbf16>
    %35 = vector.extract_strided_slice %32 {offsets = [0, 256], sizes = [64, 32], strides = [1, 1]} : vector<64x384xbf16> to vector<64x32xbf16>
    %cst_16 = arith.constant dense<0.000000e+00> : vector<64x64xf32>
    %36 = tpu.matmul %33, %34, %cst_16 {dimension_numbers = #tpu.dot_dimension_numbers<[1], [1], [0], [0], [0, 0, 1, 0], [], []>} : vector<64x32xbf16>, vector<64x32xbf16>, vector<64x64xf32> -> vector<64x64xf32>
    %cst_17 = arith.constant 0.176776692 : f32
    %37 = vector.broadcast %cst_17 : f32 to vector<64x64xf32>
    %38 = arith.mulf %36, %37 : vector<64x64xf32>
    %39 = arith.addf %38, %1 : vector<64x64xf32>
    %cst_18 = arith.constant dense<0xFF800000> : vector<64xf32>
    %40 = vector.multi_reduction <maximumf>, %39, %cst_18 [1] : vector<64x64xf32> to vector<64xf32>
    %41 = vector.shape_cast %40 : vector<64xf32> to vector<64x1xf32>
    %42 = vector.broadcast %41 : vector<64x1xf32> to vector<64x64xf32>
    %43 = arith.subf %39, %42 : vector<64x64xf32>
    %44 = math.exp %43 : vector<64x64xf32>
    %cst_19 = arith.constant dense<0.000000e+00> : vector<64xf32>
    %45 = vector.multi_reduction <add>, %44, %cst_19 [1] : vector<64x64xf32> to vector<64xf32>
    %46 = vector.shape_cast %45 : vector<64xf32> to vector<64x1xf32>
    %47 = tpu.reciprocal %46 {approx = true} : vector<64x1xf32> -> vector<64x1xf32>
    %48 = vector.broadcast %47 : vector<64x1xf32> to vector<64x64xf32>
    %49 = arith.mulf %44, %48 : vector<64x64xf32>
    %50 = arith.truncf %49 : vector<64x64xf32> to vector<64x64xbf16>
    %cst_20 = arith.constant dense<0.000000e+00> : vector<64x32xf32>
    %51 = tpu.matmul %50, %35, %cst_20 {dimension_numbers = #tpu.dot_dimension_numbers<[1], [0], [0], [1], [0, 0, 1, 1], [], []>} : vector<64x64xbf16>, vector<64x32xbf16>, vector<64x32xf32> -> vector<64x32xf32>
    %52 = vector.extract_strided_slice %32 {offsets = [0, 32], sizes = [64, 32], strides = [1, 1]} : vector<64x384xbf16> to vector<64x32xbf16>
    %53 = vector.extract_strided_slice %32 {offsets = [0, 160], sizes = [64, 32], strides = [1, 1]} : vector<64x384xbf16> to vector<64x32xbf16>
    %54 = vector.extract_strided_slice %32 {offsets = [0, 288], sizes = [64, 32], strides = [1, 1]} : vector<64x384xbf16> to vector<64x32xbf16>
    %cst_21 = arith.constant dense<0.000000e+00> : vector<64x64xf32>
    %55 = tpu.matmul %52, %53, %cst_21 {dimension_numbers = #tpu.dot_dimension_numbers<[1], [1], [0], [0], [0, 0, 1, 0], [], []>} : vector<64x32xbf16>, vector<64x32xbf16>, vector<64x64xf32> -> vector<64x64xf32>
    %cst_22 = arith.constant 0.176776692 : f32
    %56 = vector.broadcast %cst_22 : f32 to vector<64x64xf32>
    %57 = arith.mulf %55, %56 : vector<64x64xf32>
    %58 = arith.addf %57, %1 : vector<64x64xf32>
    %cst_23 = arith.constant dense<0xFF800000> : vector<64xf32>
    %59 = vector.multi_reduction <maximumf>, %58, %cst_23 [1] : vector<64x64xf32> to vector<64xf32>
    %60 = vector.shape_cast %59 : vector<64xf32> to vector<64x1xf32>
    %61 = vector.broadcast %60 : vector<64x1xf32> to vector<64x64xf32>
    %62 = arith.subf %58, %61 : vector<64x64xf32>
    %63 = math.exp %62 : vector<64x64xf32>
    %cst_24 = arith.constant dense<0.000000e+00> : vector<64xf32>
    %64 = vector.multi_reduction <add>, %63, %cst_24 [1] : vector<64x64xf32> to vector<64xf32>
    %65 = vector.shape_cast %64 : vector<64xf32> to vector<64x1xf32>
    %66 = tpu.reciprocal %65 {approx = true} : vector<64x1xf32> -> vector<64x1xf32>
    %67 = vector.broadcast %66 : vector<64x1xf32> to vector<64x64xf32>
    %68 = arith.mulf %63, %67 : vector<64x64xf32>
    %69 = arith.truncf %68 : vector<64x64xf32> to vector<64x64xbf16>
    %cst_25 = arith.constant dense<0.000000e+00> : vector<64x32xf32>
    %70 = tpu.matmul %69, %54, %cst_25 {dimension_numbers = #tpu.dot_dimension_numbers<[1], [0], [0], [1], [0, 0, 1, 1], [], []>} : vector<64x64xbf16>, vector<64x32xbf16>, vector<64x32xf32> -> vector<64x32xf32>
    %71 = vector.extract_strided_slice %32 {offsets = [0, 64], sizes = [64, 32], strides = [1, 1]} : vector<64x384xbf16> to vector<64x32xbf16>
    %72 = vector.extract_strided_slice %32 {offsets = [0, 192], sizes = [64, 32], strides = [1, 1]} : vector<64x384xbf16> to vector<64x32xbf16>
    %73 = vector.extract_strided_slice %32 {offsets = [0, 320], sizes = [64, 32], strides = [1, 1]} : vector<64x384xbf16> to vector<64x32xbf16>
    %cst_26 = arith.constant dense<0.000000e+00> : vector<64x64xf32>
    %74 = tpu.matmul %71, %72, %cst_26 {dimension_numbers = #tpu.dot_dimension_numbers<[1], [1], [0], [0], [0, 0, 1, 0], [], []>} : vector<64x32xbf16>, vector<64x32xbf16>, vector<64x64xf32> -> vector<64x64xf32>
    %cst_27 = arith.constant 0.176776692 : f32
    %75 = vector.broadcast %cst_27 : f32 to vector<64x64xf32>
    %76 = arith.mulf %74, %75 : vector<64x64xf32>
    %77 = arith.addf %76, %1 : vector<64x64xf32>
    %cst_28 = arith.constant dense<0xFF800000> : vector<64xf32>
    %78 = vector.multi_reduction <maximumf>, %77, %cst_28 [1] : vector<64x64xf32> to vector<64xf32>
    %79 = vector.shape_cast %78 : vector<64xf32> to vector<64x1xf32>
    %80 = vector.broadcast %79 : vector<64x1xf32> to vector<64x64xf32>
    %81 = arith.subf %77, %80 : vector<64x64xf32>
    %82 = math.exp %81 : vector<64x64xf32>
    %cst_29 = arith.constant dense<0.000000e+00> : vector<64xf32>
    %83 = vector.multi_reduction <add>, %82, %cst_29 [1] : vector<64x64xf32> to vector<64xf32>
    %84 = vector.shape_cast %83 : vector<64xf32> to vector<64x1xf32>
    %85 = tpu.reciprocal %84 {approx = true} : vector<64x1xf32> -> vector<64x1xf32>
    %86 = vector.broadcast %85 : vector<64x1xf32> to vector<64x64xf32>
    %87 = arith.mulf %82, %86 : vector<64x64xf32>
    %88 = arith.truncf %87 : vector<64x64xf32> to vector<64x64xbf16>
    %cst_30 = arith.constant dense<0.000000e+00> : vector<64x32xf32>
    %89 = tpu.matmul %88, %73, %cst_30 {dimension_numbers = #tpu.dot_dimension_numbers<[1], [0], [0], [1], [0, 0, 1, 1], [], []>} : vector<64x64xbf16>, vector<64x32xbf16>, vector<64x32xf32> -> vector<64x32xf32>
    %90 = vector.extract_strided_slice %32 {offsets = [0, 96], sizes = [64, 32], strides = [1, 1]} : vector<64x384xbf16> to vector<64x32xbf16>
    %91 = vector.extract_strided_slice %32 {offsets = [0, 224], sizes = [64, 32], strides = [1, 1]} : vector<64x384xbf16> to vector<64x32xbf16>
    %92 = vector.extract_strided_slice %32 {offsets = [0, 352], sizes = [64, 32], strides = [1, 1]} : vector<64x384xbf16> to vector<64x32xbf16>
    %cst_31 = arith.constant dense<0.000000e+00> : vector<64x64xf32>
    %93 = tpu.matmul %90, %91, %cst_31 {dimension_numbers = #tpu.dot_dimension_numbers<[1], [1], [0], [0], [0, 0, 1, 0], [], []>} : vector<64x32xbf16>, vector<64x32xbf16>, vector<64x64xf32> -> vector<64x64xf32>
    %cst_32 = arith.constant 0.176776692 : f32
    %94 = vector.broadcast %cst_32 : f32 to vector<64x64xf32>
    %95 = arith.mulf %93, %94 : vector<64x64xf32>
    %96 = arith.addf %95, %1 : vector<64x64xf32>
    %cst_33 = arith.constant dense<0xFF800000> : vector<64xf32>
    %97 = vector.multi_reduction <maximumf>, %96, %cst_33 [1] : vector<64x64xf32> to vector<64xf32>
    %98 = vector.shape_cast %97 : vector<64xf32> to vector<64x1xf32>
    %99 = vector.broadcast %98 : vector<64x1xf32> to vector<64x64xf32>
    %100 = arith.subf %96, %99 : vector<64x64xf32>
    %101 = math.exp %100 : vector<64x64xf32>
    %cst_34 = arith.constant dense<0.000000e+00> : vector<64xf32>
    %102 = vector.multi_reduction <add>, %101, %cst_34 [1] : vector<64x64xf32> to vector<64xf32>
    %103 = vector.shape_cast %102 : vector<64xf32> to vector<64x1xf32>
    %104 = tpu.reciprocal %103 {approx = true} : vector<64x1xf32> -> vector<64x1xf32>
    %105 = vector.broadcast %104 : vector<64x1xf32> to vector<64x64xf32>
    %106 = arith.mulf %101, %105 : vector<64x64xf32>
    %107 = arith.truncf %106 : vector<64x64xf32> to vector<64x64xbf16>
    %cst_35 = arith.constant dense<0.000000e+00> : vector<64x32xf32>
    %108 = tpu.matmul %107, %92, %cst_35 {dimension_numbers = #tpu.dot_dimension_numbers<[1], [0], [0], [1], [0, 0, 1, 1], [], []>} : vector<64x64xbf16>, vector<64x32xbf16>, vector<64x32xf32> -> vector<64x32xf32>
    %109 = tpu.concatenate %51, %70, %89, %108 in 1 : vector<64x32xf32>, vector<64x32xf32>, vector<64x32xf32>, vector<64x32xf32> -> vector<64x128xf32>
    %110 = arith.truncf %109 : vector<64x128xf32> to vector<64x128xbf16>
    %c0_36 = arith.constant 0 : index
    %c0_37 = arith.constant 0 : index
    %111 = vector.load %arg7[%c0_36, %c0_37] : memref<128x128xbf16, #tpu.memory_space<vmem>>, vector<128x128xbf16>
    %cst_38 = arith.constant dense<0.000000e+00> : vector<64x128xf32>
    %112 = tpu.matmul %110, %111, %cst_38 {dimension_numbers = #tpu.dot_dimension_numbers<[1], [0], [0], [1], [0, 0, 1, 1], [], []>} : vector<64x128xbf16>, vector<128x128xbf16>, vector<64x128xf32> -> vector<64x128xf32>
    %c0_39 = arith.constant 0 : index
    %c0_40 = arith.constant 0 : index
    %113 = vector.load %arg8[%c0_39, %c0_40] : memref<1x128xf32, #tpu.memory_space<vmem>>, vector<1x128xf32>
    %114 = vector.broadcast %113 : vector<1x128xf32> to vector<64x128xf32>
    %115 = arith.addf %112, %114 : vector<64x128xf32>
    %116 = arith.addf %0, %115 : vector<64x128xf32>
    %c0_41 = arith.constant 0 : index
    %c0_42 = arith.constant 0 : index
    %117 = vector.load %arg9[%c0_41, %c0_42] : memref<1x128xf32, #tpu.memory_space<vmem>>, vector<1x128xf32>
    %c0_43 = arith.constant 0 : index
    %c0_44 = arith.constant 0 : index
    %118 = vector.load %arg10[%c0_43, %c0_44] : memref<1x128xf32, #tpu.memory_space<vmem>>, vector<1x128xf32>
    %cst_45 = arith.constant dense<0.000000e+00> : vector<64xf32>
    %119 = vector.multi_reduction <add>, %116, %cst_45 [1] : vector<64x128xf32> to vector<64xf32>
    %120 = vector.shape_cast %119 : vector<64xf32> to vector<64x1xf32>
    %cst_46 = arith.constant 1.280000e+02 : f32
    %121 = vector.broadcast %cst_46 : f32 to vector<64x1xf32>
    %122 = arith.divf %120, %121 : vector<64x1xf32>
    %123 = vector.broadcast %122 : vector<64x1xf32> to vector<64x128xf32>
    %124 = arith.subf %116, %123 : vector<64x128xf32>
    %125 = arith.mulf %124, %124 : vector<64x128xf32>
    %cst_47 = arith.constant dense<0.000000e+00> : vector<64xf32>
    %126 = vector.multi_reduction <add>, %125, %cst_47 [1] : vector<64x128xf32> to vector<64xf32>
    %127 = vector.shape_cast %126 : vector<64xf32> to vector<64x1xf32>
    %cst_48 = arith.constant 1.280000e+02 : f32
    %128 = vector.broadcast %cst_48 : f32 to vector<64x1xf32>
    %129 = arith.divf %127, %128 : vector<64x1xf32>
    %130 = vector.broadcast %122 : vector<64x1xf32> to vector<64x128xf32>
    %131 = arith.subf %116, %130 : vector<64x128xf32>
    %cst_49 = arith.constant 9.99999974E-6 : f32
    %132 = vector.broadcast %cst_49 : f32 to vector<64x1xf32>
    %133 = arith.addf %129, %132 : vector<64x1xf32>
    %134 = math.rsqrt %133 : vector<64x1xf32>
    %135 = vector.broadcast %134 : vector<64x1xf32> to vector<64x128xf32>
    %136 = arith.mulf %131, %135 : vector<64x128xf32>
    %137 = vector.broadcast %117 : vector<1x128xf32> to vector<64x128xf32>
    %138 = arith.mulf %136, %137 : vector<64x128xf32>
    %139 = vector.broadcast %118 : vector<1x128xf32> to vector<64x128xf32>
    %140 = arith.addf %138, %139 : vector<64x128xf32>
    %141 = arith.truncf %140 : vector<64x128xf32> to vector<64x128xbf16>
    %c0_50 = arith.constant 0 : index
    %c0_51 = arith.constant 0 : index
    %142 = vector.load %arg11[%c0_50, %c0_51] : memref<128x512xbf16, #tpu.memory_space<vmem>>, vector<128x512xbf16>
    %cst_52 = arith.constant dense<0.000000e+00> : vector<64x512xf32>
    %143 = tpu.matmul %141, %142, %cst_52 {dimension_numbers = #tpu.dot_dimension_numbers<[1], [0], [0], [1], [0, 0, 1, 1], [], []>} : vector<64x128xbf16>, vector<128x512xbf16>, vector<64x512xf32> -> vector<64x512xf32>
    %c0_53 = arith.constant 0 : index
    %c0_54 = arith.constant 0 : index
    %144 = vector.load %arg12[%c0_53, %c0_54] : memref<1x512xf32, #tpu.memory_space<vmem>>, vector<1x512xf32>
    %145 = vector.broadcast %144 : vector<1x512xf32> to vector<64x512xf32>
    %146 = arith.addf %143, %145 : vector<64x512xf32>
    %147 = arith.mulf %146, %146 : vector<64x512xf32>
    %148 = arith.mulf %146, %147 : vector<64x512xf32>
    %cst_55 = arith.constant 4.471500e-02 : f32
    %149 = vector.broadcast %cst_55 : f32 to vector<64x512xf32>
    %150 = arith.mulf %149, %148 : vector<64x512xf32>
    %151 = arith.addf %146, %150 : vector<64x512xf32>
    %cst_56 = arith.constant 0.797884583 : f32
    %152 = vector.broadcast %cst_56 : f32 to vector<64x512xf32>
    %153 = arith.mulf %152, %151 : vector<64x512xf32>
    %154 = math.tanh %153 : vector<64x512xf32>
    %cst_57 = arith.constant 1.000000e+00 : f32
    %155 = vector.broadcast %cst_57 : f32 to vector<64x512xf32>
    %156 = arith.addf %155, %154 : vector<64x512xf32>
    %cst_58 = arith.constant 5.000000e-01 : f32
    %157 = vector.broadcast %cst_58 : f32 to vector<64x512xf32>
    %158 = arith.mulf %157, %156 : vector<64x512xf32>
    %159 = arith.mulf %146, %158 : vector<64x512xf32>
    %160 = arith.truncf %159 : vector<64x512xf32> to vector<64x512xbf16>
    %c0_59 = arith.constant 0 : index
    %c0_60 = arith.constant 0 : index
    %161 = vector.load %arg13[%c0_59, %c0_60] : memref<512x128xbf16, #tpu.memory_space<vmem>>, vector<512x128xbf16>
    %cst_61 = arith.constant dense<0.000000e+00> : vector<64x128xf32>
    %162 = tpu.matmul %160, %161, %cst_61 {dimension_numbers = #tpu.dot_dimension_numbers<[1], [0], [0], [1], [0, 0, 1, 1], [], []>} : vector<64x512xbf16>, vector<512x128xbf16>, vector<64x128xf32> -> vector<64x128xf32>
    %c0_62 = arith.constant 0 : index
    %c0_63 = arith.constant 0 : index
    %163 = vector.load %arg14[%c0_62, %c0_63] : memref<1x128xf32, #tpu.memory_space<vmem>>, vector<1x128xf32>
    %164 = vector.broadcast %163 : vector<1x128xf32> to vector<64x128xf32>
    %165 = arith.addf %162, %164 : vector<64x128xf32>
    %166 = arith.addf %116, %165 : vector<64x128xf32>
    %c0_64 = arith.constant 0 : index
    %c0_65 = arith.constant 0 : index
    %167 = vector.load %arg15[%c0_64, %c0_65] : memref<64x128xf32, #tpu.memory_space<vmem>>, vector<64x128xf32>
    tpu.vector_store %arg15[%c0_64, %c0_65], %166 {strides = array<i32>} : memref<64x128xf32, #tpu.memory_space<vmem>>, vector<64x128xf32>,
    return
  }
  func.func @transform_0(%arg0: i32) -> (i32, i32) {
    %c0_i32 = arith.constant 0 : i32
    %c0_i32_0 = arith.constant 0 : i32
    %c0_i32_1 = arith.constant 0 : i32
    return %c0_i32, %c0_i32_0 : i32, i32
  }
  func.func @transform_1(%arg0: i32) -> (i32, i32) {
    %c0_i32 = arith.constant 0 : i32
    %c0_i32_0 = arith.constant 0 : i32
    return %arg0, %c0_i32 : i32, i32
  }
  func.func @transform_2(%arg0: i32) -> (i32, i32) {
    %c0_i32 = arith.constant 0 : i32
    %c0_i32_0 = arith.constant 0 : i32
    %c0_i32_1 = arith.constant 0 : i32
    return %c0_i32, %c0_i32_0 : i32, i32
  }
  func.func @transform_3(%arg0: i32) -> (i32, i32) {
    %c0_i32 = arith.constant 0 : i32
    %c0_i32_0 = arith.constant 0 : i32
    %c0_i32_1 = arith.constant 0 : i32
    return %c0_i32, %c0_i32_0 : i32, i32
  }
  func.func @transform_4(%arg0: i32) -> (i32, i32) {
    %c0_i32 = arith.constant 0 : i32
    %c0_i32_0 = arith.constant 0 : i32
    %c0_i32_1 = arith.constant 0 : i32
    return %c0_i32, %c0_i32_0 : i32, i32
  }
  func.func @transform_5(%arg0: i32) -> (i32, i32) {
    %c0_i32 = arith.constant 0 : i32
    %c0_i32_0 = arith.constant 0 : i32
    %c0_i32_1 = arith.constant 0 : i32
    return %c0_i32, %c0_i32_0 : i32, i32
  }
  func.func @transform_6(%arg0: i32) -> (i32, i32) {
    %c0_i32 = arith.constant 0 : i32
    %c0_i32_0 = arith.constant 0 : i32
    %c0_i32_1 = arith.constant 0 : i32
    return %c0_i32, %c0_i32_0 : i32, i32
  }
  func.func @transform_7(%arg0: i32) -> (i32, i32) {
    %c0_i32 = arith.constant 0 : i32
    %c0_i32_0 = arith.constant 0 : i32
    %c0_i32_1 = arith.constant 0 : i32
    return %c0_i32, %c0_i32_0 : i32, i32
  }
  func.func @transform_8(%arg0: i32) -> (i32, i32) {
    %c0_i32 = arith.constant 0 : i32
    %c0_i32_0 = arith.constant 0 : i32
    %c0_i32_1 = arith.constant 0 : i32
    return %c0_i32, %c0_i32_0 : i32, i32
  }
  func.func @transform_9(%arg0: i32) -> (i32, i32) {
    %c0_i32 = arith.constant 0 : i32
    %c0_i32_0 = arith.constant 0 : i32
    %c0_i32_1 = arith.constant 0 : i32
    return %c0_i32, %c0_i32_0 : i32, i32
  }
  func.func @transform_10(%arg0: i32) -> (i32, i32) {
    %c0_i32 = arith.constant 0 : i32
    %c0_i32_0 = arith.constant 0 : i32
    %c0_i32_1 = arith.constant 0 : i32
    return %c0_i32, %c0_i32_0 : i32, i32
  }
  func.func @transform_11(%arg0: i32) -> (i32, i32) {
    %c0_i32 = arith.constant 0 : i32
    %c0_i32_0 = arith.constant 0 : i32
    %c0_i32_1 = arith.constant 0 : i32
    return %c0_i32, %c0_i32_0 : i32, i32
  }
  func.func @transform_12(%arg0: i32) -> (i32, i32) {
    %c0_i32 = arith.constant 0 : i32
    %c0_i32_0 = arith.constant 0 : i32
    %c0_i32_1 = arith.constant 0 : i32
    return %c0_i32, %c0_i32_0 : i32, i32
  }
  func.func @transform_13(%arg0: i32) -> (i32, i32) {
    %c0_i32 = arith.constant 0 : i32
    %c0_i32_0 = arith.constant 0 : i32
    %c0_i32_1 = arith.constant 0 : i32
    return %c0_i32, %c0_i32_0 : i32, i32
  }
  func.func @transform_14(%arg0: i32) -> (i32, i32) {
    %c0_i32 = arith.constant 0 : i32
    %c0_i32_0 = arith.constant 0 : i32
    return %arg0, %c0_i32 : i32, i32
  }
}

</mosaic_0001>

<llo_original>
// kernel: tpu_custom_call.1
$region0: #{tpu_custom_call.1}
  #allocation0 [shape = 'u32[]', space=smem, size = 0x4, offset = 0x4, fixed_abs, tag = 'smem constant byte address 0x4 - core index']
  #allocation1 [shape = 'u32[144,128]{1,0:T(1,128)}', space=vmem, size = 0x12000, scoped, tag = 'internal scratch']
  %s0 = inlined_call_operand.hbm [shape: f32[64,64], index: 0, kind: input, shape index: {}]
  %s1 = inlined_call_operand.hbm [shape: f32[64,128], index: 1, kind: input, shape index: {}]
  %s2 = inlined_call_operand.hbm [shape: f32[1,128], index: 2, kind: input, shape index: {}]
  %s3 = inlined_call_operand.vmem [shape: f32[1,128], index: 3, kind: input, shape index: {}]
  %s4 = inlined_call_operand.hbm [shape: bf16[128,384], index: 4, kind: input, shape index: {}]
  %s5 = inlined_call_operand.vmem [shape: f32[1,384], index: 5, kind: input, shape index: {}]
  %s6 = inlined_call_operand.hbm [shape: bf16[128,128], index: 6, kind: input, shape index: {}]
  %s7 = inlined_call_operand.vmem [shape: f32[1,128], index: 7, kind: input, shape index: {}]
  %s8 = inlined_call_operand.vmem [shape: f32[1,128], index: 8, kind: input, shape index: {}]
  %s9 = inlined_call_operand.vmem [shape: f32[1,128], index: 9, kind: input, shape index: {}]
  %s10 = inlined_call_operand.hbm [shape: bf16[128,512], index: 10, kind: input, shape index: {}]
  %s11 = inlined_call_operand.vmem [shape: f32[1,512], index: 11, kind: input, shape index: {}]
  %s12 = inlined_call_operand.hbm [shape: bf16[512,128], index: 12, kind: input, shape index: {}]
  %s13 = inlined_call_operand.vmem [shape: f32[1,128], index: 13, kind: input, shape index: {}]
  %s14 = inlined_call_operand.hbm [shape: f32[64,128], index: 14, kind: output, shape index: {}]
  %s15 = sld [smem:[#allocation0]]
  $region94: #{tpu_custom_call.1} parent=0
    _
  %s17 = ssub.s32 1, %s15
  %s18 = scalar_select 0, %s17, %s15
  $region1: #{tpu_custom_call.1} parent=0
    #allocation2 [shape = 'u8[32768]{0}', space=vmem, size = 0x8000, scoped, tag = 'input window, operand 0, single buffered']
    #allocation3 [shape = 's32[1]{0}', space=sflag, size = 0x4, scoped, tag = 'scoped memory for tpu_custom_call.1']
    #allocation4 [shape = 's32[1]{0}', space=sflag, size = 0x4, scoped, tag = 'scoped memory for tpu_custom_call.1']
    #allocation5 [shape = 'u8[32768]{0}', space=vmem, size = 0x8000, scoped, tag = 'input window, operand 1, single buffered']
    #allocation6 [shape = 's32[1]{0}', space=sflag, size = 0x4, scoped, tag = 'scoped memory for tpu_custom_call.1']
    #allocation7 [shape = 'u8[512]{0}', space=vmem, size = 0x400, scoped, tag = 'input window, operand 2, single buffered']
    #allocation8 [shape = 'u8[98304]{0}', space=vmem, size = 0x18000, scoped, tag = 'input window, operand 4, single buffered']
    #allocation9 [shape = 's32[1]{0}', space=sflag, size = 0x4, scoped, tag = 'scoped memory for tpu_custom_call.1']
    #allocation10 [shape = 'u8[32768]{0}', space=vmem, size = 0x8000, scoped, tag = 'input window, operand 6, single buffered']
    #allocation11 [shape = 'u8[131072]{0}', space=vmem, size = 0x20000, scoped, tag = 'input window, operand 10, single buffered']
    #allocation12 [shape = 's32[1]{0}', space=sflag, size = 0x4, scoped, tag = 'scoped memory for tpu_custom_call.1']
    #allocation13 [shape = 'u8[131072]{0}', space=vmem, size = 0x20000, scoped, tag = 'input window, operand 12, single buffered']
    #allocation14 [shape = 'u8[32768]{0}', space=vmem, size = 0x8000, scoped, tag = 'output window, operand 0, single buffered']
    %19 = vsyncpa [#allocation3], 0
    %20 = vsyncpa [#allocation6], 0
    %21 = vsyncpa [#allocation9], 0
    %22 = vsyncpa [#allocation12], 0
    %23 = vsyncpa [#allocation4], 0
    // Predicated region
    $region2: #{tpu_custom_call.1} parent=1 // pred_check
      _
    $region3: #{tpu_custom_call.1} parent=1 // pred_check_branch
      %25 = sbr.rel (0) target = $region5
    $region4: #{tpu_custom_call.1} parent=1 // pred_region
      %s27 = ssub.s32 1024, 1024
      %28 = vsyncadd [#allocation3], %s27
      %s29 = sshll.u32 [#allocation2], 4
      %s30 = int_to_ptr.vmem [resolvable:$true] %s29
      %35 = dma.hbm_to_vmem [thread:$0]  %s0, 1024, %s30, [#allocation3], 128, 128, 8
    $region5: #{tpu_custom_call.1} parent=1 // pred_fallthru
      _
    // Predicated region
    $region6: #{tpu_custom_call.1} parent=1 // pred_check
      _
    $region7: #{tpu_custom_call.1} parent=1 // pred_check_branch
      %37 = sbr.rel (0) target = $region9
    $region8: #{tpu_custom_call.1} parent=1 // pred_region
      %s39 = ssub.s32 1024, 1024
      %40 = vsyncadd [#allocation6], %s39
      %s41 = sshll.u32 [#allocation5], 4
      %s42 = int_to_ptr.vmem [resolvable:$true] %s41
      %47 = dma.hbm_to_vmem [thread:$0]  %s1, 1024, %s42, [#allocation6], 128, 128, 8
    $region9: #{tpu_custom_call.1} parent=1 // pred_fallthru
      _
    // Predicated region
    $region10: #{tpu_custom_call.1} parent=1 // pred_check
      _
    $region11: #{tpu_custom_call.1} parent=1 // pred_check_branch
      %49 = sbr.rel (0) target = $region13
    $region12: #{tpu_custom_call.1} parent=1 // pred_region
      %s51 = ssub.s32 16, 16
      %52 = vsyncadd [#allocation6], %s51
      %s54 = sshll.u32 [#allocation7], 4
      %s55 = int_to_ptr.vmem [resolvable:$true] %s54
      %57 = dma.hbm_to_vmem [thread:$0]  %s2, 16, %s55, [#allocation6]
    $region13: #{tpu_custom_call.1} parent=1 // pred_fallthru
      _
    // Predicated region
    $region14: #{tpu_custom_call.1} parent=1 // pred_check
      _
    $region15: #{tpu_custom_call.1} parent=1 // pred_check_branch
      %59 = sbr.rel (0) target = $region17
    $region16: #{tpu_custom_call.1} parent=1 // pred_region
      _
    $region17: #{tpu_custom_call.1} parent=1 // pred_fallthru
      _
    // Predicated region
    $region18: #{tpu_custom_call.1} parent=1 // pred_check
      _
    $region19: #{tpu_custom_call.1} parent=1 // pred_check_branch
      %61 = sbr.rel (0) target = $region21
    $region20: #{tpu_custom_call.1} parent=1 // pred_region
      %s63 = ssub.s32 3072, 3072
      %64 = vsyncadd [#allocation9], %s63
      %s65 = sshll.u32 [#allocation8], 4
      %s66 = int_to_ptr.vmem [resolvable:$true] %s65
      %71 = dma.hbm_to_vmem [thread:$0]  %s4, 3072, %s66, [#allocation9], 192, 192, 12
    $region21: #{tpu_custom_call.1} parent=1 // pred_fallthru
      _
    // Predicated region
    $region22: #{tpu_custom_call.1} parent=1 // pred_check
      _
    $region23: #{tpu_custom_call.1} parent=1 // pred_check_branch
      %73 = sbr.rel (0) target = $region25
    $region24: #{tpu_custom_call.1} parent=1 // pred_region
      _
    $region25: #{tpu_custom_call.1} parent=1 // pred_fallthru
      _
    // Predicated region
    $region26: #{tpu_custom_call.1} parent=1 // pred_check
      _
    $region27: #{tpu_custom_call.1} parent=1 // pred_check_branch
      %75 = sbr.rel (0) target = $region29
    $region28: #{tpu_custom_call.1} parent=1 // pred_region
      %s77 = ssub.s32 1024, 1024
      %78 = vsyncadd [#allocation9], %s77
      %s79 = sshll.u32 [#allocation10], 4
      %s80 = int_to_ptr.vmem [resolvable:$true] %s79
      %85 = dma.hbm_to_vmem [thread:$0]  %s6, 1024, %s80, [#allocation9], 64, 64, 4
    $region29: #{tpu_custom_call.1} parent=1 // pred_fallthru
      _
    // Predicated region
    $region30: #{tpu_custom_call.1} parent=1 // pred_check
      _
    $region31: #{tpu_custom_call.1} parent=1 // pred_check_branch
      %87 = sbr.rel (0) target = $region33
    $region32: #{tpu_custom_call.1} parent=1 // pred_region
      _
    $region33: #{tpu_custom_call.1} parent=1 // pred_fallthru
      _
    // Predicated region
    $region34: #{tpu_custom_call.1} parent=1 // pred_check
      _
    $region35: #{tpu_custom_call.1} parent=1 // pred_check_branch
      %89 = sbr.rel (0) target = $region37
    $region36: #{tpu_custom_call.1} parent=1 // pred_region
      _
    $region37: #{tpu_custom_call.1} parent=1 // pred_fallthru
      _
    // Predicated region
    $region38: #{tpu_custom_call.1} parent=1 // pred_check
      _
    $region39: #{tpu_custom_call.1} parent=1 // pred_check_branch
      %91 = sbr.rel (0) target = $region41
    $region40: #{tpu_custom_call.1} parent=1 // pred_region
      _
    $region41: #{tpu_custom_call.1} parent=1 // pred_fallthru
      _
    // Predicated region
    $region42: #{tpu_custom_call.1} parent=1 // pred_check
      _
    $region43: #{tpu_custom_call.1} parent=1 // pred_check_branch
      %93 = sbr.rel (0) target = $region45
    $region44: #{tpu_custom_call.1} parent=1 // pred_region
      %s95 = ssub.s32 4096, 4096
      %96 = vsyncadd [#allocation12], %s95
      %s97 = sshll.u32 [#allocation11], 4
      %s98 = int_to_ptr.vmem [resolvable:$true] %s97
      %103 = dma.hbm_to_vmem [thread:$0]  %s10, 4096, %s98, [#allocation12], 256, 256, 16
    $region45: #{tpu_custom_call.1} parent=1 // pred_fallthru
      _
    // Predicated region
    $region46: #{tpu_custom_call.1} parent=1 // pred_check
      _
    $region47: #{tpu_custom_call.1} parent=1 // pred_check_branch
      %105 = sbr.rel (0) target = $region49
    $region48: #{tpu_custom_call.1} parent=1 // pred_region
      _
    $region49: #{tpu_custom_call.1} parent=1 // pred_fallthru
      _
    // Predicated region
    $region50: #{tpu_custom_call.1} parent=1 // pred_check
      _
    $region51: #{tpu_custom_call.1} parent=1 // pred_check_branch
      %107 = sbr.rel (0) target = $region53
    $region52: #{tpu_custom_call.1} parent=1 // pred_region
      %s109 = ssub.s32 4096, 4096
      %110 = vsyncadd [#allocation12], %s109
      %s111 = sshll.u32 [#allocation13], 4
      %s112 = int_to_ptr.vmem [resolvable:$true] %s111
      %117 = dma.hbm_to_vmem [thread:$0]  %s12, 4096, %s112, [#allocation12], 64, 64, 4
    $region53: #{tpu_custom_call.1} parent=1 // pred_fallthru
      _
    // Predicated region
    $region54: #{tpu_custom_call.1} parent=1 // pred_check
      _
    $region55: #{tpu_custom_call.1} parent=1 // pred_check_branch
      %119 = sbr.rel (0) target = $region57
    $region56: #{tpu_custom_call.1} parent=1 // pred_region
      _
    $region57: #{tpu_custom_call.1} parent=1 // pred_fallthru
      _
    // Predicated region
    $region58: #{tpu_custom_call.1} parent=1 // pred_check
      _
    $region59: #{tpu_custom_call.1} parent=1 // pred_check_branch
      %121 = sbr.rel (0) target = $region61
    $region60: #{tpu_custom_call.1} parent=1 // pred_region
      %122 = dma.done [#allocation3], 1024
    $region61: #{tpu_custom_call.1} parent=1 // pred_fallthru
      _
    // Predicated region
    $region62: #{tpu_custom_call.1} parent=1 // pred_check
      _
    $region63: #{tpu_custom_call.1} parent=1 // pred_check_branch
      %124 = sbr.rel (0) target = $region65
    $region64: #{tpu_custom_call.1} parent=1 // pred_region
      %125 = dma.done [#allocation6], 1024
    $region65: #{tpu_custom_call.1} parent=1 // pred_fallthru
      _
    // Predicated region
    $region66: #{tpu_custom_call.1} parent=1 // pred_check
      _
    $region67: #{tpu_custom_call.1} parent=1 // pred_check_branch
      %127 = sbr.rel (0) target = $region69
    $region68: #{tpu_custom_call.1} parent=1 // pred_region
      %128 = dma.done [#allocation6], 16
    $region69: #{tpu_custom_call.1} parent=1 // pred_fallthru
      _
    // Predicated region
    $region70: #{tpu_custom_call.1} parent=1 // pred_check
      _
    $region71: #{tpu_custom_call.1} parent=1 // pred_check_branch
      %130 = sbr.rel (0) target = $region73
    $region72: #{tpu_custom_call.1} parent=1 // pred_region
      %131 = dma.done [#allocation9], 3072
    $region73: #{tpu_custom_call.1} parent=1 // pred_fallthru
      _
    // Predicated region
    $region74: #{tpu_custom_call.1} parent=1 // pred_check
      _
    $region75: #{tpu_custom_call.1} parent=1 // pred_check_branch
      %133 = sbr.rel (0) target = $region77
    $region76: #{tpu_custom_call.1} parent=1 // pred_region
      %134 = dma.done [#allocation9], 1024
    $region77: #{tpu_custom_call.1} parent=1 // pred_fallthru
      _
    // Predicated region
    $region78: #{tpu_custom_call.1} parent=1 // pred_check
      _
    $region79: #{tpu_custom_call.1} parent=1 // pred_check_branch
      %136 = sbr.rel (0) target = $region81
    $region80: #{tpu_custom_call.1} parent=1 // pred_region
      %137 = dma.done [#allocation12], 4096
    $region81: #{tpu_custom_call.1} parent=1 // pred_fallthru
      _
    // Predicated region
    $region82: #{tpu_custom_call.1} parent=1 // pred_check
      _
    $region83: #{tpu_custom_call.1} parent=1 // pred_check_branch
      %139 = sbr.rel (0) target = $region85
    $region84: #{tpu_custom_call.1} parent=1 // pred_region
      %140 = dma.done [#allocation12], 4096
    $region85: #{tpu_custom_call.1} parent=1 // pred_fallthru
      _
    %v142 = vld [vmem:[#allocation5] sm:$0xff]
    %v143 = vld [vmem:[#allocation5 + $0x8] sm:$0xff]
    %v144 = vld [vmem:[#allocation5 + $0x10] sm:$0xff]
    %v145 = vld [vmem:[#allocation5 + $0x18] sm:$0xff]
    %v146 = vld [vmem:[#allocation5 + $0x20] sm:$0xff]
    %v147 = vld [vmem:[#allocation5 + $0x28] sm:$0xff]
    %v148 = vld [vmem:[#allocation5 + $0x30] sm:$0xff]
    %v149 = vld [vmem:[#allocation5 + $0x38] sm:$0xff]
    %v150 = vld [vmem:[#allocation2] sm:$0xff]
    %v151 = vld [vmem:[#allocation2 + $0x8] sm:$0xff]
    %v152 = vld [vmem:[#allocation2 + $0x10] sm:$0xff]
    %v153 = vld [vmem:[#allocation2 + $0x18] sm:$0xff]
    %v154 = vld [vmem:[#allocation2 + $0x20] sm:$0xff]
    %v155 = vld [vmem:[#allocation2 + $0x28] sm:$0xff]
    %v156 = vld [vmem:[#allocation2 + $0x30] sm:$0xff]
    %v157 = vld [vmem:[#allocation2 + $0x38] sm:$0xff]
    %v158 = vld [vmem:[#allocation7] sm:$0x1]
    %v159 = vld [vmem:[%s3] sm:$0x1]
    %160 = vadd.xlane.f32.xlu0 %v142
    %v161 = vpop.xlane.xlu0 %160
    %162 = vadd.xlane.f32.xlu0 %v143
    %v163 = vpop.xlane.xlu0 %162
    %164 = vadd.xlane.f32.xlu0 %v144
    %v165 = vpop.xlane.xlu0 %164
    %166 = vadd.xlane.f32.xlu0 %v145
    %v167 = vpop.xlane.xlu0 %166
    %168 = vadd.xlane.f32.xlu0 %v146
    %v169 = vpop.xlane.xlu0 %168
    %170 = vadd.xlane.f32.xlu0 %v147
    %v171 = vpop.xlane.xlu0 %170
    %172 = vadd.xlane.f32.xlu0 %v148
    %v173 = vpop.xlane.xlu0 %172
    %174 = vadd.xlane.f32.xlu0 %v149
    %v175 = vpop.xlane.xlu0 %174
    %v176 = vrcp.pop 128.0
    %v177 = vmul.f32 %v161, %v176
    %v178 = vmul.f32 %v163, %v176
    %v179 = vmul.f32 %v165, %v176
    %v180 = vmul.f32 %v167, %v176
    %v181 = vmul.f32 %v169, %v176
    %v182 = vmul.f32 %v171, %v176
    %v183 = vmul.f32 %v173, %v176
    %v184 = vmul.f32 %v175, %v176
    %v185 = vsub.f32 %v142, %v177
    %v186 = vsub.f32 %v143, %v178
    %v187 = vsub.f32 %v144, %v179
    %v188 = vsub.f32 %v145, %v180
    %v189 = vsub.f32 %v146, %v181
    %v190 = vsub.f32 %v147, %v182
    %v191 = vsub.f32 %v148, %v183
    %v192 = vsub.f32 %v149, %v184
    %v193 = vmul.f32 %v185, %v185
    %v194 = vmul.f32 %v186, %v186
    %v195 = vmul.f32 %v187, %v187
    %v196 = vmul.f32 %v188, %v188
    %v197 = vmul.f32 %v189, %v189
    %v198 = vmul.f32 %v190, %v190
    %v199 = vmul.f32 %v191, %v191
    %v200 = vmul.f32 %v192, %v192
    %201 = vadd.xlane.f32.xlu0 %v193
    %v202 = vpop.xlane.xlu0 %201
    %203 = vadd.xlane.f32.xlu0 %v194
    %v204 = vpop.xlane.xlu0 %203
    %205 = vadd.xlane.f32.xlu0 %v195
    %v206 = vpop.xlane.xlu0 %205
    %207 = vadd.xlane.f32.xlu0 %v196
    %v208 = vpop.xlane.xlu0 %207
    %209 = vadd.xlane.f32.xlu0 %v197
    %v210 = vpop.xlane.xlu0 %209
    %211 = vadd.xlane.f32.xlu0 %v198
    %v212 = vpop.xlane.xlu0 %211
    %213 = vadd.xlane.f32.xlu0 %v199
    %v214 = vpop.xlane.xlu0 %213
    %215 = vadd.xlane.f32.xlu0 %v200
    %v216 = vpop.xlane.xlu0 %215
    %v217 = vmul.f32 %v202, %v176
    %v218 = vmul.f32 %v204, %v176
    %v219 = vmul.f32 %v206, %v176
    %v220 = vmul.f32 %v208, %v176
    %v221 = vmul.f32 %v210, %v176
    %v222 = vmul.f32 %v212, %v176
    %v223 = vmul.f32 %v214, %v176
    %v224 = vmul.f32 %v216, %v176
    %v225 = vadd.f32 %v217, 1e-05
    %v226 = vadd.f32 %v218, 1e-05
    %v227 = vadd.f32 %v219, 1e-05
    %v228 = vadd.f32 %v220, 1e-05
    %v229 = vadd.f32 %v221, 1e-05
    %v230 = vadd.f32 %v222, 1e-05
    %v231 = vadd.f32 %v223, 1e-05
    %v232 = vadd.f32 %v224, 1e-05
    %v233 = vrsqrt.pop %v225
    %v234 = vrsqrt.pop %v226
    %v235 = vrsqrt.pop %v227
    %v236 = vrsqrt.pop %v228
    %v237 = vrsqrt.pop %v229
    %v238 = vrsqrt.pop %v230
    %v239 = vrsqrt.pop %v231
    %v240 = vrsqrt.pop %v232
    %v241 = vmul.f32 %v185, %v233
    %v242 = vmul.f32 %v186, %v234
    %v243 = vmul.f32 %v187, %v235
    %v244 = vmul.f32 %v188, %v236
    %v245 = vmul.f32 %v189, %v237
    %v246 = vmul.f32 %v190, %v238
    %v247 = vmul.f32 %v191, %v239
    %v248 = vmul.f32 %v192, %v240
    %v250 = vlaneseq
    %v251 = vshrl.u32 %v250, 7
    %v252 = vsub.s32 0, %v251
    %v253 = vrot.slane %v158, %v252
    %v255 = vmul.f32 %v241, %v253
    %v256 = vmul.f32 %v242, %v253
    %v257 = vmul.f32 %v243, %v253
    %v258 = vmul.f32 %v244, %v253
    %v259 = vmul.f32 %v245, %v253
    %v260 = vmul.f32 %v246, %v253
    %v261 = vmul.f32 %v247, %v253
    %v262 = vmul.f32 %v248, %v253
    %v264 = vlaneseq
    %v265 = vshrl.u32 %v264, 7
    %v266 = vsub.s32 0, %v265
    %v267 = vrot.slane %v159, %v266
    %v269 = vadd.f32 %v255, %v267
    %v270 = vadd.f32 %v256, %v267
    %v271 = vadd.f32 %v257, %v267
    %v272 = vadd.f32 %v258, %v267
    %v273 = vadd.f32 %v259, %v267
    %v274 = vadd.f32 %v260, %v267
    %v275 = vadd.f32 %v261, %v267
    %v276 = vadd.f32 %v262, %v267
    %v277 = vpack.c.bf16 %v270, %v269
    %v278 = vpack.c.bf16 %v272, %v271
    %v279 = vpack.c.bf16 %v274, %v273
    %v280 = vpack.c.bf16 %v276, %v275
    %v281 = vld [vmem:[#allocation8] sm:$0xff]
    %v282 = vld [vmem:[#allocation8 + $0x8] sm:$0xf]
    %v283 = vld [vmem:[#allocation8 + $0xc] sm:$0xff]
    %v284 = vld [vmem:[#allocation8 + $0x14] sm:$0xf]
    %v285 = vld [vmem:[#allocation8 + $0x18] sm:$0xff]
    %v286 = vld [vmem:[#allocation8 + $0x20] sm:$0xf]
    %v287 = vld [vmem:[#allocation8 + $0x24] sm:$0xff]
    %v288 = vld [vmem:[#allocation8 + $0x2c] sm:$0xf]
    %v289 = vld [vmem:[#allocation8 + $0x30] sm:$0xff]
    %v290 = vld [vmem:[#allocation8 + $0x38] sm:$0xf]
    %v291 = vld [vmem:[#allocation8 + $0x3c] sm:$0xff]
    %v292 = vld [vmem:[#allocation8 + $0x44] sm:$0xf]
    %v293 = vld [vmem:[#allocation8 + $0x48] sm:$0xff]
    %v294 = vld [vmem:[#allocation8 + $0x50] sm:$0xf]
    %v295 = vld [vmem:[#allocation8 + $0x54] sm:$0xff]
    %v296 = vld [vmem:[#allocation8 + $0x5c] sm:$0xf]
    %v297 = vld [vmem:[#allocation8 + $0x60] sm:$0xff]
    %v298 = vld [vmem:[#allocation8 + $0x68] sm:$0xf]
    %v299 = vld [vmem:[#allocation8 + $0x6c] sm:$0xff]
    %v300 = vld [vmem:[#allocation8 + $0x74] sm:$0xf]
    %v301 = vld [vmem:[#allocation8 + $0x78] sm:$0xff]
    %v302 = vld [vmem:[#allocation8 + $0x80] sm:$0xf]
    %v303 = vld [vmem:[#allocation8 + $0x84] sm:$0xff]
    %v304 = vld [vmem:[#allocation8 + $0x8c] sm:$0xf]
    %v305 = vld [vmem:[#allocation8 + $0x90] sm:$0xff]
    %v306 = vld [vmem:[#allocation8 + $0x98] sm:$0xf]
    %v307 = vld [vmem:[#allocation8 + $0x9c] sm:$0xff]
    %v308 = vld [vmem:[#allocation8 + $0xa4] sm:$0xf]
    %v309 = vld [vmem:[#allocation8 + $0xa8] sm:$0xff]
    %v310 = vld [vmem:[#allocation8 + $0xb0] sm:$0xf]
    %v311 = vld [vmem:[#allocation8 + $0xb4] sm:$0xff]
    %v312 = vld [vmem:[#allocation8 + $0xbc] sm:$0xf]
    %v313 = vld [vmem:[%s5] sm:$0x7]
    %v315 = vlaneseq
    %v316 = vshrl.u32 %v315, 7
    %v317 = vsub.s32 0, %v316
    %v318 = vrot.slane %v313, %v317
    %v319 = vlaneseq
    %v320 = vshrl.u32 %v319, 7
    %v321 = vsub.s32 1, %v320
    %v322 = vrot.slane %v313, %v321
    %v323 = vlaneseq
    %v324 = vshrl.u32 %v323, 7
    %v325 = vsub.s32 2, %v324
    %v326 = vrot.slane %v313, %v325
    %v362 = vunpack.c.l.b16 %v281
    %v363 = vunpack.c.h.b16 %v281
    %v364 = vunpack.c.l.b16 %v282
    %v365 = vunpack.c.l.b16 %v283
    %v366 = vunpack.c.h.b16 %v283
    %v367 = vunpack.c.l.b16 %v284
    %v368 = vunpack.c.l.b16 %v285
    %v369 = vunpack.c.h.b16 %v285
    %v370 = vunpack.c.l.b16 %v286
    %v371 = vunpack.c.l.b16 %v287
    %v372 = vunpack.c.h.b16 %v287
    %v373 = vunpack.c.l.b16 %v288
    %v374 = vunpack.c.l.b16 %v289
    %v375 = vunpack.c.h.b16 %v289
    %v376 = vunpack.c.l.b16 %v290
    %v377 = vunpack.c.l.b16 %v291
    %v378 = vunpack.c.h.b16 %v291
    %v379 = vunpack.c.l.b16 %v292
    %v380 = vunpack.c.l.b16 %v293
    %v381 = vunpack.c.h.b16 %v293
    %v382 = vunpack.c.l.b16 %v294
    %v383 = vunpack.c.l.b16 %v295
    %v384 = vunpack.c.h.b16 %v295
    %v385 = vunpack.c.l.b16 %v296
    %v386 = vunpack.c.l.b16 %v297
    %v387 = vunpack.c.h.b16 %v297
    %v388 = vunpack.c.l.b16 %v298
    %v389 = vunpack.c.l.b16 %v299
    %v390 = vunpack.c.h.b16 %v299
    %v391 = vunpack.c.l.b16 %v300
    %v392 = vunpack.c.l.b16 %v301
    %v393 = vunpack.c.h.b16 %v301
    %v394 = vunpack.c.l.b16 %v302
    %v395 = vunpack.c.l.b16 %v303
    %v396 = vunpack.c.h.b16 %v303
    %v397 = vunpack.c.l.b16 %v304
    %v398 = vunpack.c.l.b16 %v305
    %v399 = vunpack.c.h.b16 %v305
    %v400 = vunpack.c.l.b16 %v306
    %v401 = vunpack.c.l.b16 %v307
    %v402 = vunpack.c.h.b16 %v307
    %v403 = vunpack.c.l.b16 %v308
    %v404 = vunpack.c.l.b16 %v309
    %v405 = vunpack.c.h.b16 %v309
    %v406 = vunpack.c.l.b16 %v310
    %v407 = vunpack.c.l.b16 %v311
    %v408 = vunpack.c.h.b16 %v311
    %v409 = vunpack.c.l.b16 %v312
    %v410 = vpack.c.b16 %v365, %v362
    %v411 = vpack.c.b16 %v366, %v363
    %v412 = vpack.c.b16 %v367, %v364
    %v413 = vpack.c.b16 %v371, %v368
    %v414 = vpack.c.b16 %v372, %v369
    %v415 = vpack.c.b16 %v373, %v370
    %v416 = vpack.c.b16 %v377, %v374
    %v417 = vpack.c.b16 %v378, %v375
    %v418 = vpack.c.b16 %v379, %v376
    %v419 = vpack.c.b16 %v383, %v380
    %v420 = vpack.c.b16 %v384, %v381
    %v421 = vpack.c.b16 %v385, %v382
    %v422 = vpack.c.b16 %v389, %v386
    %v423 = vpack.c.b16 %v390, %v387
    %v424 = vpack.c.b16 %v391, %v388
    %v425 = vpack.c.b16 %v395, %v392
    %v426 = vpack.c.b16 %v396, %v393
    %v427 = vpack.c.b16 %v397, %v394
    %v428 = vpack.c.b16 %v401, %v398
    %v429 = vpack.c.b16 %v402, %v399
    %v430 = vpack.c.b16 %v403, %v400
    %v431 = vpack.c.b16 %v407, %v404
    %v432 = vpack.c.b16 %v408, %v405
    %v433 = vpack.c.b16 %v409, %v406
    %458 = vmatprep.subr.bf16.mxu0 %v411
    %459 = vmatpush1.bf16.msra.mxu0 %v410
    %460 = vmatprep.subr.bf16.mxu0 %v414
    %461 = vmatpush1.bf16.msra.mxu0 %v413
    %462 = vmatprep.subr.bf16.mxu0 %v417
    %463 = vmatpush1.bf16.msra.mxu0 %v416
    %464 = vmatprep.subr.bf16.mxu0 %v420
    %465 = vmatpush1.bf16.msra.mxu0 %v419
    %466 = vmatprep.subr.bf16.mxu0 %v423
    %467 = vmatpush1.bf16.msra.mxu0 %v422
    %468 = vmatprep.subr.bf16.mxu0 %v426
    %469 = vmatpush1.bf16.msra.mxu0 %v425
    %470 = vmatprep.subr.bf16.mxu0 %v429
    %471 = vmatpush1.bf16.msra.mxu0 %v428
    %472 = vmatprep.subr.bf16.mxu0 %v432
    %473 = vmatpush1.bf16.msra.mxu0 %v431
    %474 = vmatprep.subr.bf16.mxu0 0
    %475 = vmatpush1.bf16.msra.mxu0 0
    %476 = vmatprep.subr.bf16.mxu0 0
    %477 = vmatpush1.bf16.msra.mxu0 0
    %478 = vmatprep.subr.bf16.mxu0 0
    %479 = vmatpush1.bf16.msra.mxu0 0
    %480 = vmatprep.subr.bf16.mxu0 0
    %481 = vmatpush1.bf16.msra.mxu0 0
    %482 = vmatprep.subr.bf16.mxu0 0
    %483 = vmatpush1.bf16.msra.mxu0 0
    %484 = vmatprep.subr.bf16.mxu0 0
    %485 = vmatpush1.bf16.msra.mxu0 0
    %486 = vmatprep.subr.bf16.mxu0 0
    %487 = vmatpush1.bf16.msra.mxu0 0
    %488 = vmatprep.subr.bf16.mxu0 0
    %489 = vmatpush1.bf16.msra.mxu0 0
    %490 = vmatprep.mubr.bf16.mxu0 0
    %491 = vmatmul.mubr.bf16.gmra.mrb[0].mxu0 %v277
    %v492 = vpop.f32.mrb[0].mxu0
    %v493 = vadd.f32 %v318, %v492
    %v494 = vpop.f32.mrb[0].mxu0
    %v495 = vadd.f32 %v322, %v494
    %v496 = vpop.f32.mrb[0].mxu0
    %v497 = vadd.f32 %v318, %v496
    %v498 = vpop.f32.mrb[0].mxu0
    %v499 = vadd.f32 %v322, %v498
    %500 = vmatprep.mubr.bf16.mxu0 0
    %501 = vmatmul.mubr.bf16.gmra.mrb[0].mxu0 %v278
    %v502 = vpop.f32.mrb[0].mxu0
    %v503 = vadd.f32 %v318, %v502
    %v504 = vpop.f32.mrb[0].mxu0
    %v505 = vadd.f32 %v322, %v504
    %v506 = vpop.f32.mrb[0].mxu0
    %v507 = vadd.f32 %v318, %v506
    %v508 = vpop.f32.mrb[0].mxu0
    %v509 = vadd.f32 %v322, %v508
    %510 = vmatprep.mubr.bf16.mxu0 0
    %511 = vmatmul.mubr.bf16.gmra.mrb[0].mxu0 %v279
    %v512 = vpop.f32.mrb[0].mxu0
    %v513 = vadd.f32 %v318, %v512
    %v514 = vpop.f32.mrb[0].mxu0
    %v515 = vadd.f32 %v322, %v514
    %v516 = vpop.f32.mrb[0].mxu0
    %v517 = vadd.f32 %v318, %v516
    %v518 = vpop.f32.mrb[0].mxu0
    %v519 = vadd.f32 %v322, %v518
    %520 = vmatprep.mubr.bf16.mxu0 0
    %521 = vmatmul.mubr.bf16.gmra.mrb[0].mxu0 %v280
    %v522 = vpop.f32.mrb[0].mxu0
    %v523 = vadd.f32 %v318, %v522
    %v524 = vpop.f32.mrb[0].mxu0
    %v525 = vadd.f32 %v322, %v524
    %v526 = vpop.f32.mrb[0].mxu0
    %v527 = vadd.f32 %v318, %v526
    %v528 = vpop.f32.mrb[0].mxu0
    %v529 = vadd.f32 %v322, %v528
    %530 = vdwg.mxu0
    %531 = vmatprep.subr.bf16.mxu0 0
    %532 = vmatpush1.bf16.msra.mxu0 %v412
    %533 = vmatprep.subr.bf16.mxu0 0
    %534 = vmatpush1.bf16.msra.mxu0 %v415
    %535 = vmatprep.subr.bf16.mxu0 0
    %536 = vmatpush1.bf16.msra.mxu0 %v418
    %537 = vmatprep.subr.bf16.mxu0 0
    %538 = vmatpush1.bf16.msra.mxu0 %v421
    %539 = vmatprep.subr.bf16.mxu0 0
    %540 = vmatpush1.bf16.msra.mxu0 %v424
    %541 = vmatprep.subr.bf16.mxu0 0
    %542 = vmatpush1.bf16.msra.mxu0 %v427
    %543 = vmatprep.subr.bf16.mxu0 0
    %544 = vmatpush1.bf16.msra.mxu0 %v430
    %545 = vmatprep.subr.bf16.mxu0 0
    %546 = vmatpush1.bf16.msra.mxu0 %v433
    %547 = vmatprep.subr.bf16.mxu0 0
    %548 = vmatpush1.bf16.msra.mxu0 0
    %549 = vmatprep.subr.bf16.mxu0 0
    %550 = vmatpush1.bf16.msra.mxu0 0
    %551 = vmatprep.subr.bf16.mxu0 0
    %552 = vmatpush1.bf16.msra.mxu0 0
    %553 = vmatprep.subr.bf16.mxu0 0
    %554 = vmatpush1.bf16.msra.mxu0 0
    %555 = vmatprep.subr.bf16.mxu0 0
    %556 = vmatpush1.bf16.msra.mxu0 0
    %557 = vmatprep.subr.bf16.mxu0 0
    %558 = vmatpush1.bf16.msra.mxu0 0
    %559 = vmatprep.subr.bf16.mxu0 0
    %560 = vmatpush1.bf16.msra.mxu0 0
    %561 = vmatprep.subr.bf16.mxu0 0
    %562 = vmatpush1.bf16.msra.mxu0 0
    %563 = vmatprep.mubr.bf16.mxu0 0
    %564 = vmatmul.mubr.bf16.gmra.mrb[0].mxu0 %v277
    %v565 = vpop.f32.mrb[0].mxu0
    %v566 = vadd.f32 %v326, %v565
    %v567 = vpop.f32.mrb[0].mxu0
    %v568 = vpop.f32.mrb[0].mxu0
    %v569 = vadd.f32 %v326, %v568
    %v570 = vpop.f32.mrb[0].mxu0
    %571 = vmatprep.mubr.bf16.mxu0 0
    %572 = vmatmul.mubr.bf16.gmra.mrb[0].mxu0 %v278
    %v573 = vpop.f32.mrb[0].mxu0
    %v574 = vadd.f32 %v326, %v573
    %v575 = vpop.f32.mrb[0].mxu0
    %v576 = vpop.f32.mrb[0].mxu0
    %v577 = vadd.f32 %v326, %v576
    %v578 = vpop.f32.mrb[0].mxu0
    %579 = vmatprep.mubr.bf16.mxu0 0
    %580 = vmatmul.mubr.bf16.gmra.mrb[0].mxu0 %v279
    %v581 = vpop.f32.mrb[0].mxu0
    %v582 = vadd.f32 %v326, %v581
    %v583 = vpop.f32.mrb[0].mxu0
    %v584 = vpop.f32.mrb[0].mxu0
    %v585 = vadd.f32 %v326, %v584
    %v586 = vpop.f32.mrb[0].mxu0
    %587 = vmatprep.mubr.bf16.mxu0 0
    %588 = vmatmul.mubr.bf16.gmra.mrb[0].mxu0 %v280
    %v589 = vpop.f32.mrb[0].mxu0
    %v590 = vadd.f32 %v326, %v589
    %v591 = vpop.f32.mrb[0].mxu0
    %v592 = vpop.f32.mrb[0].mxu0
    %v593 = vadd.f32 %v326, %v592
    %v594 = vpop.f32.mrb[0].mxu0
    %595 = vdwg.mxu0
    %v596 = vpack.c.bf16 %v497, %v493
    %v597 = vpack.c.bf16 %v499, %v495
    %v598 = vpack.c.bf16 %v569, %v566
    %v599 = vpack.c.bf16 %v507, %v503
    %v600 = vpack.c.bf16 %v509, %v505
    %v601 = vpack.c.bf16 %v577, %v574
    %v602 = vpack.c.bf16 %v517, %v513
    %v603 = vpack.c.bf16 %v519, %v515
    %v604 = vpack.c.bf16 %v585, %v582
    %v605 = vpack.c.bf16 %v527, %v523
    %v606 = vpack.c.bf16 %v529, %v525
    %v607 = vpack.c.bf16 %v593, %v590
    %vm608 = vcmask 261120
    %v610 = vsel %vm608, %v596, 0
    %v613 = vsel %vm608, %v599, 0
    %v616 = vsel %vm608, %v602, 0
    %v619 = vsel %vm608, %v605, 0
    %v622 = vsel %vm608, %v597, 0
    %v625 = vsel %vm608, %v600, 0
    %v628 = vsel %vm608, %v603, 0
    %v631 = vsel %vm608, %v606, 0
    %633 = vmatprep.subr.bf16.mxu0 0
    %634 = vmatpush1.bf16.xpose.msra.mxu0 %v622
    %635 = vmatprep.subr.bf16.mxu0 0
    %636 = vmatpush1.bf16.xpose.msra.mxu0 %v625
    %637 = vmatprep.subr.bf16.mxu0 0
    %638 = vmatpush1.bf16.xpose.msra.mxu0 %v628
    %639 = vmatprep.subr.bf16.mxu0 0
    %640 = vmatpush1.bf16.xpose.msra.mxu0 %v631
    %641 = vmatprep.subr.bf16.mxu0 0
    %642 = vmatpush1.bf16.xpose.msra.mxu0 0
    %643 = vmatprep.subr.bf16.mxu0 0
    %644 = vmatpush1.bf16.xpose.msra.mxu0 0
    %645 = vmatprep.subr.bf16.mxu0 0
    %646 = vmatpush1.bf16.xpose.msra.mxu0 0
    %647 = vmatprep.subr.bf16.mxu0 0
    %648 = vmatpush1.bf16.xpose.msra.mxu0 0
    %649 = vmatprep.subr.bf16.mxu0 0
    %650 = vmatpush1.bf16.xpose.msra.mxu0 0
    %651 = vmatprep.subr.bf16.mxu0 0
    %652 = vmatpush1.bf16.xpose.msra.mxu0 0
    %653 = vmatprep.subr.bf16.mxu0 0
    %654 = vmatpush1.bf16.xpose.msra.mxu0 0
    %655 = vmatprep.subr.bf16.mxu0 0
    %656 = vmatpush1.bf16.xpose.msra.mxu0 0
    %657 = vmatprep.subr.bf16.mxu0 0
    %658 = vmatpush1.bf16.xpose.msra.mxu0 0
    %659 = vmatprep.subr.bf16.mxu0 0
    %660 = vmatpush1.bf16.xpose.msra.mxu0 0
    %661 = vmatprep.subr.bf16.mxu0 0
    %662 = vmatpush1.bf16.xpose.msra.mxu0 0
    %663 = vmatprep.subr.bf16.mxu0 0
    %664 = vmatpush1.bf16.xpose.msra.mxu0 0
    %665 = vmatprep.mubr.bf16.mxu0 0
    %666 = vmatmul.mubr.bf16.gmra.mrb[0].mxu0 %v610
    %v667 = vpop.f32.mrb[0].mxu0
    %v668 = vadd.f32 0.0, %v667
    %v669 = vpop.f32.mrb[0].mxu0
    %v670 = vpop.f32.mrb[0].mxu0
    %v671 = vadd.f32 0.0, %v670
    %v672 = vpop.f32.mrb[0].mxu0
    %673 = vmatprep.mubr.bf16.mxu0 0
    %674 = vmatmul.mubr.bf16.gmra.mrb[0].mxu0 %v613
    %v675 = vpop.f32.mrb[0].mxu0
    %v676 = vadd.f32 0.0, %v675
    %v677 = vpop.f32.mrb[0].mxu0
    %v678 = vpop.f32.mrb[0].mxu0
    %v679 = vadd.f32 0.0, %v678
    %v680 = vpop.f32.mrb[0].mxu0
    %681 = vmatprep.mubr.bf16.mxu0 0
    %682 = vmatmul.mubr.bf16.gmra.mrb[0].mxu0 %v616
    %v683 = vpop.f32.mrb[0].mxu0
    %v684 = vadd.f32 0.0, %v683
    %v685 = vpop.f32.mrb[0].mxu0
    %v686 = vpop.f32.mrb[0].mxu0
    %v687 = vadd.f32 0.0, %v686
    %v688 = vpop.f32.mrb[0].mxu0
    %689 = vmatprep.mubr.bf16.mxu0 0
    %690 = vmatmul.mubr.bf16.gmra.mrb[0].mxu0 %v619
    %v691 = vpop.f32.mrb[0].mxu0
    %v692 = vadd.f32 0.0, %v691
    %v693 = vpop.f32.mrb[0].mxu0
    %v694 = vpop.f32.mrb[0].mxu0
    %v695 = vadd.f32 0.0, %v694
    %v696 = vpop.f32.mrb[0].mxu0
    %697 = vdwg.mxu0
    %v698 = vmul.f32 %v668, 0.17677669
    %v699 = vmul.f32 %v671, 0.17677669
    %v700 = vmul.f32 %v676, 0.17677669
    %v701 = vmul.f32 %v679, 0.17677669
    %v702 = vmul.f32 %v684, 0.17677669
    %v703 = vmul.f32 %v687, 0.17677669
    %v704 = vmul.f32 %v692, 0.17677669
    %v705 = vmul.f32 %v695, 0.17677669
    %v706 = vadd.f32 %v698, %v150
    %v707 = vadd.f32 %v699, %v151
    %v708 = vadd.f32 %v700, %v152
    %v709 = vadd.f32 %v701, %v153
    %v710 = vadd.f32 %v702, %v154
    %v711 = vadd.f32 %v703, %v155
    %v712 = vadd.f32 %v704, %v156
    %v713 = vadd.f32 %v705, %v157
    %vm714 = vcmask 523264
    %v715 = vsel %vm714, %v706, -inf
    %716 = vmax.xlane.f32.xlu0 %v715
    %v717 = vpop.xlane.xlu0 %716
    %v718 = vsel %vm714, %v707, -inf
    %719 = vmax.xlane.f32.xlu0 %v718
    %v720 = vpop.xlane.xlu0 %719
    %v721 = vsel %vm714, %v708, -inf
    %722 = vmax.xlane.f32.xlu0 %v721
    %v723 = vpop.xlane.xlu0 %722
    %v724 = vsel %vm714, %v709, -inf
    %725 = vmax.xlane.f32.xlu0 %v724
    %v726 = vpop.xlane.xlu0 %725
    %v727 = vsel %vm714, %v710, -inf
    %728 = vmax.xlane.f32.xlu0 %v727
    %v729 = vpop.xlane.xlu0 %728
    %v730 = vsel %vm714, %v711, -inf
    %731 = vmax.xlane.f32.xlu0 %v730
    %v732 = vpop.xlane.xlu0 %731
    %v733 = vsel %vm714, %v712, -inf
    %734 = vmax.xlane.f32.xlu0 %v733
    %v735 = vpop.xlane.xlu0 %734
    %v736 = vsel %vm714, %v713, -inf
    %737 = vmax.xlane.f32.xlu0 %v736
    %v738 = vpop.xlane.xlu0 %737
    %v739 = vsub.f32 %v706, %v717
    %v740 = vsub.f32 %v707, %v720
    %v741 = vsub.f32 %v708, %v723
    %v742 = vsub.f32 %v709, %v726
    %v743 = vsub.f32 %v710, %v729
    %v744 = vsub.f32 %v711, %v732
    %v745 = vsub.f32 %v712, %v735
    %v746 = vsub.f32 %v713, %v738
    %v747 = vmul.f32 %v739, 1.442695
    %v748 = vpow.pop %v747
    %v749 = vmul.f32 %v740, 1.442695
    %v750 = vpow.pop %v749
    %v751 = vmul.f32 %v741, 1.442695
    %v752 = vpow.pop %v751
    %v753 = vmul.f32 %v742, 1.442695
    %v754 = vpow.pop %v753
    %v755 = vmul.f32 %v743, 1.442695
    %v756 = vpow.pop %v755
    %v757 = vmul.f32 %v744, 1.442695
    %v758 = vpow.pop %v757
    %v759 = vmul.f32 %v745, 1.442695
    %v760 = vpow.pop %v759
    %v761 = vmul.f32 %v746, 1.442695
    %v762 = vpow.pop %v761
    %v763 = vsel %vm714, %v748, 0.0
    %764 = vadd.xlane.f32.xlu0 %v763
    %v765 = vpop.xlane.xlu0 %764
    %v766 = vsel %vm714, %v750, 0.0
    %767 = vadd.xlane.f32.xlu0 %v766
    %v768 = vpop.xlane.xlu0 %767
    %v769 = vsel %vm714, %v752, 0.0
    %770 = vadd.xlane.f32.xlu0 %v769
    %v771 = vpop.xlane.xlu0 %770
    %v772 = vsel %vm714, %v754, 0.0
    %773 = vadd.xlane.f32.xlu0 %v772
    %v774 = vpop.xlane.xlu0 %773
    %v775 = vsel %vm714, %v756, 0.0
    %776 = vadd.xlane.f32.xlu0 %v775
    %v777 = vpop.xlane.xlu0 %776
    %v778 = vsel %vm714, %v758, 0.0
    %779 = vadd.xlane.f32.xlu0 %v778
    %v780 = vpop.xlane.xlu0 %779
    %v781 = vsel %vm714, %v760, 0.0
    %782 = vadd.xlane.f32.xlu0 %v781
    %v783 = vpop.xlane.xlu0 %782
    %v784 = vsel %vm714, %v762, 0.0
    %785 = vadd.xlane.f32.xlu0 %v784
    %v786 = vpop.xlane.xlu0 %785
    %v787 = vrcp.pop %v765
    %v788 = vrcp.pop %v768
    %v789 = vrcp.pop %v771
    %v790 = vrcp.pop %v774
    %v791 = vrcp.pop %v777
    %v792 = vrcp.pop %v780
    %v793 = vrcp.pop %v783
    %v794 = vrcp.pop %v786
    %v795 = vmul.f32 %v748, %v787
    %v796 = vmul.f32 %v750, %v788
    %v797 = vmul.f32 %v752, %v789
    %v798 = vmul.f32 %v754, %v790
    %v799 = vmul.f32 %v756, %v791
    %v800 = vmul.f32 %v758, %v792
    %v801 = vmul.f32 %v760, %v793
    %v802 = vmul.f32 %v762, %v794
    %v803 = vpack.c.bf16 %v796, %v795
    %v804 = vpack.c.bf16 %v798, %v797
    %v805 = vpack.c.bf16 %v800, %v799
    %v806 = vpack.c.bf16 %v802, %v801
    %v808 = vsel %vm714, %v803, 0
    %v811 = vsel %vm714, %v804, 0
    %v814 = vsel %vm714, %v805, 0
    %v817 = vsel %vm714, %v806, 0
    %819 = vmatprep.subr.bf16.mxu0 0
    %820 = vmatpush1.bf16.msra.mxu0 %v598
    %821 = vmatprep.subr.bf16.mxu0 0
    %822 = vmatpush1.bf16.msra.mxu0 %v601
    %823 = vmatprep.subr.bf16.mxu0 0
    %824 = vmatpush1.bf16.msra.mxu0 %v604
    %825 = vmatprep.subr.bf16.mxu0 0
    %826 = vmatpush1.bf16.msra.mxu0 %v607
    %827 = vmatprep.subr.bf16.mxu0 0
    %828 = vmatpush1.bf16.msra.mxu0 0
    %829 = vmatprep.subr.bf16.mxu0 0
    %830 = vmatpush1.bf16.msra.mxu0 0
    %831 = vmatprep.subr.bf16.mxu0 0
    %832 = vmatpush1.bf16.msra.mxu0 0
    %833 = vmatprep.subr.bf16.mxu0 0
    %834 = vmatpush1.bf16.msra.mxu0 0
    %835 = vmatprep.subr.bf16.mxu0 0
    %836 = vmatpush1.bf16.msra.mxu0 0
    %837 = vmatprep.subr.bf16.mxu0 0
    %838 = vmatpush1.bf16.msra.mxu0 0
    %839 = vmatprep.subr.bf16.mxu0 0
    %840 = vmatpush1.bf16.msra.mxu0 0
    %841 = vmatprep.subr.bf16.mxu0 0
    %842 = vmatpush1.bf16.msra.mxu0 0
    %843 = vmatprep.subr.bf16.mxu0 0
    %844 = vmatpush1.bf16.msra.mxu0 0
    %845 = vmatprep.subr.bf16.mxu0 0
    %846 = vmatpush1.bf16.msra.mxu0 0
    %847 = vmatprep.subr.bf16.mxu0 0
    %848 = vmatpush1.bf16.msra.mxu0 0
    %849 = vmatprep.subr.bf16.mxu0 0
    %850 = vmatpush1.bf16.msra.mxu0 0
    %851 = vmatprep.mubr.bf16.mxu0 0
    %852 = vmatmul.mubr.bf16.gmra.mrb[0].mxu0 %v808
    %v853 = vpop.f32.mrb[0].mxu0
    %v854 = vadd.f32 0.0, %v853
    %v855 = vpop.f32.mrb[0].mxu0
    %v856 = vpop.f32.mrb[0].mxu0
    %v857 = vadd.f32 0.0, %v856
    %v858 = vpop.f32.mrb[0].mxu0
    %859 = vmatprep.mubr.bf16.mxu0 0
    %860 = vmatmul.mubr.bf16.gmra.mrb[0].mxu0 %v811
    %v861 = vpop.f32.mrb[0].mxu0
    %v862 = vadd.f32 0.0, %v861
    %v863 = vpop.f32.mrb[0].mxu0
    %v864 = vpop.f32.mrb[0].mxu0
    %v865 = vadd.f32 0.0, %v864
    %v866 = vpop.f32.mrb[0].mxu0
    %867 = vmatprep.mubr.bf16.mxu0 0
    %868 = vmatmul.mubr.bf16.gmra.mrb[0].mxu0 %v814
    %v869 = vpop.f32.mrb[0].mxu0
    %v870 = vadd.f32 0.0, %v869
    %v871 = vpop.f32.mrb[0].mxu0
    %v872 = vpop.f32.mrb[0].mxu0
    %v873 = vadd.f32 0.0, %v872
    %v874 = vpop.f32.mrb[0].mxu0
    %875 = vmatprep.mubr.bf16.mxu0 0
    %876 = vmatmul.mubr.bf16.gmra.mrb[0].mxu0 %v817
    %v877 = vpop.f32.mrb[0].mxu0
    %v878 = vadd.f32 0.0, %v877
    %v879 = vpop.f32.mrb[0].mxu0
    %v880 = vpop.f32.mrb[0].mxu0
    %v881 = vadd.f32 0.0, %v880
    %v882 = vpop.f32.mrb[0].mxu0
    %883 = vdwg.mxu0
    %888 = vrot.lane.b32.xlu0 %v596, 96
    %v889 = vpop.permute.xlu0 %888
    %890 = vrot.lane.b32.xlu0 %v599, 96
    %v891 = vpop.permute.xlu0 %890
    %892 = vrot.lane.b32.xlu0 %v602, 96
    %v893 = vpop.permute.xlu0 %892
    %894 = vrot.lane.b32.xlu0 %v605, 96
    %v895 = vpop.permute.xlu0 %894
    %900 = vrot.lane.b32.xlu0 %v597, 96
    %v901 = vpop.permute.xlu0 %900
    %902 = vrot.lane.b32.xlu0 %v600, 96
    %v903 = vpop.permute.xlu0 %902
    %904 = vrot.lane.b32.xlu0 %v603, 96
    %v905 = vpop.permute.xlu0 %904
    %906 = vrot.lane.b32.xlu0 %v606, 96
    %v907 = vpop.permute.xlu0 %906
    %v909 = vsel %vm608, %v889, 0
    %v912 = vsel %vm608, %v891, 0
    %v915 = vsel %vm608, %v893, 0
    %v918 = vsel %vm608, %v895, 0
    %v921 = vsel %vm608, %v901, 0
    %v924 = vsel %vm608, %v903, 0
    %v927 = vsel %vm608, %v905, 0
    %v930 = vsel %vm608, %v907, 0
    %932 = vmatprep.subr.bf16.mxu0 0
    %933 = vmatpush1.bf16.xpose.msra.mxu0 %v921
    %934 = vmatprep.subr.bf16.mxu0 0
    %935 = vmatpush1.bf16.xpose.msra.mxu0 %v924
    %936 = vmatprep.subr.bf16.mxu0 0
    %937 = vmatpush1.bf16.xpose.msra.mxu0 %v927
    %938 = vmatprep.subr.bf16.mxu0 0
    %939 = vmatpush1.bf16.xpose.msra.mxu0 %v930
    %940 = vmatprep.subr.bf16.mxu0 0
    %941 = vmatpush1.bf16.xpose.msra.mxu0 0
    %942 = vmatprep.subr.bf16.mxu0 0
    %943 = vmatpush1.bf16.xpose.msra.mxu0 0
    %944 = vmatprep.subr.bf16.mxu0 0
    %945 = vmatpush1.bf16.xpose.msra.mxu0 0
    %946 = vmatprep.subr.bf16.mxu0 0
    %947 = vmatpush1.bf16.xpose.msra.mxu0 0
    %948 = vmatprep.subr.bf16.mxu0 0
    %949 = vmatpush1.bf16.xpose.msra.mxu0 0
    %950 = vmatprep.subr.bf16.mxu0 0
    %951 = vmatpush1.bf16.xpose.msra.mxu0 0
    %952 = vmatprep.subr.bf16.mxu0 0
    %953 = vmatpush1.bf16.xpose.msra.mxu0 0
    %954 = vmatprep.subr.bf16.mxu0 0
    %955 = vmatpush1.bf16.xpose.msra.mxu0 0
    %956 = vmatprep.subr.bf16.mxu0 0
    %957 = vmatpush1.bf16.xpose.msra.mxu0 0
    %958 = vmatprep.subr.bf16.mxu0 0
    %959 = vmatpush1.bf16.xpose.msra.mxu0 0
    %960 = vmatprep.subr.bf16.mxu0 0
    %961 = vmatpush1.bf16.xpose.msra.mxu0 0
    %962 = vmatprep.subr.bf16.mxu0 0
    %963 = vmatpush1.bf16.xpose.msra.mxu0 0
    %964 = vmatprep.mubr.bf16.mxu0 0
    %965 = vmatmul.mubr.bf16.gmra.mrb[0].mxu0 %v909
    %v966 = vpop.f32.mrb[0].mxu0
    %v967 = vadd.f32 0.0, %v966
    %v968 = vpop.f32.mrb[0].mxu0
    %v969 = vpop.f32.mrb[0].mxu0
    %v970 = vadd.f32 0.0, %v969
    %v971 = vpop.f32.mrb[0].mxu0
    %972 = vmatprep.mubr.bf16.mxu0 0
    %973 = vmatmul.mubr.bf16.gmra.mrb[0].mxu0 %v912
    %v974 = vpop.f32.mrb[0].mxu0
    %v975 = vadd.f32 0.0, %v974
    %v976 = vpop.f32.mrb[0].mxu0
    %v977 = vpop.f32.mrb[0].mxu0
    %v978 = vadd.f32 0.0, %v977
    %v979 = vpop.f32.mrb[0].mxu0
    %980 = vmatprep.mubr.bf16.mxu0 0
    %981 = vmatmul.mubr.bf16.gmra.mrb[0].mxu0 %v915
    %v982 = vpop.f32.mrb[0].mxu0
    %v983 = vadd.f32 0.0, %v982
    %v984 = vpop.f32.mrb[0].mxu0
    %v985 = vpop.f32.mrb[0].mxu0
    %v986 = vadd.f32 0.0, %v985
    %v987 = vpop.f32.mrb[0].mxu0
    %988 = vmatprep.mubr.bf16.mxu0 0
    %989 = vmatmul.mubr.bf16.gmra.mrb[0].mxu0 %v918
    %v990 = vpop.f32.mrb[0].mxu0
    %v991 = vadd.f32 0.0, %v990
    %v992 = vpop.f32.mrb[0].mxu0
    %v993 = vpop.f32.mrb[0].mxu0
    %v994 = vadd.f32 0.0, %v993
    %v995 = vpop.f32.mrb[0].mxu0
    %996 = vdwg.mxu0
    %v997 = vmul.f32 %v967, 0.17677669
    %v998 = vmul.f32 %v970, 0.17677669
    %v999 = vmul.f32 %v975, 0.17677669
    %v1000 = vmul.f32 %v978, 0.17677669
    %v1001 = vmul.f32 %v983, 0.17677669
    %v1002 = vmul.f32 %v986, 0.17677669
    %v1003 = vmul.f32 %v991, 0.17677669
    %v1004 = vmul.f32 %v994, 0.17677669
    %v1005 = vadd.f32 %v997, %v150
    %v1006 = vadd.f32 %v998, %v151
    %v1007 = vadd.f32 %v999, %v152
    %v1008 = vadd.f32 %v1000, %v153
    %v1009 = vadd.f32 %v1001, %v154
    %v1010 = vadd.f32 %v1002, %v155
    %v1011 = vadd.f32 %v1003, %v156
    %v1012 = vadd.f32 %v1004, %v157
    %v1013 = vsel %vm714, %v1005, -inf
    %1014 = vmax.xlane.f32.xlu0 %v1013
    %v1015 = vpop.xlane.xlu0 %1014
    %v1016 = vsel %vm714, %v1006, -inf
    %1017 = vmax.xlane.f32.xlu0 %v1016
    %v1018 = vpop.xlane.xlu0 %1017
    %v1019 = vsel %vm714, %v1007, -inf
    %1020 = vmax.xlane.f32.xlu0 %v1019
    %v1021 = vpop.xlane.xlu0 %1020
    %v1022 = vsel %vm714, %v1008, -inf
    %1023 = vmax.xlane.f32.xlu0 %v1022
    %v1024 = vpop.xlane.xlu0 %1023
    %v1025 = vsel %vm714, %v1009, -inf
    %1026 = vmax.xlane.f32.xlu0 %v1025
    %v1027 = vpop.xlane.xlu0 %1026
    %v1028 = vsel %vm714, %v1010, -inf
    %1029 = vmax.xlane.f32.xlu0 %v1028
    %v1030 = vpop.xlane.xlu0 %1029
    %v1031 = vsel %vm714, %v1011, -inf
    %1032 = vmax.xlane.f32.xlu0 %v1031
    %v1033 = vpop.xlane.xlu0 %1032
    %v1034 = vsel %vm714, %v1012, -inf
    %1035 = vmax.xlane.f32.xlu0 %v1034
    %v1036 = vpop.xlane.xlu0 %1035
    %v1037 = vsub.f32 %v1005, %v1015
    %v1038 = vsub.f32 %v1006, %v1018
    %v1039 = vsub.f32 %v1007, %v1021
    %v1040 = vsub.f32 %v1008, %v1024
    %v1041 = vsub.f32 %v1009, %v1027
    %v1042 = vsub.f32 %v1010, %v1030
    %v1043 = vsub.f32 %v1011, %v1033
    %v1044 = vsub.f32 %v1012, %v1036
    %v1045 = vmul.f32 %v1037, 1.442695
    %v1046 = vpow.pop %v1045
    %v1047 = vmul.f32 %v1038, 1.442695
    %v1048 = vpow.pop %v1047
    %v1049 = vmul.f32 %v1039, 1.442695
    %v1050 = vpow.pop %v1049
    %v1051 = vmul.f32 %v1040, 1.442695
    %v1052 = vpow.pop %v1051
    %v1053 = vmul.f32 %v1041, 1.442695
    %v1054 = vpow.pop %v1053
    %v1055 = vmul.f32 %v1042, 1.442695
    %v1056 = vpow.pop %v1055
    %v1057 = vmul.f32 %v1043, 1.442695
    %v1058 = vpow.pop %v1057
    %v1059 = vmul.f32 %v1044, 1.442695
    %v1060 = vpow.pop %v1059
    %v1061 = vsel %vm714, %v1046, 0.0
    %1062 = vadd.xlane.f32.xlu0 %v1061
    %v1063 = vpop.xlane.xlu0 %1062
    %v1064 = vsel %vm714, %v1048, 0.0
    %1065 = vadd.xlane.f32.xlu0 %v1064
    %v1066 = vpop.xlane.xlu0 %1065
    %v1067 = vsel %vm714, %v1050, 0.0
    %1068 = vadd.xlane.f32.xlu0 %v1067
    %v1069 = vpop.xlane.xlu0 %1068
    %v1070 = vsel %vm714, %v1052, 0.0
    %1071 = vadd.xlane.f32.xlu0 %v1070
    %v1072 = vpop.xlane.xlu0 %1071
    %v1073 = vsel %vm714, %v1054, 0.0
    %1074 = vadd.xlane.f32.xlu0 %v1073
    %v1075 = vpop.xlane.xlu0 %1074
    %v1076 = vsel %vm714, %v1056, 0.0
    %1077 = vadd.xlane.f32.xlu0 %v1076
    %v1078 = vpop.xlane.xlu0 %1077
    %v1079 = vsel %vm714, %v1058, 0.0
    %1080 = vadd.xlane.f32.xlu0 %v1079
    %v1081 = vpop.xlane.xlu0 %1080
    %v1082 = vsel %vm714, %v1060, 0.0
    %1083 = vadd.xlane.f32.xlu0 %v1082
    %v1084 = vpop.xlane.xlu0 %1083
    %v1085 = vrcp.pop %v1063
    %v1086 = vrcp.pop %v1066
    %v1087 = vrcp.pop %v1069
    %v1088 = vrcp.pop %v1072
    %v1089 = vrcp.pop %v1075
    %v1090 = vrcp.pop %v1078
    %v1091 = vrcp.pop %v1081
    %v1092 = vrcp.pop %v1084
    %v1093 = vmul.f32 %v1046, %v1085
    %v1094 = vmul.f32 %v1048, %v1086
    %v1095 = vmul.f32 %v1050, %v1087
    %v1096 = vmul.f32 %v1052, %v1088
    %v1097 = vmul.f32 %v1054, %v1089
    %v1098 = vmul.f32 %v1056, %v1090
    %v1099 = vmul.f32 %v1058, %v1091
    %v1100 = vmul.f32 %v1060, %v1092
    %v1101 = vpack.c.bf16 %v1094, %v1093
    %v1102 = vpack.c.bf16 %v1096, %v1095
    %v1103 = vpack.c.bf16 %v1098, %v1097
    %v1104 = vpack.c.bf16 %v1100, %v1099
    %1109 = vrot.lane.b32.xlu0 %v598, 96
    %v1110 = vpop.permute.xlu0 %1109
    %1111 = vrot.lane.b32.xlu0 %v601, 96
    %v1112 = vpop.permute.xlu0 %1111
    %1113 = vrot.lane.b32.xlu0 %v604, 96
    %v1114 = vpop.permute.xlu0 %1113
    %1115 = vrot.lane.b32.xlu0 %v607, 96
    %v1116 = vpop.permute.xlu0 %1115
    %v1122 = vsel %vm714, %v1101, 0
    %v1125 = vsel %vm714, %v1102, 0
    %v1128 = vsel %vm714, %v1103, 0
    %v1131 = vsel %vm714, %v1104, 0
    %1133 = vmatprep.subr.bf16.mxu0 0
    %1134 = vmatpush1.bf16.msra.mxu0 %v1110
    %1135 = vmatprep.subr.bf16.mxu0 0
    %1136 = vmatpush1.bf16.msra.mxu0 %v1112
    %1137 = vmatprep.subr.bf16.mxu0 0
    %1138 = vmatpush1.bf16.msra.mxu0 %v1114
    %1139 = vmatprep.subr.bf16.mxu0 0
    %1140 = vmatpush1.bf16.msra.mxu0 %v1116
    %1141 = vmatprep.subr.bf16.mxu0 0
    %1142 = vmatpush1.bf16.msra.mxu0 0
    %1143 = vmatprep.subr.bf16.mxu0 0
    %1144 = vmatpush1.bf16.msra.mxu0 0
    %1145 = vmatprep.subr.bf16.mxu0 0
    %1146 = vmatpush1.bf16.msra.mxu0 0
    %1147 = vmatprep.subr.bf16.mxu0 0
    %1148 = vmatpush1.bf16.msra.mxu0 0
    %1149 = vmatprep.subr.bf16.mxu0 0
    %1150 = vmatpush1.bf16.msra.mxu0 0
    %1151 = vmatprep.subr.bf16.mxu0 0
    %1152 = vmatpush1.bf16.msra.mxu0 0
    %1153 = vmatprep.subr.bf16.mxu0 0
    %1154 = vmatpush1.bf16.msra.mxu0 0
    %1155 = vmatprep.subr.bf16.mxu0 0
    %1156 = vmatpush1.bf16.msra.mxu0 0
    %1157 = vmatprep.subr.bf16.mxu0 0
    %1158 = vmatpush1.bf16.msra.mxu0 0
    %1159 = vmatprep.subr.bf16.mxu0 0
    %1160 = vmatpush1.bf16.msra.mxu0 0
    %1161 = vmatprep.subr.bf16.mxu0 0
    %1162 = vmatpush1.bf16.msra.mxu0 0
    %1163 = vmatprep.subr.bf16.mxu0 0
    %1164 = vmatpush1.bf16.msra.mxu0 0
    %1165 = vmatprep.mubr.bf16.mxu0 0
    %1166 = vmatmul.mubr.bf16.gmra.mrb[0].mxu0 %v1122
    %v1167 = vpop.f32.mrb[0].mxu0
    %v1168 = vadd.f32 0.0, %v1167
    %v1169 = vpop.f32.mrb[0].mxu0
    %v1170 = vpop.f32.mrb[0].mxu0
    %v1171 = vadd.f32 0.0, %v1170
    %v1172 = vpop.f32.mrb[0].mxu0
    %1173 = vmatprep.mubr.bf16.mxu0 0
    %1174 = vmatmul.mubr.bf16.gmra.mrb[0].mxu0 %v1125
    %v1175 = vpop.f32.mrb[0].mxu0
    %v1176 = vadd.f32 0.0, %v1175
    %v1177 = vpop.f32.mrb[0].mxu0
    %v1178 = vpop.f32.mrb[0].mxu0
    %v1179 = vadd.f32 0.0, %v1178
    %v1180 = vpop.f32.mrb[0].mxu0
    %1181 = vmatprep.mubr.bf16.mxu0 0
    %1182 = vmatmul.mubr.bf16.gmra.mrb[0].mxu0 %v1128
    %v1183 = vpop.f32.mrb[0].mxu0
    %v1184 = vadd.f32 0.0, %v1183
    %v1185 = vpop.f32.mrb[0].mxu0
    %v1186 = vpop.f32.mrb[0].mxu0
    %v1187 = vadd.f32 0.0, %v1186
    %v1188 = vpop.f32.mrb[0].mxu0
    %1189 = vmatprep.mubr.bf16.mxu0 0
    %1190 = vmatmul.mubr.bf16.gmra.mrb[0].mxu0 %v1131
    %v1191 = vpop.f32.mrb[0].mxu0
    %v1192 = vadd.f32 0.0, %v1191
    %v1193 = vpop.f32.mrb[0].mxu0
    %v1194 = vpop.f32.mrb[0].mxu0
    %v1195 = vadd.f32 0.0, %v1194
    %v1196 = vpop.f32.mrb[0].mxu0
    %1197 = vdwg.mxu0
    %1198 = vrot.lane.b32.xlu0 %v596, 64
    %v1199 = vpop.permute.xlu0 %1198
    %1200 = vrot.lane.b32.xlu0 %v599, 64
    %v1201 = vpop.permute.xlu0 %1200
    %1202 = vrot.lane.b32.xlu0 %v602, 64
    %v1203 = vpop.permute.xlu0 %1202
    %1204 = vrot.lane.b32.xlu0 %v605, 64
    %v1205 = vpop.permute.xlu0 %1204
    %1206 = vrot.lane.b32.xlu0 %v597, 64
    %v1207 = vpop.permute.xlu0 %1206
    %1208 = vrot.lane.b32.xlu0 %v600, 64
    %v1209 = vpop.permute.xlu0 %1208
    %1210 = vrot.lane.b32.xlu0 %v603, 64
    %v1211 = vpop.permute.xlu0 %1210
    %1212 = vrot.lane.b32.xlu0 %v606, 64
    %v1213 = vpop.permute.xlu0 %1212
    %v1215 = vsel %vm608, %v1199, 0
    %v1218 = vsel %vm608, %v1201, 0
    %v1221 = vsel %vm608, %v1203, 0
    %v1224 = vsel %vm608, %v1205, 0
    %v1227 = vsel %vm608, %v1207, 0
    %v1230 = vsel %vm608, %v1209, 0
    %v1233 = vsel %vm608, %v1211, 0
    %v1236 = vsel %vm608, %v1213, 0
    %1238 = vmatprep.subr.bf16.mxu0 0
    %1239 = vmatpush1.bf16.xpose.msra.mxu0 %v1227
    %1240 = vmatprep.subr.bf16.mxu0 0
    %1241 = vmatpush1.bf16.xpose.msra.mxu0 %v1230
    %1242 = vmatprep.subr.bf16.mxu0 0
    %1243 = vmatpush1.bf16.xpose.msra.mxu0 %v1233
    %1244 = vmatprep.subr.bf16.mxu0 0
    %1245 = vmatpush1.bf16.xpose.msra.mxu0 %v1236
    %1246 = vmatprep.subr.bf16.mxu0 0
    %1247 = vmatpush1.bf16.xpose.msra.mxu0 0
    %1248 = vmatprep.subr.bf16.mxu0 0
    %1249 = vmatpush1.bf16.xpose.msra.mxu0 0
    %1250 = vmatprep.subr.bf16.mxu0 0
    %1251 = vmatpush1.bf16.xpose.msra.mxu0 0
    %1252 = vmatprep.subr.bf16.mxu0 0
    %1253 = vmatpush1.bf16.xpose.msra.mxu0 0
    %1254 = vmatprep.subr.bf16.mxu0 0
    %1255 = vmatpush1.bf16.xpose.msra.mxu0 0
    %1256 = vmatprep.subr.bf16.mxu0 0
    %1257 = vmatpush1.bf16.xpose.msra.mxu0 0
    %1258 = vmatprep.subr.bf16.mxu0 0
    %1259 = vmatpush1.bf16.xpose.msra.mxu0 0
    %1260 = vmatprep.subr.bf16.mxu0 0
    %1261 = vmatpush1.bf16.xpose.msra.mxu0 0
    %1262 = vmatprep.subr.bf16.mxu0 0
    %1263 = vmatpush1.bf16.xpose.msra.mxu0 0
    %1264 = vmatprep.subr.bf16.mxu0 0
    %1265 = vmatpush1.bf16.xpose.msra.mxu0 0
    %1266 = vmatprep.subr.bf16.mxu0 0
    %1267 = vmatpush1.bf16.xpose.msra.mxu0 0
    %1268 = vmatprep.subr.bf16.mxu0 0
    %1269 = vmatpush1.bf16.xpose.msra.mxu0 0
    %1270 = vmatprep.mubr.bf16.mxu0 0
    %1271 = vmatmul.mubr.bf16.gmra.mrb[0].mxu0 %v1215
    %v1272 = vpop.f32.mrb[0].mxu0
    %v1273 = vadd.f32 0.0, %v1272
    %v1274 = vpop.f32.mrb[0].mxu0
    %v1275 = vpop.f32.mrb[0].mxu0
    %v1276 = vadd.f32 0.0, %v1275
    %v1277 = vpop.f32.mrb[0].mxu0
    %1278 = vmatprep.mubr.bf16.mxu0 0
    %1279 = vmatmul.mubr.bf16.gmra.mrb[0].mxu0 %v1218
    %v1280 = vpop.f32.mrb[0].mxu0
    %v1281 = vadd.f32 0.0, %v1280
    %v1282 = vpop.f32.mrb[0].mxu0
    %v1283 = vpop.f32.mrb[0].mxu0
    %v1284 = vadd.f32 0.0, %v1283
    %v1285 = vpop.f32.mrb[0].mxu0
    %1286 = vmatprep.mubr.bf16.mxu0 0
    %1287 = vmatmul.mubr.bf16.gmra.mrb[0].mxu0 %v1221
    %v1288 = vpop.f32.mrb[0].mxu0
    %v1289 = vadd.f32 0.0, %v1288
    %v1290 = vpop.f32.mrb[0].mxu0
    %v1291 = vpop.f32.mrb[0].mxu0
    %v1292 = vadd.f32 0.0, %v1291
    %v1293 = vpop.f32.mrb[0].mxu0
    %1294 = vmatprep.mubr.bf16.mxu0 0
    %1295 = vmatmul.mubr.bf16.gmra.mrb[0].mxu0 %v1224
    %v1296 = vpop.f32.mrb[0].mxu0
    %v1297 = vadd.f32 0.0, %v1296
    %v1298 = vpop.f32.mrb[0].mxu0
    %v1299 = vpop.f32.mrb[0].mxu0
    %v1300 = vadd.f32 0.0, %v1299
    %v1301 = vpop.f32.mrb[0].mxu0
    %1302 = vdwg.mxu0
    %v1303 = vmul.f32 %v1273, 0.17677669
    %v1304 = vmul.f32 %v1276, 0.17677669
    %v1305 = vmul.f32 %v1281, 0.17677669
    %v1306 = vmul.f32 %v1284, 0.17677669
    %v1307 = vmul.f32 %v1289, 0.17677669
    %v1308 = vmul.f32 %v1292, 0.17677669
    %v1309 = vmul.f32 %v1297, 0.17677669
    %v1310 = vmul.f32 %v1300, 0.17677669
    %v1311 = vadd.f32 %v1303, %v150
    %v1312 = vadd.f32 %v1304, %v151
    %v1313 = vadd.f32 %v1305, %v152
    %v1314 = vadd.f32 %v1306, %v153
    %v1315 = vadd.f32 %v1307, %v154
    %v1316 = vadd.f32 %v1308, %v155
    %v1317 = vadd.f32 %v1309, %v156
    %v1318 = vadd.f32 %v1310, %v157
    %v1319 = vsel %vm714, %v1311, -inf
    %1320 = vmax.xlane.f32.xlu0 %v1319
    %v1321 = vpop.xlane.xlu0 %1320
    %v1322 = vsel %vm714, %v1312, -inf
    %1323 = vmax.xlane.f32.xlu0 %v1322
    %v1324 = vpop.xlane.xlu0 %1323
    %v1325 = vsel %vm714, %v1313, -inf
    %1326 = vmax.xlane.f32.xlu0 %v1325
    %v1327 = vpop.xlane.xlu0 %1326
    %v1328 = vsel %vm714, %v1314, -inf
    %1329 = vmax.xlane.f32.xlu0 %v1328
    %v1330 = vpop.xlane.xlu0 %1329
    %v1331 = vsel %vm714, %v1315, -inf
    %1332 = vmax.xlane.f32.xlu0 %v1331
    %v1333 = vpop.xlane.xlu0 %1332
    %v1334 = vsel %vm714, %v1316, -inf
    %1335 = vmax.xlane.f32.xlu0 %v1334
    %v1336 = vpop.xlane.xlu0 %1335
    %v1337 = vsel %vm714, %v1317, -inf
    %1338 = vmax.xlane.f32.xlu0 %v1337
    %v1339 = vpop.xlane.xlu0 %1338
    %v1340 = vsel %vm714, %v1318, -inf
    %1341 = vmax.xlane.f32.xlu0 %v1340
    %v1342 = vpop.xlane.xlu0 %1341
    %v1343 = vsub.f32 %v1311, %v1321
    %v1344 = vsub.f32 %v1312, %v1324
    %v1345 = vsub.f32 %v1313, %v1327
    %v1346 = vsub.f32 %v1314, %v1330
    %v1347 = vsub.f32 %v1315, %v1333
    %v1348 = vsub.f32 %v1316, %v1336
    %v1349 = vsub.f32 %v1317, %v1339
    %v1350 = vsub.f32 %v1318, %v1342
    %v1351 = vmul.f32 %v1343, 1.442695
    %v1352 = vpow.pop %v1351
    %v1353 = vmul.f32 %v1344, 1.442695
    %v1354 = vpow.pop %v1353
    %v1355 = vmul.f32 %v1345, 1.442695
    %v1356 = vpow.pop %v1355
    %v1357 = vmul.f32 %v1346, 1.442695
    %v1358 = vpow.pop %v1357
    %v1359 = vmul.f32 %v1347, 1.442695
    %v1360 = vpow.pop %v1359
    %v1361 = vmul.f32 %v1348, 1.442695
    %v1362 = vpow.pop %v1361
    %v1363 = vmul.f32 %v1349, 1.442695
    %v1364 = vpow.pop %v1363
    %v1365 = vmul.f32 %v1350, 1.442695
    %v1366 = vpow.pop %v1365
    %v1367 = vsel %vm714, %v1352, 0.0
    %1368 = vadd.xlane.f32.xlu0 %v1367
    %v1369 = vpop.xlane.xlu0 %1368
    %v1370 = vsel %vm714, %v1354, 0.0
    %1371 = vadd.xlane.f32.xlu0 %v1370
    %v1372 = vpop.xlane.xlu0 %1371
    %v1373 = vsel %vm714, %v1356, 0.0
    %1374 = vadd.xlane.f32.xlu0 %v1373
    %v1375 = vpop.xlane.xlu0 %1374
    %v1376 = vsel %vm714, %v1358, 0.0
    %1377 = vadd.xlane.f32.xlu0 %v1376
    %v1378 = vpop.xlane.xlu0 %1377
    %v1379 = vsel %vm714, %v1360, 0.0
    %1380 = vadd.xlane.f32.xlu0 %v1379
    %v1381 = vpop.xlane.xlu0 %1380
    %v1382 = vsel %vm714, %v1362, 0.0
    %1383 = vadd.xlane.f32.xlu0 %v1382
    %v1384 = vpop.xlane.xlu0 %1383
    %v1385 = vsel %vm714, %v1364, 0.0
    %1386 = vadd.xlane.f32.xlu0 %v1385
    %v1387 = vpop.xlane.xlu0 %1386
    %v1388 = vsel %vm714, %v1366, 0.0
    %1389 = vadd.xlane.f32.xlu0 %v1388
    %v1390 = vpop.xlane.xlu0 %1389
    %v1391 = vrcp.pop %v1369
    %v1392 = vrcp.pop %v1372
    %v1393 = vrcp.pop %v1375
    %v1394 = vrcp.pop %v1378
    %v1395 = vrcp.pop %v1381
    %v1396 = vrcp.pop %v1384
    %v1397 = vrcp.pop %v1387
    %v1398 = vrcp.pop %v1390
    %v1399 = vmul.f32 %v1352, %v1391
    %v1400 = vmul.f32 %v1354, %v1392
    %v1401 = vmul.f32 %v1356, %v1393
    %v1402 = vmul.f32 %v1358, %v1394
    %v1403 = vmul.f32 %v1360, %v1395
    %v1404 = vmul.f32 %v1362, %v1396
    %v1405 = vmul.f32 %v1364, %v1397
    %v1406 = vmul.f32 %v1366, %v1398
    %v1407 = vpack.c.bf16 %v1400, %v1399
    %v1408 = vpack.c.bf16 %v1402, %v1401
    %v1409 = vpack.c.bf16 %v1404, %v1403
    %v1410 = vpack.c.bf16 %v1406, %v1405
    %1411 = vrot.lane.b32.xlu0 %v598, 64
    %v1412 = vpop.permute.xlu0 %1411
    %1413 = vrot.lane.b32.xlu0 %v601, 64
    %v1414 = vpop.permute.xlu0 %1413
    %1415 = vrot.lane.b32.xlu0 %v604, 64
    %v1416 = vpop.permute.xlu0 %1415
    %1417 = vrot.lane.b32.xlu0 %v607, 64
    %v1418 = vpop.permute.xlu0 %1417
    %v1424 = vsel %vm714, %v1407, 0
    %v1427 = vsel %vm714, %v1408, 0
    %v1430 = vsel %vm714, %v1409, 0
    %v1433 = vsel %vm714, %v1410, 0
    %1435 = vmatprep.subr.bf16.mxu0 0
    %1436 = vmatpush1.bf16.msra.mxu0 %v1412
    %1437 = vmatprep.subr.bf16.mxu0 0
    %1438 = vmatpush1.bf16.msra.mxu0 %v1414
    %1439 = vmatprep.subr.bf16.mxu0 0
    %1440 = vmatpush1.bf16.msra.mxu0 %v1416
    %1441 = vmatprep.subr.bf16.mxu0 0
    %1442 = vmatpush1.bf16.msra.mxu0 %v1418
    %1443 = vmatprep.subr.bf16.mxu0 0
    %1444 = vmatpush1.bf16.msra.mxu0 0
    %1445 = vmatprep.subr.bf16.mxu0 0
    %1446 = vmatpush1.bf16.msra.mxu0 0
    %1447 = vmatprep.subr.bf16.mxu0 0
    %1448 = vmatpush1.bf16.msra.mxu0 0
    %1449 = vmatprep.subr.bf16.mxu0 0
    %1450 = vmatpush1.bf16.msra.mxu0 0
    %1451 = vmatprep.subr.bf16.mxu0 0
    %1452 = vmatpush1.bf16.msra.mxu0 0
    %1453 = vmatprep.subr.bf16.mxu0 0
    %1454 = vmatpush1.bf16.msra.mxu0 0
    %1455 = vmatprep.subr.bf16.mxu0 0
    %1456 = vmatpush1.bf16.msra.mxu0 0
    %1457 = vmatprep.subr.bf16.mxu0 0
    %1458 = vmatpush1.bf16.msra.mxu0 0
    %1459 = vmatprep.subr.bf16.mxu0 0
    %1460 = vmatpush1.bf16.msra.mxu0 0
    %1461 = vmatprep.subr.bf16.mxu0 0
    %1462 = vmatpush1.bf16.msra.mxu0 0
    %1463 = vmatprep.subr.bf16.mxu0 0
    %1464 = vmatpush1.bf16.msra.mxu0 0
    %1465 = vmatprep.subr.bf16.mxu0 0
    %1466 = vmatpush1.bf16.msra.mxu0 0
    %1467 = vmatprep.mubr.bf16.mxu0 0
    %1468 = vmatmul.mubr.bf16.gmra.mrb[0].mxu0 %v1424
    %v1469 = vpop.f32.mrb[0].mxu0
    %v1470 = vadd.f32 0.0, %v1469
    %v1471 = vpop.f32.mrb[0].mxu0
    %v1472 = vpop.f32.mrb[0].mxu0
    %v1473 = vadd.f32 0.0, %v1472
    %v1474 = vpop.f32.mrb[0].mxu0
    %1475 = vmatprep.mubr.bf16.mxu0 0
    %1476 = vmatmul.mubr.bf16.gmra.mrb[0].mxu0 %v1427
    %v1477 = vpop.f32.mrb[0].mxu0
    %v1478 = vadd.f32 0.0, %v1477
    %v1479 = vpop.f32.mrb[0].mxu0
    %v1480 = vpop.f32.mrb[0].mxu0
    %v1481 = vadd.f32 0.0, %v1480
    %v1482 = vpop.f32.mrb[0].mxu0
    %1483 = vmatprep.mubr.bf16.mxu0 0
    %1484 = vmatmul.mubr.bf16.gmra.mrb[0].mxu0 %v1430
    %v1485 = vpop.f32.mrb[0].mxu0
    %v1486 = vadd.f32 0.0, %v1485
    %v1487 = vpop.f32.mrb[0].mxu0
    %v1488 = vpop.f32.mrb[0].mxu0
    %v1489 = vadd.f32 0.0, %v1488
    %v1490 = vpop.f32.mrb[0].mxu0
    %1491 = vmatprep.mubr.bf16.mxu0 0
    %1492 = vmatmul.mubr.bf16.gmra.mrb[0].mxu0 %v1433
    %v1493 = vpop.f32.mrb[0].mxu0
    %v1494 = vadd.f32 0.0, %v1493
    %v1495 = vpop.f32.mrb[0].mxu0
    %v1496 = vpop.f32.mrb[0].mxu0
    %v1497 = vadd.f32 0.0, %v1496
    %v1498 = vpop.f32.mrb[0].mxu0
    %1499 = vdwg.mxu0
    %1500 = vrot.lane.b32.xlu0 %v596, 32
    %v1501 = vpop.permute.xlu0 %1500
    %1502 = vrot.lane.b32.xlu0 %v599, 32
    %v1503 = vpop.permute.xlu0 %1502
    %1504 = vrot.lane.b32.xlu0 %v602, 32
    %v1505 = vpop.permute.xlu0 %1504
    %1506 = vrot.lane.b32.xlu0 %v605, 32
    %v1507 = vpop.permute.xlu0 %1506
    %1508 = vrot.lane.b32.xlu0 %v597, 32
    %v1509 = vpop.permute.xlu0 %1508
    %1510 = vrot.lane.b32.xlu0 %v600, 32
    %v1511 = vpop.permute.xlu0 %1510
    %1512 = vrot.lane.b32.xlu0 %v603, 32
    %v1513 = vpop.permute.xlu0 %1512
    %1514 = vrot.lane.b32.xlu0 %v606, 32
    %v1515 = vpop.permute.xlu0 %1514
    %v1517 = vsel %vm608, %v1501, 0
    %v1520 = vsel %vm608, %v1503, 0
    %v1523 = vsel %vm608, %v1505, 0
    %v1526 = vsel %vm608, %v1507, 0
    %v1529 = vsel %vm608, %v1509, 0
    %v1532 = vsel %vm608, %v1511, 0
    %v1535 = vsel %vm608, %v1513, 0
    %v1538 = vsel %vm608, %v1515, 0
    %1540 = vmatprep.subr.bf16.mxu0 0
    %1541 = vmatpush1.bf16.xpose.msra.mxu0 %v1529
    %1542 = vmatprep.subr.bf16.mxu0 0
    %1543 = vmatpush1.bf16.xpose.msra.mxu0 %v1532
    %1544 = vmatprep.subr.bf16.mxu0 0
    %1545 = vmatpush1.bf16.xpose.msra.mxu0 %v1535
    %1546 = vmatprep.subr.bf16.mxu0 0
    %1547 = vmatpush1.bf16.xpose.msra.mxu0 %v1538
    %1548 = vmatprep.subr.bf16.mxu0 0
    %1549 = vmatpush1.bf16.xpose.msra.mxu0 0
    %1550 = vmatprep.subr.bf16.mxu0 0
    %1551 = vmatpush1.bf16.xpose.msra.mxu0 0
    %1552 = vmatprep.subr.bf16.mxu0 0
    %1553 = vmatpush1.bf16.xpose.msra.mxu0 0
    %1554 = vmatprep.subr.bf16.mxu0 0
    %1555 = vmatpush1.bf16.xpose.msra.mxu0 0
    %1556 = vmatprep.subr.bf16.mxu0 0
    %1557 = vmatpush1.bf16.xpose.msra.mxu0 0
    %1558 = vmatprep.subr.bf16.mxu0 0
    %1559 = vmatpush1.bf16.xpose.msra.mxu0 0
    %1560 = vmatprep.subr.bf16.mxu0 0
    %1561 = vmatpush1.bf16.xpose.msra.mxu0 0
    %1562 = vmatprep.subr.bf16.mxu0 0
    %1563 = vmatpush1.bf16.xpose.msra.mxu0 0
    %1564 = vmatprep.subr.bf16.mxu0 0
    %1565 = vmatpush1.bf16.xpose.msra.mxu0 0
    %1566 = vmatprep.subr.bf16.mxu0 0
    %1567 = vmatpush1.bf16.xpose.msra.mxu0 0
    %1568 = vmatprep.subr.bf16.mxu0 0
    %1569 = vmatpush1.bf16.xpose.msra.mxu0 0
    %1570 = vmatprep.subr.bf16.mxu0 0
    %1571 = vmatpush1.bf16.xpose.msra.mxu0 0
    %1572 = vmatprep.mubr.bf16.mxu0 0
    %1573 = vmatmul.mubr.bf16.gmra.mrb[0].mxu0 %v1517
    %v1574 = vpop.f32.mrb[0].mxu0
    %v1575 = vadd.f32 0.0, %v1574
    %v1576 = vpop.f32.mrb[0].mxu0
    %v1577 = vpop.f32.mrb[0].mxu0
    %v1578 = vadd.f32 0.0, %v1577
    %v1579 = vpop.f32.mrb[0].mxu0
    %1580 = vmatprep.mubr.bf16.mxu0 0
    %1581 = vmatmul.mubr.bf16.gmra.mrb[0].mxu0 %v1520
    %v1582 = vpop.f32.mrb[0].mxu0
    %v1583 = vadd.f32 0.0, %v1582
    %v1584 = vpop.f32.mrb[0].mxu0
    %v1585 = vpop.f32.mrb[0].mxu0
    %v1586 = vadd.f32 0.0, %v1585
    %v1587 = vpop.f32.mrb[0].mxu0
    %1588 = vmatprep.mubr.bf16.mxu0 0
    %1589 = vmatmul.mubr.bf16.gmra.mrb[0].mxu0 %v1523
    %v1590 = vpop.f32.mrb[0].mxu0
    %v1591 = vadd.f32 0.0, %v1590
    %v1592 = vpop.f32.mrb[0].mxu0
    %v1593 = vpop.f32.mrb[0].mxu0
    %v1594 = vadd.f32 0.0, %v1593
    %v1595 = vpop.f32.mrb[0].mxu0
    %1596 = vmatprep.mubr.bf16.mxu0 0
    %1597 = vmatmul.mubr.bf16.gmra.mrb[0].mxu0 %v1526
    %v1598 = vpop.f32.mrb[0].mxu0
    %v1599 = vadd.f32 0.0, %v1598
    %v1600 = vpop.f32.mrb[0].mxu0
    %v1601 = vpop.f32.mrb[0].mxu0
    %v1602 = vadd.f32 0.0, %v1601
    %v1603 = vpop.f32.mrb[0].mxu0
    %1604 = vdwg.mxu0
    %v1605 = vmul.f32 %v1575, 0.17677669
    %v1606 = vmul.f32 %v1578, 0.17677669
    %v1607 = vmul.f32 %v1583, 0.17677669
    %v1608 = vmul.f32 %v1586, 0.17677669
    %v1609 = vmul.f32 %v1591, 0.17677669
    %v1610 = vmul.f32 %v1594, 0.17677669
    %v1611 = vmul.f32 %v1599, 0.17677669
    %v1612 = vmul.f32 %v1602, 0.17677669
    %v1613 = vadd.f32 %v1605, %v150
    %v1614 = vadd.f32 %v1606, %v151
    %v1615 = vadd.f32 %v1607, %v152
    %v1616 = vadd.f32 %v1608, %v153
    %v1617 = vadd.f32 %v1609, %v154
    %v1618 = vadd.f32 %v1610, %v155
    %v1619 = vadd.f32 %v1611, %v156
    %v1620 = vadd.f32 %v1612, %v157
    %v1621 = vsel %vm714, %v1613, -inf
    %1622 = vmax.xlane.f32.xlu0 %v1621
    %v1623 = vpop.xlane.xlu0 %1622
    %v1624 = vsel %vm714, %v1614, -inf
    %1625 = vmax.xlane.f32.xlu0 %v1624
    %v1626 = vpop.xlane.xlu0 %1625
    %v1627 = vsel %vm714, %v1615, -inf
    %1628 = vmax.xlane.f32.xlu0 %v1627
    %v1629 = vpop.xlane.xlu0 %1628
    %v1630 = vsel %vm714, %v1616, -inf
    %1631 = vmax.xlane.f32.xlu0 %v1630
    %v1632 = vpop.xlane.xlu0 %1631
    %v1633 = vsel %vm714, %v1617, -inf
    %1634 = vmax.xlane.f32.xlu0 %v1633
    %v1635 = vpop.xlane.xlu0 %1634
    %v1636 = vsel %vm714, %v1618, -inf
    %1637 = vmax.xlane.f32.xlu0 %v1636
    %v1638 = vpop.xlane.xlu0 %1637
    %v1639 = vsel %vm714, %v1619, -inf
    %1640 = vmax.xlane.f32.xlu0 %v1639
    %v1641 = vpop.xlane.xlu0 %1640
    %v1642 = vsel %vm714, %v1620, -inf
    %1643 = vmax.xlane.f32.xlu0 %v1642
    %v1644 = vpop.xlane.xlu0 %1643
    %v1645 = vsub.f32 %v1613, %v1623
    %v1646 = vsub.f32 %v1614, %v1626
    %v1647 = vsub.f32 %v1615, %v1629
    %v1648 = vsub.f32 %v1616, %v1632
    %v1649 = vsub.f32 %v1617, %v1635
    %v1650 = vsub.f32 %v1618, %v1638
    %v1651 = vsub.f32 %v1619, %v1641
    %v1652 = vsub.f32 %v1620, %v1644
    %v1653 = vmul.f32 %v1645, 1.442695
    %v1654 = vpow.pop %v1653
    %v1655 = vmul.f32 %v1646, 1.442695
    %v1656 = vpow.pop %v1655
    %v1657 = vmul.f32 %v1647, 1.442695
    %v1658 = vpow.pop %v1657
    %v1659 = vmul.f32 %v1648, 1.442695
    %v1660 = vpow.pop %v1659
    %v1661 = vmul.f32 %v1649, 1.442695
    %v1662 = vpow.pop %v1661
    %v1663 = vmul.f32 %v1650, 1.442695
    %v1664 = vpow.pop %v1663
    %v1665 = vmul.f32 %v1651, 1.442695
    %v1666 = vpow.pop %v1665
    %v1667 = vmul.f32 %v1652, 1.442695
    %v1668 = vpow.pop %v1667
    %v1669 = vsel %vm714, %v1654, 0.0
    %1670 = vadd.xlane.f32.xlu0 %v1669
    %v1671 = vpop.xlane.xlu0 %1670
    %v1672 = vsel %vm714, %v1656, 0.0
    %1673 = vadd.xlane.f32.xlu0 %v1672
    %v1674 = vpop.xlane.xlu0 %1673
    %v1675 = vsel %vm714, %v1658, 0.0
    %1676 = vadd.xlane.f32.xlu0 %v1675
    %v1677 = vpop.xlane.xlu0 %1676
    %v1678 = vsel %vm714, %v1660, 0.0
    %1679 = vadd.xlane.f32.xlu0 %v1678
    %v1680 = vpop.xlane.xlu0 %1679
    %v1681 = vsel %vm714, %v1662, 0.0
    %1682 = vadd.xlane.f32.xlu0 %v1681
    %v1683 = vpop.xlane.xlu0 %1682
    %v1684 = vsel %vm714, %v1664, 0.0
    %1685 = vadd.xlane.f32.xlu0 %v1684
    %v1686 = vpop.xlane.xlu0 %1685
    %v1687 = vsel %vm714, %v1666, 0.0
    %1688 = vadd.xlane.f32.xlu0 %v1687
    %v1689 = vpop.xlane.xlu0 %1688
    %v1690 = vsel %vm714, %v1668, 0.0
    %1691 = vadd.xlane.f32.xlu0 %v1690
    %v1692 = vpop.xlane.xlu0 %1691
    %v1693 = vrcp.pop %v1671
    %v1694 = vrcp.pop %v1674
    %v1695 = vrcp.pop %v1677
    %v1696 = vrcp.pop %v1680
    %v1697 = vrcp.pop %v1683
    %v1698 = vrcp.pop %v1686
    %v1699 = vrcp.pop %v1689
    %v1700 = vrcp.pop %v1692
    %v1701 = vmul.f32 %v1654, %v1693
    %v1702 = vmul.f32 %v1656, %v1694
    %v1703 = vmul.f32 %v1658, %v1695
    %v1704 = vmul.f32 %v1660, %v1696
    %v1705 = vmul.f32 %v1662, %v1697
    %v1706 = vmul.f32 %v1664, %v1698
    %v1707 = vmul.f32 %v1666, %v1699
    %v1708 = vmul.f32 %v1668, %v1700
    %v1709 = vpack.c.bf16 %v1702, %v1701
    %v1710 = vpack.c.bf16 %v1704, %v1703
    %v1711 = vpack.c.bf16 %v1706, %v1705
    %v1712 = vpack.c.bf16 %v1708, %v1707
    %1713 = vrot.lane.b32.xlu0 %v598, 32
    %v1714 = vpop.permute.xlu0 %1713
    %1715 = vrot.lane.b32.xlu0 %v601, 32
    %v1716 = vpop.permute.xlu0 %1715
    %1717 = vrot.lane.b32.xlu0 %v604, 32
    %v1718 = vpop.permute.xlu0 %1717
    %1719 = vrot.lane.b32.xlu0 %v607, 32
    %v1720 = vpop.permute.xlu0 %1719
    %v1726 = vsel %vm714, %v1709, 0
    %v1729 = vsel %vm714, %v1710, 0
    %v1732 = vsel %vm714, %v1711, 0
    %v1735 = vsel %vm714, %v1712, 0
    %1737 = vmatprep.subr.bf16.mxu0 0
    %1738 = vmatpush1.bf16.msra.mxu0 %v1714
    %1739 = vmatprep.subr.bf16.mxu0 0
    %1740 = vmatpush1.bf16.msra.mxu0 %v1716
    %1741 = vmatprep.subr.bf16.mxu0 0
    %1742 = vmatpush1.bf16.msra.mxu0 %v1718
    %1743 = vmatprep.subr.bf16.mxu0 0
    %1744 = vmatpush1.bf16.msra.mxu0 %v1720
    %1745 = vmatprep.subr.bf16.mxu0 0
    %1746 = vmatpush1.bf16.msra.mxu0 0
    %1747 = vmatprep.subr.bf16.mxu0 0
    %1748 = vmatpush1.bf16.msra.mxu0 0
    %1749 = vmatprep.subr.bf16.mxu0 0
    %1750 = vmatpush1.bf16.msra.mxu0 0
    %1751 = vmatprep.subr.bf16.mxu0 0
    %1752 = vmatpush1.bf16.msra.mxu0 0
    %1753 = vmatprep.subr.bf16.mxu0 0
    %1754 = vmatpush1.bf16.msra.mxu0 0
    %1755 = vmatprep.subr.bf16.mxu0 0
    %1756 = vmatpush1.bf16.msra.mxu0 0
    %1757 = vmatprep.subr.bf16.mxu0 0
    %1758 = vmatpush1.bf16.msra.mxu0 0
    %1759 = vmatprep.subr.bf16.mxu0 0
    %1760 = vmatpush1.bf16.msra.mxu0 0
    %1761 = vmatprep.subr.bf16.mxu0 0
    %1762 = vmatpush1.bf16.msra.mxu0 0
    %1763 = vmatprep.subr.bf16.mxu0 0
    %1764 = vmatpush1.bf16.msra.mxu0 0
    %1765 = vmatprep.subr.bf16.mxu0 0
    %1766 = vmatpush1.bf16.msra.mxu0 0
    %1767 = vmatprep.subr.bf16.mxu0 0
    %1768 = vmatpush1.bf16.msra.mxu0 0
    %1769 = vmatprep.mubr.bf16.mxu0 0
    %1770 = vmatmul.mubr.bf16.gmra.mrb[0].mxu0 %v1726
    %v1771 = vpop.f32.mrb[0].mxu0
    %v1772 = vadd.f32 0.0, %v1771
    %v1773 = vpop.f32.mrb[0].mxu0
    %v1774 = vpop.f32.mrb[0].mxu0
    %v1775 = vadd.f32 0.0, %v1774
    %v1776 = vpop.f32.mrb[0].mxu0
    %1777 = vmatprep.mubr.bf16.mxu0 0
    %1778 = vmatmul.mubr.bf16.gmra.mrb[0].mxu0 %v1729
    %v1779 = vpop.f32.mrb[0].mxu0
    %v1780 = vadd.f32 0.0, %v1779
    %v1781 = vpop.f32.mrb[0].mxu0
    %v1782 = vpop.f32.mrb[0].mxu0
    %v1783 = vadd.f32 0.0, %v1782
    %v1784 = vpop.f32.mrb[0].mxu0
    %1785 = vmatprep.mubr.bf16.mxu0 0
    %1786 = vmatmul.mubr.bf16.gmra.mrb[0].mxu0 %v1732
    %v1787 = vpop.f32.mrb[0].mxu0
    %v1788 = vadd.f32 0.0, %v1787
    %v1789 = vpop.f32.mrb[0].mxu0
    %v1790 = vpop.f32.mrb[0].mxu0
    %v1791 = vadd.f32 0.0, %v1790
    %v1792 = vpop.f32.mrb[0].mxu0
    %1793 = vmatprep.mubr.bf16.mxu0 0
    %1794 = vmatmul.mubr.bf16.gmra.mrb[0].mxu0 %v1735
    %v1795 = vpop.f32.mrb[0].mxu0
    %v1796 = vadd.f32 0.0, %v1795
    %v1797 = vpop.f32.mrb[0].mxu0
    %v1798 = vpop.f32.mrb[0].mxu0
    %v1799 = vadd.f32 0.0, %v1798
    %v1800 = vpop.f32.mrb[0].mxu0
    %1801 = vdwg.mxu0
    %1810 = vrot.lane.b32.xlu0 %v1168, 32
    %v1811 = vpop.permute.xlu0 %1810
    %1812 = vrot.lane.b32.xlu0 %v1171, 32
    %v1813 = vpop.permute.xlu0 %1812
    %1814 = vrot.lane.b32.xlu0 %v1176, 32
    %v1815 = vpop.permute.xlu0 %1814
    %1816 = vrot.lane.b32.xlu0 %v1179, 32
    %v1817 = vpop.permute.xlu0 %1816
    %1818 = vrot.lane.b32.xlu0 %v1184, 32
    %v1819 = vpop.permute.xlu0 %1818
    %1820 = vrot.lane.b32.xlu0 %v1187, 32
    %v1821 = vpop.permute.xlu0 %1820
    %1822 = vrot.lane.b32.xlu0 %v1192, 32
    %v1823 = vpop.permute.xlu0 %1822
    %1824 = vrot.lane.b32.xlu0 %v1195, 32
    %v1825 = vpop.permute.xlu0 %1824
    %1842 = vrot.lane.b32.xlu0 %v1470, 64
    %v1843 = vpop.permute.xlu0 %1842
    %1844 = vrot.lane.b32.xlu0 %v1473, 64
    %v1845 = vpop.permute.xlu0 %1844
    %1846 = vrot.lane.b32.xlu0 %v1478, 64
    %v1847 = vpop.permute.xlu0 %1846
    %1848 = vrot.lane.b32.xlu0 %v1481, 64
    %v1849 = vpop.permute.xlu0 %1848
    %1850 = vrot.lane.b32.xlu0 %v1486, 64
    %v1851 = vpop.permute.xlu0 %1850
    %1852 = vrot.lane.b32.xlu0 %v1489, 64
    %v1853 = vpop.permute.xlu0 %1852
    %1854 = vrot.lane.b32.xlu0 %v1494, 64
    %v1855 = vpop.permute.xlu0 %1854
    %1856 = vrot.lane.b32.xlu0 %v1497, 64
    %v1857 = vpop.permute.xlu0 %1856
    %1874 = vrot.lane.b32.xlu0 %v1772, 96
    %v1875 = vpop.permute.xlu0 %1874
    %1876 = vrot.lane.b32.xlu0 %v1775, 96
    %v1877 = vpop.permute.xlu0 %1876
    %1878 = vrot.lane.b32.xlu0 %v1780, 96
    %v1879 = vpop.permute.xlu0 %1878
    %1880 = vrot.lane.b32.xlu0 %v1783, 96
    %v1881 = vpop.permute.xlu0 %1880
    %1882 = vrot.lane.b32.xlu0 %v1788, 96
    %v1883 = vpop.permute.xlu0 %1882
    %1884 = vrot.lane.b32.xlu0 %v1791, 96
    %v1885 = vpop.permute.xlu0 %1884
    %1886 = vrot.lane.b32.xlu0 %v1796, 96
    %v1887 = vpop.permute.xlu0 %1886
    %1888 = vrot.lane.b32.xlu0 %v1799, 96
    %v1889 = vpop.permute.xlu0 %1888
    %v1898 = vsel %vm608, %v854, %v1811
    %v1899 = vsel %vm608, %v857, %v1813
    %v1900 = vsel %vm608, %v862, %v1815
    %v1901 = vsel %vm608, %v865, %v1817
    %v1902 = vsel %vm608, %v870, %v1819
    %v1903 = vsel %vm608, %v873, %v1821
    %v1904 = vsel %vm608, %v878, %v1823
    %v1905 = vsel %vm608, %v881, %v1825
    %v1906 = vsel %vm714, %v1898, %v1843
    %v1907 = vsel %vm714, %v1899, %v1845
    %v1908 = vsel %vm714, %v1900, %v1847
    %v1909 = vsel %vm714, %v1901, %v1849
    %v1910 = vsel %vm714, %v1902, %v1851
    %v1911 = vsel %vm714, %v1903, %v1853
    %v1912 = vsel %vm714, %v1904, %v1855
    %v1913 = vsel %vm714, %v1905, %v1857
    %vm1914 = vcmask 785408
    %v1915 = vsel %vm1914, %v1906, %v1875
    %v1916 = vsel %vm1914, %v1907, %v1877
    %v1917 = vsel %vm1914, %v1908, %v1879
    %v1918 = vsel %vm1914, %v1909, %v1881
    %v1919 = vsel %vm1914, %v1910, %v1883
    %v1920 = vsel %vm1914, %v1911, %v1885
    %v1921 = vsel %vm1914, %v1912, %v1887
    %v1922 = vsel %vm1914, %v1913, %v1889
    %v1923 = vpack.c.bf16 %v1916, %v1915
    %v1924 = vpack.c.bf16 %v1918, %v1917
    %v1925 = vpack.c.bf16 %v1920, %v1919
    %v1926 = vpack.c.bf16 %v1922, %v1921
    %v1927 = vld [vmem:[#allocation10] sm:$0xf]
    %v1928 = vld [vmem:[#allocation10 + $0x4] sm:$0xf]
    %v1929 = vld [vmem:[#allocation10 + $0x8] sm:$0xf]
    %v1930 = vld [vmem:[#allocation10 + $0xc] sm:$0xf]
    %v1931 = vld [vmem:[#allocation10 + $0x10] sm:$0xf]
    %v1932 = vld [vmem:[#allocation10 + $0x14] sm:$0xf]
    %v1933 = vld [vmem:[#allocation10 + $0x18] sm:$0xf]
    %v1934 = vld [vmem:[#allocation10 + $0x1c] sm:$0xf]
    %v1935 = vld [vmem:[#allocation10 + $0x20] sm:$0xf]
    %v1936 = vld [vmem:[#allocation10 + $0x24] sm:$0xf]
    %v1937 = vld [vmem:[#allocation10 + $0x28] sm:$0xf]
    %v1938 = vld [vmem:[#allocation10 + $0x2c] sm:$0xf]
    %v1939 = vld [vmem:[#allocation10 + $0x30] sm:$0xf]
    %v1940 = vld [vmem:[#allocation10 + $0x34] sm:$0xf]
    %v1941 = vld [vmem:[#allocation10 + $0x38] sm:$0xf]
    %v1942 = vld [vmem:[#allocation10 + $0x3c] sm:$0xf]
    %v1943 = vld [vmem:[%s7] sm:$0x1]
    %v1945 = vlaneseq
    %v1946 = vshrl.u32 %v1945, 7
    %v1947 = vsub.s32 0, %v1946
    %v1948 = vrot.slane %v1943, %v1947
    %v1966 = vunpack.c.l.b16 %v1927
    %v1967 = vunpack.c.l.b16 %v1928
    %v1968 = vunpack.c.l.b16 %v1929
    %v1969 = vunpack.c.l.b16 %v1930
    %v1970 = vunpack.c.l.b16 %v1931
    %v1971 = vunpack.c.l.b16 %v1932
    %v1972 = vunpack.c.l.b16 %v1933
    %v1973 = vunpack.c.l.b16 %v1934
    %v1974 = vunpack.c.l.b16 %v1935
    %v1975 = vunpack.c.l.b16 %v1936
    %v1976 = vunpack.c.l.b16 %v1937
    %v1977 = vunpack.c.l.b16 %v1938
    %v1978 = vunpack.c.l.b16 %v1939
    %v1979 = vunpack.c.l.b16 %v1940
    %v1980 = vunpack.c.l.b16 %v1941
    %v1981 = vunpack.c.l.b16 %v1942
    %v1982 = vpack.c.b16 %v1967, %v1966
    %v1983 = vpack.c.b16 %v1969, %v1968
    %v1984 = vpack.c.b16 %v1971, %v1970
    %v1985 = vpack.c.b16 %v1973, %v1972
    %v1986 = vpack.c.b16 %v1975, %v1974
    %v1987 = vpack.c.b16 %v1977, %v1976
    %v1988 = vpack.c.b16 %v1979, %v1978
    %v1989 = vpack.c.b16 %v1981, %v1980
    %1998 = vmatprep.subr.bf16.mxu0 0
    %1999 = vmatpush1.bf16.msra.mxu0 %v1982
    %2000 = vmatprep.subr.bf16.mxu0 0
    %2001 = vmatpush1.bf16.msra.mxu0 %v1983
    %2002 = vmatprep.subr.bf16.mxu0 0
    %2003 = vmatpush1.bf16.msra.mxu0 %v1984
    %2004 = vmatprep.subr.bf16.mxu0 0
    %2005 = vmatpush1.bf16.msra.mxu0 %v1985
    %2006 = vmatprep.subr.bf16.mxu0 0
    %2007 = vmatpush1.bf16.msra.mxu0 %v1986
    %2008 = vmatprep.subr.bf16.mxu0 0
    %2009 = vmatpush1.bf16.msra.mxu0 %v1987
    %2010 = vmatprep.subr.bf16.mxu0 0
    %2011 = vmatpush1.bf16.msra.mxu0 %v1988
    %2012 = vmatprep.subr.bf16.mxu0 0
    %2013 = vmatpush1.bf16.msra.mxu0 %v1989
    %2014 = vmatprep.subr.bf16.mxu0 0
    %2015 = vmatpush1.bf16.msra.mxu0 0
    %2016 = vmatprep.subr.bf16.mxu0 0
    %2017 = vmatpush1.bf16.msra.mxu0 0
    %2018 = vmatprep.subr.bf16.mxu0 0
    %2019 = vmatpush1.bf16.msra.mxu0 0
    %2020 = vmatprep.subr.bf16.mxu0 0
    %2021 = vmatpush1.bf16.msra.mxu0 0
    %2022 = vmatprep.subr.bf16.mxu0 0
    %2023 = vmatpush1.bf16.msra.mxu0 0
    %2024 = vmatprep.subr.bf16.mxu0 0
    %2025 = vmatpush1.bf16.msra.mxu0 0
    %2026 = vmatprep.subr.bf16.mxu0 0
    %2027 = vmatpush1.bf16.msra.mxu0 0
    %2028 = vmatprep.subr.bf16.mxu0 0
    %2029 = vmatpush1.bf16.msra.mxu0 0
    %2030 = vmatprep.mubr.bf16.mxu0 0
    %2031 = vmatmul.mubr.bf16.gmra.mrb[0].mxu0 %v1923
    %v2032 = vpop.f32.mrb[0].mxu0
    %v2033 = vadd.f32 %v1948, %v2032
    %v2034 = vpop.f32.mrb[0].mxu0
    %v2035 = vpop.f32.mrb[0].mxu0
    %v2036 = vadd.f32 %v1948, %v2035
    %v2037 = vpop.f32.mrb[0].mxu0
    %2038 = vmatprep.mubr.bf16.mxu0 0
    %2039 = vmatmul.mubr.bf16.gmra.mrb[0].mxu0 %v1924
    %v2040 = vpop.f32.mrb[0].mxu0
    %v2041 = vadd.f32 %v1948, %v2040
    %v2042 = vpop.f32.mrb[0].mxu0
    %v2043 = vpop.f32.mrb[0].mxu0
    %v2044 = vadd.f32 %v1948, %v2043
    %v2045 = vpop.f32.mrb[0].mxu0
    %2046 = vmatprep.mubr.bf16.mxu0 0
    %2047 = vmatmul.mubr.bf16.gmra.mrb[0].mxu0 %v1925
    %v2048 = vpop.f32.mrb[0].mxu0
    %v2049 = vadd.f32 %v1948, %v2048
    %v2050 = vpop.f32.mrb[0].mxu0
    %v2051 = vpop.f32.mrb[0].mxu0
    %v2052 = vadd.f32 %v1948, %v2051
    %v2053 = vpop.f32.mrb[0].mxu0
    %2054 = vmatprep.mubr.bf16.mxu0 0
    %2055 = vmatmul.mubr.bf16.gmra.mrb[0].mxu0 %v1926
    %v2056 = vpop.f32.mrb[0].mxu0
    %v2057 = vadd.f32 %v1948, %v2056
    %v2058 = vpop.f32.mrb[0].mxu0
    %v2059 = vpop.f32.mrb[0].mxu0
    %v2060 = vadd.f32 %v1948, %v2059
    %v2061 = vpop.f32.mrb[0].mxu0
    %2062 = vdwg.mxu0
    %v2063 = vadd.f32 %v142, %v2033
    %v2064 = vadd.f32 %v143, %v2036
    %v2065 = vadd.f32 %v144, %v2041
    %v2066 = vadd.f32 %v145, %v2044
    %v2067 = vadd.f32 %v146, %v2049
    %v2068 = vadd.f32 %v147, %v2052
    %v2069 = vadd.f32 %v148, %v2057
    %v2070 = vadd.f32 %v149, %v2060
    %v2071 = vld [vmem:[%s8] sm:$0x1]
    %v2072 = vld [vmem:[%s9] sm:$0x1]
    %2073 = vadd.xlane.f32.xlu0 %v2063
    %v2074 = vpop.xlane.xlu0 %2073
    %2075 = vadd.xlane.f32.xlu0 %v2064
    %v2076 = vpop.xlane.xlu0 %2075
    %2077 = vadd.xlane.f32.xlu0 %v2065
    %v2078 = vpop.xlane.xlu0 %2077
    %2079 = vadd.xlane.f32.xlu0 %v2066
    %v2080 = vpop.xlane.xlu0 %2079
    %2081 = vadd.xlane.f32.xlu0 %v2067
    %v2082 = vpop.xlane.xlu0 %2081
    %2083 = vadd.xlane.f32.xlu0 %v2068
    %v2084 = vpop.xlane.xlu0 %2083
    %2085 = vadd.xlane.f32.xlu0 %v2069
    %v2086 = vpop.xlane.xlu0 %2085
    %2087 = vadd.xlane.f32.xlu0 %v2070
    %v2088 = vpop.xlane.xlu0 %2087
    %v2089 = vmul.f32 %v2074, %v176
    %v2090 = vmul.f32 %v2076, %v176
    %v2091 = vmul.f32 %v2078, %v176
    %v2092 = vmul.f32 %v2080, %v176
    %v2093 = vmul.f32 %v2082, %v176
    %v2094 = vmul.f32 %v2084, %v176
    %v2095 = vmul.f32 %v2086, %v176
    %v2096 = vmul.f32 %v2088, %v176
    %v2097 = vsub.f32 %v2063, %v2089
    %v2098 = vsub.f32 %v2064, %v2090
    %v2099 = vsub.f32 %v2065, %v2091
    %v2100 = vsub.f32 %v2066, %v2092
    %v2101 = vsub.f32 %v2067, %v2093
    %v2102 = vsub.f32 %v2068, %v2094
    %v2103 = vsub.f32 %v2069, %v2095
    %v2104 = vsub.f32 %v2070, %v2096
    %v2105 = vmul.f32 %v2097, %v2097
    %v2106 = vmul.f32 %v2098, %v2098
    %v2107 = vmul.f32 %v2099, %v2099
    %v2108 = vmul.f32 %v2100, %v2100
    %v2109 = vmul.f32 %v2101, %v2101
    %v2110 = vmul.f32 %v2102, %v2102
    %v2111 = vmul.f32 %v2103, %v2103
    %v2112 = vmul.f32 %v2104, %v2104
    %2113 = vadd.xlane.f32.xlu0 %v2105
    %v2114 = vpop.xlane.xlu0 %2113
    %2115 = vadd.xlane.f32.xlu0 %v2106
    %v2116 = vpop.xlane.xlu0 %2115
    %2117 = vadd.xlane.f32.xlu0 %v2107
    %v2118 = vpop.xlane.xlu0 %2117
    %2119 = vadd.xlane.f32.xlu0 %v2108
    %v2120 = vpop.xlane.xlu0 %2119
    %2121 = vadd.xlane.f32.xlu0 %v2109
    %v2122 = vpop.xlane.xlu0 %2121
    %2123 = vadd.xlane.f32.xlu0 %v2110
    %v2124 = vpop.xlane.xlu0 %2123
    %2125 = vadd.xlane.f32.xlu0 %v2111
    %v2126 = vpop.xlane.xlu0 %2125
    %2127 = vadd.xlane.f32.xlu0 %v2112
    %v2128 = vpop.xlane.xlu0 %2127
    %v2129 = vmul.f32 %v2114, %v176
    %v2130 = vmul.f32 %v2116, %v176
    %v2131 = vmul.f32 %v2118, %v176
    %v2132 = vmul.f32 %v2120, %v176
    %v2133 = vmul.f32 %v2122, %v176
    %v2134 = vmul.f32 %v2124, %v176
    %v2135 = vmul.f32 %v2126, %v176
    %v2136 = vmul.f32 %v2128, %v176
    %v2137 = vadd.f32 %v2129, 1e-05
    %v2138 = vadd.f32 %v2130, 1e-05
    %v2139 = vadd.f32 %v2131, 1e-05
    %v2140 = vadd.f32 %v2132, 1e-05
    %v2141 = vadd.f32 %v2133, 1e-05
    %v2142 = vadd.f32 %v2134, 1e-05
    %v2143 = vadd.f32 %v2135, 1e-05
    %v2144 = vadd.f32 %v2136, 1e-05
    %v2145 = vrsqrt.pop %v2137
    %v2146 = vrsqrt.pop %v2138
    %v2147 = vrsqrt.pop %v2139
    %v2148 = vrsqrt.pop %v2140
    %v2149 = vrsqrt.pop %v2141
    %v2150 = vrsqrt.pop %v2142
    %v2151 = vrsqrt.pop %v2143
    %v2152 = vrsqrt.pop %v2144
    %v2153 = vmul.f32 %v2097, %v2145
    %v2154 = vmul.f32 %v2098, %v2146
    %v2155 = vmul.f32 %v2099, %v2147
    %v2156 = vmul.f32 %v2100, %v2148
    %v2157 = vmul.f32 %v2101, %v2149
    %v2158 = vmul.f32 %v2102, %v2150
    %v2159 = vmul.f32 %v2103, %v2151
    %v2160 = vmul.f32 %v2104, %v2152
    %v2162 = vlaneseq
    %v2163 = vshrl.u32 %v2162, 7
    %v2164 = vsub.s32 0, %v2163
    %v2165 = vrot.slane %v2071, %v2164
    %v2167 = vmul.f32 %v2153, %v2165
    %v2168 = vmul.f32 %v2154, %v2165
    %v2169 = vmul.f32 %v2155, %v2165
    %v2170 = vmul.f32 %v2156, %v2165
    %v2171 = vmul.f32 %v2157, %v2165
    %v2172 = vmul.f32 %v2158, %v2165
    %v2173 = vmul.f32 %v2159, %v2165
    %v2174 = vmul.f32 %v2160, %v2165
    %v2176 = vlaneseq
    %v2177 = vshrl.u32 %v2176, 7
    %v2178 = vsub.s32 0, %v2177
    %v2179 = vrot.slane %v2072, %v2178
    %v2181 = vadd.f32 %v2167, %v2179
    %v2182 = vadd.f32 %v2168, %v2179
    %v2183 = vadd.f32 %v2169, %v2179
    %v2184 = vadd.f32 %v2170, %v2179
    %v2185 = vadd.f32 %v2171, %v2179
    %v2186 = vadd.f32 %v2172, %v2179
    %v2187 = vadd.f32 %v2173, %v2179
    %v2188 = vadd.f32 %v2174, %v2179
    %v2189 = vpack.c.bf16 %v2182, %v2181
    %v2190 = vpack.c.bf16 %v2184, %v2183
    %v2191 = vpack.c.bf16 %v2186, %v2185
    %v2192 = vpack.c.bf16 %v2188, %v2187
    %v2193 = vld [vmem:[#allocation11] sm:$0xff]
    %v2194 = vld [vmem:[#allocation11 + $0x8] sm:$0xff]
    %v2195 = vld [vmem:[#allocation11 + $0x10] sm:$0xff]
    %v2196 = vld [vmem:[#allocation11 + $0x18] sm:$0xff]
    %v2197 = vld [vmem:[#allocation11 + $0x20] sm:$0xff]
    %v2198 = vld [vmem:[#allocation11 + $0x28] sm:$0xff]
    %v2199 = vld [vmem:[#allocation11 + $0x30] sm:$0xff]
    %v2200 = vld [vmem:[#allocation11 + $0x38] sm:$0xff]
    %v2201 = vld [vmem:[#allocation11 + $0x40] sm:$0xff]
    %v2202 = vld [vmem:[#allocation11 + $0x48] sm:$0xff]
    %v2203 = vld [vmem:[#allocation11 + $0x50] sm:$0xff]
    %v2204 = vld [vmem:[#allocation11 + $0x58] sm:$0xff]
    %v2205 = vld [vmem:[#allocation11 + $0x60] sm:$0xff]
    %v2206 = vld [vmem:[#allocation11 + $0x68] sm:$0xff]
    %v2207 = vld [vmem:[#allocation11 + $0x70] sm:$0xff]
    %v2208 = vld [vmem:[#allocation11 + $0x78] sm:$0xff]
    %v2209 = vld [vmem:[#allocation11 + $0x80] sm:$0xff]
    %v2210 = vld [vmem:[#allocation11 + $0x88] sm:$0xff]
    %v2211 = vld [vmem:[#allocation11 + $0x90] sm:$0xff]
    %v2212 = vld [vmem:[#allocation11 + $0x98] sm:$0xff]
    %v2213 = vld [vmem:[#allocation11 + $0xa0] sm:$0xff]
    %v2214 = vld [vmem:[#allocation11 + $0xa8] sm:$0xff]
    %v2215 = vld [vmem:[#allocation11 + $0xb0] sm:$0xff]
    %v2216 = vld [vmem:[#allocation11 + $0xb8] sm:$0xff]
    %v2217 = vld [vmem:[#allocation11 + $0xc0] sm:$0xff]
    %v2218 = vld [vmem:[#allocation11 + $0xc8] sm:$0xff]
    %v2219 = vld [vmem:[#allocation11 + $0xd0] sm:$0xff]
    %v2220 = vld [vmem:[#allocation11 + $0xd8] sm:$0xff]
    %v2221 = vld [vmem:[#allocation11 + $0xe0] sm:$0xff]
    %v2222 = vld [vmem:[#allocation11 + $0xe8] sm:$0xff]
    %v2223 = vld [vmem:[#allocation11 + $0xf0] sm:$0xff]
    %v2224 = vld [vmem:[#allocation11 + $0xf8] sm:$0xff]
    %v2225 = vld [vmem:[%s11] sm:$0xf]
    %v2227 = vlaneseq
    %v2228 = vshrl.u32 %v2227, 7
    %v2229 = vsub.s32 0, %v2228
    %v2230 = vrot.slane %v2225, %v2229
    %v2231 = vlaneseq
    %v2232 = vshrl.u32 %v2231, 7
    %v2233 = vsub.s32 1, %v2232
    %v2234 = vrot.slane %v2225, %v2233
    %v2235 = vlaneseq
    %v2236 = vshrl.u32 %v2235, 7
    %v2237 = vsub.s32 2, %v2236
    %v2238 = vrot.slane %v2225, %v2237
    %v2239 = vlaneseq
    %v2240 = vshrl.u32 %v2239, 7
    %v2241 = vsub.s32 3, %v2240
    %v2242 = vrot.slane %v2225, %v2241
    %v2279 = vunpack.c.l.b16 %v2193
    %v2280 = vunpack.c.h.b16 %v2193
    %v2281 = vunpack.c.l.b16 %v2194
    %v2282 = vunpack.c.h.b16 %v2194
    %v2283 = vunpack.c.l.b16 %v2195
    %v2284 = vunpack.c.h.b16 %v2195
    %v2285 = vunpack.c.l.b16 %v2196
    %v2286 = vunpack.c.h.b16 %v2196
    %v2287 = vunpack.c.l.b16 %v2197
    %v2288 = vunpack.c.h.b16 %v2197
    %v2289 = vunpack.c.l.b16 %v2198
    %v2290 = vunpack.c.h.b16 %v2198
    %v2291 = vunpack.c.l.b16 %v2199
    %v2292 = vunpack.c.h.b16 %v2199
    %v2293 = vunpack.c.l.b16 %v2200
    %v2294 = vunpack.c.h.b16 %v2200
    %v2295 = vunpack.c.l.b16 %v2201
    %v2296 = vunpack.c.h.b16 %v2201
    %v2297 = vunpack.c.l.b16 %v2202
    %v2298 = vunpack.c.h.b16 %v2202
    %v2299 = vunpack.c.l.b16 %v2203
    %v2300 = vunpack.c.h.b16 %v2203
    %v2301 = vunpack.c.l.b16 %v2204
    %v2302 = vunpack.c.h.b16 %v2204
    %v2303 = vunpack.c.l.b16 %v2205
    %v2304 = vunpack.c.h.b16 %v2205
    %v2305 = vunpack.c.l.b16 %v2206
    %v2306 = vunpack.c.h.b16 %v2206
    %v2307 = vunpack.c.l.b16 %v2207
    %v2308 = vunpack.c.h.b16 %v2207
    %v2309 = vunpack.c.l.b16 %v2208
    %v2310 = vunpack.c.h.b16 %v2208
    %v2311 = vunpack.c.l.b16 %v2209
    %v2312 = vunpack.c.h.b16 %v2209
    %v2313 = vunpack.c.l.b16 %v2210
    %v2314 = vunpack.c.h.b16 %v2210
    %v2315 = vunpack.c.l.b16 %v2211
    %v2316 = vunpack.c.h.b16 %v2211
    %v2317 = vunpack.c.l.b16 %v2212
    %v2318 = vunpack.c.h.b16 %v2212
    %v2319 = vunpack.c.l.b16 %v2213
    %v2320 = vunpack.c.h.b16 %v2213
    %v2321 = vunpack.c.l.b16 %v2214
    %v2322 = vunpack.c.h.b16 %v2214
    %v2323 = vunpack.c.l.b16 %v2215
    %v2324 = vunpack.c.h.b16 %v2215
    %v2325 = vunpack.c.l.b16 %v2216
    %v2326 = vunpack.c.h.b16 %v2216
    %v2327 = vunpack.c.l.b16 %v2217
    %v2328 = vunpack.c.h.b16 %v2217
    %v2329 = vunpack.c.l.b16 %v2218
    %v2330 = vunpack.c.h.b16 %v2218
    %v2331 = vunpack.c.l.b16 %v2219
    %v2332 = vunpack.c.h.b16 %v2219
    %v2333 = vunpack.c.l.b16 %v2220
    %v2334 = vunpack.c.h.b16 %v2220
    %v2335 = vunpack.c.l.b16 %v2221
    %v2336 = vunpack.c.h.b16 %v2221
    %v2337 = vunpack.c.l.b16 %v2222
    %v2338 = vunpack.c.h.b16 %v2222
    %v2339 = vunpack.c.l.b16 %v2223
    %v2340 = vunpack.c.h.b16 %v2223
    %v2341 = vunpack.c.l.b16 %v2224
    %v2342 = vunpack.c.h.b16 %v2224
    %v2343 = vpack.c.b16 %v2283, %v2279
    %v2344 = vpack.c.b16 %v2284, %v2280
    %v2345 = vpack.c.b16 %v2285, %v2281
    %v2346 = vpack.c.b16 %v2286, %v2282
    %v2347 = vpack.c.b16 %v2291, %v2287
    %v2348 = vpack.c.b16 %v2292, %v2288
    %v2349 = vpack.c.b16 %v2293, %v2289
    %v2350 = vpack.c.b16 %v2294, %v2290
    %v2351 = vpack.c.b16 %v2299, %v2295
    %v2352 = vpack.c.b16 %v2300, %v2296
    %v2353 = vpack.c.b16 %v2301, %v2297
    %v2354 = vpack.c.b16 %v2302, %v2298
    %v2355 = vpack.c.b16 %v2307, %v2303
    %v2356 = vpack.c.b16 %v2308, %v2304
    %v2357 = vpack.c.b16 %v2309, %v2305
    %v2358 = vpack.c.b16 %v2310, %v2306
    %v2359 = vpack.c.b16 %v2315, %v2311
    %v2360 = vpack.c.b16 %v2316, %v2312
    %v2361 = vpack.c.b16 %v2317, %v2313
    %v2362 = vpack.c.b16 %v2318, %v2314
    %v2363 = vpack.c.b16 %v2323, %v2319
    %v2364 = vpack.c.b16 %v2324, %v2320
    %v2365 = vpack.c.b16 %v2325, %v2321
    %v2366 = vpack.c.b16 %v2326, %v2322
    %v2367 = vpack.c.b16 %v2331, %v2327
    %v2368 = vpack.c.b16 %v2332, %v2328
    %v2369 = vpack.c.b16 %v2333, %v2329
    %v2370 = vpack.c.b16 %v2334, %v2330
    %v2371 = vpack.c.b16 %v2339, %v2335
    %v2372 = vpack.c.b16 %v2340, %v2336
    %v2373 = vpack.c.b16 %v2341, %v2337
    %v2374 = vpack.c.b16 %v2342, %v2338
    %2407 = vmatprep.subr.bf16.mxu0 %v2344
    %2408 = vmatpush1.bf16.msra.mxu0 %v2343
    %2409 = vmatprep.subr.bf16.mxu0 %v2348
    %2410 = vmatpush1.bf16.msra.mxu0 %v2347
    %2411 = vmatprep.subr.bf16.mxu0 %v2352
    %2412 = vmatpush1.bf16.msra.mxu0 %v2351
    %2413 = vmatprep.subr.bf16.mxu0 %v2356
    %2414 = vmatpush1.bf16.msra.mxu0 %v2355
    %2415 = vmatprep.subr.bf16.mxu0 %v2360
    %2416 = vmatpush1.bf16.msra.mxu0 %v2359
    %2417 = vmatprep.subr.bf16.mxu0 %v2364
    %2418 = vmatpush1.bf16.msra.mxu0 %v2363
    %2419 = vmatprep.subr.bf16.mxu0 %v2368
    %2420 = vmatpush1.bf16.msra.mxu0 %v2367
    %2421 = vmatprep.subr.bf16.mxu0 %v2372
    %2422 = vmatpush1.bf16.msra.mxu0 %v2371
    %2423 = vmatprep.subr.bf16.mxu0 0
    %2424 = vmatpush1.bf16.msra.mxu0 0
    %2425 = vmatprep.subr.bf16.mxu0 0
    %2426 = vmatpush1.bf16.msra.mxu0 0
    %2427 = vmatprep.subr.bf16.mxu0 0
    %2428 = vmatpush1.bf16.msra.mxu0 0
    %2429 = vmatprep.subr.bf16.mxu0 0
    %2430 = vmatpush1.bf16.msra.mxu0 0
    %2431 = vmatprep.subr.bf16.mxu0 0
    %2432 = vmatpush1.bf16.msra.mxu0 0
    %2433 = vmatprep.subr.bf16.mxu0 0
    %2434 = vmatpush1.bf16.msra.mxu0 0
    %2435 = vmatprep.subr.bf16.mxu0 0
    %2436 = vmatpush1.bf16.msra.mxu0 0
    %2437 = vmatprep.subr.bf16.mxu0 0
    %2438 = vmatpush1.bf16.msra.mxu0 0
    %2439 = vmatprep.mubr.bf16.mxu0 0
    %2440 = vmatmul.mubr.bf16.gmra.mrb[0].mxu0 %v2189
    %v2441 = vpop.f32.mrb[0].mxu0
    %v2442 = vadd.f32 %v2230, %v2441
    %v2443 = vpop.f32.mrb[0].mxu0
    %v2444 = vadd.f32 %v2234, %v2443
    %v2445 = vpop.f32.mrb[0].mxu0
    %v2446 = vadd.f32 %v2230, %v2445
    %v2447 = vpop.f32.mrb[0].mxu0
    %v2448 = vadd.f32 %v2234, %v2447
    %2449 = vmatprep.mubr.bf16.mxu0 0
    %2450 = vmatmul.mubr.bf16.gmra.mrb[0].mxu0 %v2190
    %v2451 = vpop.f32.mrb[0].mxu0
    %v2452 = vadd.f32 %v2230, %v2451
    %v2453 = vpop.f32.mrb[0].mxu0
    %v2454 = vadd.f32 %v2234, %v2453
    %v2455 = vpop.f32.mrb[0].mxu0
    %v2456 = vadd.f32 %v2230, %v2455
    %v2457 = vpop.f32.mrb[0].mxu0
    %v2458 = vadd.f32 %v2234, %v2457
    %2459 = vmatprep.mubr.bf16.mxu0 0
    %2460 = vmatmul.mubr.bf16.gmra.mrb[0].mxu0 %v2191
    %v2461 = vpop.f32.mrb[0].mxu0
    %v2462 = vadd.f32 %v2230, %v2461
    %v2463 = vpop.f32.mrb[0].mxu0
    %v2464 = vadd.f32 %v2234, %v2463
    %v2465 = vpop.f32.mrb[0].mxu0
    %v2466 = vadd.f32 %v2230, %v2465
    %v2467 = vpop.f32.mrb[0].mxu0
    %v2468 = vadd.f32 %v2234, %v2467
    %2469 = vmatprep.mubr.bf16.mxu0 0
    %2470 = vmatmul.mubr.bf16.gmra.mrb[0].mxu0 %v2192
    %v2471 = vpop.f32.mrb[0].mxu0
    %v2472 = vadd.f32 %v2230, %v2471
    %v2473 = vpop.f32.mrb[0].mxu0
    %v2474 = vadd.f32 %v2234, %v2473
    %v2475 = vpop.f32.mrb[0].mxu0
    %v2476 = vadd.f32 %v2230, %v2475
    %v2477 = vpop.f32.mrb[0].mxu0
    %v2478 = vadd.f32 %v2234, %v2477
    %2479 = vdwg.mxu0
    %2480 = vmatprep.subr.bf16.mxu0 %v2346
    %2481 = vmatpush1.bf16.msra.mxu0 %v2345
    %2482 = vmatprep.subr.bf16.mxu0 %v2350
    %2483 = vmatpush1.bf16.msra.mxu0 %v2349
    %2484 = vmatprep.subr.bf16.mxu0 %v2354
    %2485 = vmatpush1.bf16.msra.mxu0 %v2353
    %2486 = vmatprep.subr.bf16.mxu0 %v2358
    %2487 = vmatpush1.bf16.msra.mxu0 %v2357
    %2488 = vmatprep.subr.bf16.mxu0 %v2362
    %2489 = vmatpush1.bf16.msra.mxu0 %v2361
    %2490 = vmatprep.subr.bf16.mxu0 %v2366
    %2491 = vmatpush1.bf16.msra.mxu0 %v2365
    %2492 = vmatprep.subr.bf16.mxu0 %v2370
    %2493 = vmatpush1.bf16.msra.mxu0 %v2369
    %2494 = vmatprep.subr.bf16.mxu0 %v2374
    %2495 = vmatpush1.bf16.msra.mxu0 %v2373
    %2496 = vmatprep.subr.bf16.mxu0 0
    %2497 = vmatpush1.bf16.msra.mxu0 0
    %2498 = vmatprep.subr.bf16.mxu0 0
    %2499 = vmatpush1.bf16.msra.mxu0 0
    %2500 = vmatprep.subr.bf16.mxu0 0
    %2501 = vmatpush1.bf16.msra.mxu0 0
    %2502 = vmatprep.subr.bf16.mxu0 0
    %2503 = vmatpush1.bf16.msra.mxu0 0
    %2504 = vmatprep.subr.bf16.mxu0 0
    %2505 = vmatpush1.bf16.msra.mxu0 0
    %2506 = vmatprep.subr.bf16.mxu0 0
    %2507 = vmatpush1.bf16.msra.mxu0 0
    %2508 = vmatprep.subr.bf16.mxu0 0
    %2509 = vmatpush1.bf16.msra.mxu0 0
    %2510 = vmatprep.subr.bf16.mxu0 0
    %2511 = vmatpush1.bf16.msra.mxu0 0
    %2512 = vmatprep.mubr.bf16.mxu0 0
    %2513 = vmatmul.mubr.bf16.gmra.mrb[0].mxu0 %v2189
    %v2514 = vpop.f32.mrb[0].mxu0
    %v2515 = vadd.f32 %v2238, %v2514
    %v2516 = vpop.f32.mrb[0].mxu0
    %v2517 = vadd.f32 %v2242, %v2516
    %v2518 = vpop.f32.mrb[0].mxu0
    %v2519 = vadd.f32 %v2238, %v2518
    %v2520 = vpop.f32.mrb[0].mxu0
    %v2521 = vadd.f32 %v2242, %v2520
    %2522 = vmatprep.mubr.bf16.mxu0 0
    %2523 = vmatmul.mubr.bf16.gmra.mrb[0].mxu0 %v2190
    %v2524 = vpop.f32.mrb[0].mxu0
    %v2525 = vadd.f32 %v2238, %v2524
    %v2526 = vpop.f32.mrb[0].mxu0
    %v2527 = vadd.f32 %v2242, %v2526
    %v2528 = vpop.f32.mrb[0].mxu0
    %v2529 = vadd.f32 %v2238, %v2528
    %v2530 = vpop.f32.mrb[0].mxu0
    %v2531 = vadd.f32 %v2242, %v2530
    %2532 = vmatprep.mubr.bf16.mxu0 0
    %2533 = vmatmul.mubr.bf16.gmra.mrb[0].mxu0 %v2191
    %v2534 = vpop.f32.mrb[0].mxu0
    %v2535 = vadd.f32 %v2238, %v2534
    %v2536 = vpop.f32.mrb[0].mxu0
    %v2537 = vadd.f32 %v2242, %v2536
    %v2538 = vpop.f32.mrb[0].mxu0
    %v2539 = vadd.f32 %v2238, %v2538
    %v2540 = vpop.f32.mrb[0].mxu0
    %v2541 = vadd.f32 %v2242, %v2540
    %2542 = vmatprep.mubr.bf16.mxu0 0
    %2543 = vmatmul.mubr.bf16.gmra.mrb[0].mxu0 %v2192
    %v2544 = vpop.f32.mrb[0].mxu0
    %v2545 = vadd.f32 %v2238, %v2544
    %v2546 = vpop.f32.mrb[0].mxu0
    %v2547 = vadd.f32 %v2242, %v2546
    %v2548 = vpop.f32.mrb[0].mxu0
    %v2549 = vadd.f32 %v2238, %v2548
    %v2550 = vpop.f32.mrb[0].mxu0
    %v2551 = vadd.f32 %v2242, %v2550
    %2552 = vdwg.mxu0
    %v2553 = vmul.f32 %v2442, %v2442
    %v2554 = vmul.f32 %v2444, %v2444
    %v2555 = vmul.f32 %v2515, %v2515
    %v2556 = vmul.f32 %v2517, %v2517
    %v2557 = vmul.f32 %v2446, %v2446
    %v2558 = vmul.f32 %v2448, %v2448
    %v2559 = vmul.f32 %v2519, %v2519
    %v2560 = vmul.f32 %v2521, %v2521
    %v2561 = vmul.f32 %v2452, %v2452
    %v2562 = vmul.f32 %v2454, %v2454
    %v2563 = vmul.f32 %v2525, %v2525
    %v2564 = vmul.f32 %v2527, %v2527
    %v2565 = vmul.f32 %v2456, %v2456
    %v2566 = vmul.f32 %v2458, %v2458
    %v2567 = vmul.f32 %v2529, %v2529
    %v2568 = vmul.f32 %v2531, %v2531
    %v2569 = vmul.f32 %v2462, %v2462
    %v2570 = vmul.f32 %v2464, %v2464
    %v2571 = vmul.f32 %v2535, %v2535
    %v2572 = vmul.f32 %v2537, %v2537
    %v2573 = vmul.f32 %v2466, %v2466
    %v2574 = vmul.f32 %v2468, %v2468
    %v2575 = vmul.f32 %v2539, %v2539
    %v2576 = vmul.f32 %v2541, %v2541
    %v2577 = vmul.f32 %v2472, %v2472
    %v2578 = vmul.f32 %v2474, %v2474
    %v2579 = vmul.f32 %v2545, %v2545
    %v2580 = vmul.f32 %v2547, %v2547
    %v2581 = vmul.f32 %v2476, %v2476
    %v2582 = vmul.f32 %v2478, %v2478
    %v2583 = vmul.f32 %v2549, %v2549
    %v2584 = vmul.f32 %v2551, %v2551
    %v2585 = vmul.f32 %v2442, %v2553
    %v2586 = vmul.f32 %v2444, %v2554
    %v2587 = vmul.f32 %v2515, %v2555
    %v2588 = vmul.f32 %v2517, %v2556
    %v2589 = vmul.f32 %v2446, %v2557
    %v2590 = vmul.f32 %v2448, %v2558
    %v2591 = vmul.f32 %v2519, %v2559
    %v2592 = vmul.f32 %v2521, %v2560
    %v2593 = vmul.f32 %v2452, %v2561
    %v2594 = vmul.f32 %v2454, %v2562
    %v2595 = vmul.f32 %v2525, %v2563
    %v2596 = vmul.f32 %v2527, %v2564
    %v2597 = vmul.f32 %v2456, %v2565
    %v2598 = vmul.f32 %v2458, %v2566
    %v2599 = vmul.f32 %v2529, %v2567
    %v2600 = vmul.f32 %v2531, %v2568
    %v2601 = vmul.f32 %v2462, %v2569
    %v2602 = vmul.f32 %v2464, %v2570
    %v2603 = vmul.f32 %v2535, %v2571
    %v2604 = vmul.f32 %v2537, %v2572
    %v2605 = vmul.f32 %v2466, %v2573
    %v2606 = vmul.f32 %v2468, %v2574
    %v2607 = vmul.f32 %v2539, %v2575
    %v2608 = vmul.f32 %v2541, %v2576
    %v2609 = vmul.f32 %v2472, %v2577
    %v2610 = vmul.f32 %v2474, %v2578
    %v2611 = vmul.f32 %v2545, %v2579
    %v2612 = vmul.f32 %v2547, %v2580
    %v2613 = vmul.f32 %v2476, %v2581
    %v2614 = vmul.f32 %v2478, %v2582
    %v2615 = vmul.f32 %v2549, %v2583
    %v2616 = vmul.f32 %v2551, %v2584
    %v2617 = vmul.f32 %v2585, 0.044715
    %v2618 = vmul.f32 %v2586, 0.044715
    %v2619 = vmul.f32 %v2587, 0.044715
    %v2620 = vmul.f32 %v2588, 0.044715
    %v2621 = vmul.f32 %v2589, 0.044715
    %v2622 = vmul.f32 %v2590, 0.044715
    %v2623 = vmul.f32 %v2591, 0.044715
    %v2624 = vmul.f32 %v2592, 0.044715
    %v2625 = vmul.f32 %v2593, 0.044715
    %v2626 = vmul.f32 %v2594, 0.044715
    %v2627 = vmul.f32 %v2595, 0.044715
    %v2628 = vmul.f32 %v2596, 0.044715
    %v2629 = vmul.f32 %v2597, 0.044715
    %v2630 = vmul.f32 %v2598, 0.044715
    %v2631 = vmul.f32 %v2599, 0.044715
    %v2632 = vmul.f32 %v2600, 0.044715
    %v2633 = vmul.f32 %v2601, 0.044715
    %v2634 = vmul.f32 %v2602, 0.044715
    %v2635 = vmul.f32 %v2603, 0.044715
    %v2636 = vmul.f32 %v2604, 0.044715
    %v2637 = vmul.f32 %v2605, 0.044715
    %v2638 = vmul.f32 %v2606, 0.044715
    %v2639 = vmul.f32 %v2607, 0.044715
    %v2640 = vmul.f32 %v2608, 0.044715
    %v2641 = vmul.f32 %v2609, 0.044715
    %v2642 = vmul.f32 %v2610, 0.044715
    %v2643 = vmul.f32 %v2611, 0.044715
    %v2644 = vmul.f32 %v2612, 0.044715
    %v2645 = vmul.f32 %v2613, 0.044715
    %v2646 = vmul.f32 %v2614, 0.044715
    %v2647 = vmul.f32 %v2615, 0.044715
    %v2648 = vmul.f32 %v2616, 0.044715
    %v2649 = vadd.f32 %v2442, %v2617
    %v2650 = vadd.f32 %v2444, %v2618
    %v2651 = vadd.f32 %v2515, %v2619
    %v2652 = vadd.f32 %v2517, %v2620
    %v2653 = vadd.f32 %v2446, %v2621
    %v2654 = vadd.f32 %v2448, %v2622
    %v2655 = vadd.f32 %v2519, %v2623
    %v2656 = vadd.f32 %v2521, %v2624
    %v2657 = vadd.f32 %v2452, %v2625
    %v2658 = vadd.f32 %v2454, %v2626
    %v2659 = vadd.f32 %v2525, %v2627
    %v2660 = vadd.f32 %v2527, %v2628
    %v2661 = vadd.f32 %v2456, %v2629
    %v2662 = vadd.f32 %v2458, %v2630
    %v2663 = vadd.f32 %v2529, %v2631
    %v2664 = vadd.f32 %v2531, %v2632
    %v2665 = vadd.f32 %v2462, %v2633
    %v2666 = vadd.f32 %v2464, %v2634
    %v2667 = vadd.f32 %v2535, %v2635
    %v2668 = vadd.f32 %v2537, %v2636
    %v2669 = vadd.f32 %v2466, %v2637
    %v2670 = vadd.f32 %v2468, %v2638
    %v2671 = vadd.f32 %v2539, %v2639
    %v2672 = vadd.f32 %v2541, %v2640
    %v2673 = vadd.f32 %v2472, %v2641
    %v2674 = vadd.f32 %v2474, %v2642
    %v2675 = vadd.f32 %v2545, %v2643
    %v2676 = vadd.f32 %v2547, %v2644
    %v2677 = vadd.f32 %v2476, %v2645
    %v2678 = vadd.f32 %v2478, %v2646
    %v2679 = vadd.f32 %v2549, %v2647
    %v2680 = vadd.f32 %v2551, %v2648
    %v2681 = vmul.f32 %v2649, 0.7978846
    %v2682 = vmul.f32 %v2650, 0.7978846
    %v2683 = vmul.f32 %v2651, 0.7978846
    %v2684 = vmul.f32 %v2652, 0.7978846
    %v2685 = vmul.f32 %v2653, 0.7978846
    %v2686 = vmul.f32 %v2654, 0.7978846
    %v2687 = vmul.f32 %v2655, 0.7978846
    %v2688 = vmul.f32 %v2656, 0.7978846
    %v2689 = vmul.f32 %v2657, 0.7978846
    %v2690 = vmul.f32 %v2658, 0.7978846
    %v2691 = vmul.f32 %v2659, 0.7978846
    %v2692 = vmul.f32 %v2660, 0.7978846
    %v2693 = vmul.f32 %v2661, 0.7978846
    %v2694 = vmul.f32 %v2662, 0.7978846
    %v2695 = vmul.f32 %v2663, 0.7978846
    %v2696 = vmul.f32 %v2664, 0.7978846
    %v2697 = vmul.f32 %v2665, 0.7978846
    %v2698 = vmul.f32 %v2666, 0.7978846
    %v2699 = vmul.f32 %v2667, 0.7978846
    %v2700 = vmul.f32 %v2668, 0.7978846
    %v2701 = vmul.f32 %v2669, 0.7978846
    %v2702 = vmul.f32 %v2670, 0.7978846
    %v2703 = vmul.f32 %v2671, 0.7978846
    %v2704 = vmul.f32 %v2672, 0.7978846
    %v2705 = vmul.f32 %v2673, 0.7978846
    %v2706 = vmul.f32 %v2674, 0.7978846
    %v2707 = vmul.f32 %v2675, 0.7978846
    %v2708 = vmul.f32 %v2676, 0.7978846
    %v2709 = vmul.f32 %v2677, 0.7978846
    %v2710 = vmul.f32 %v2678, 0.7978846
    %v2711 = vmul.f32 %v2679, 0.7978846
    %v2712 = vmul.f32 %v2680, 0.7978846
    %v2713 = vtanh.pop %v2681
    %v2714 = vtanh.pop %v2682
    %v2715 = vtanh.pop %v2683
    %v2716 = vtanh.pop %v2684
    %v2717 = vtanh.pop %v2685
    %v2718 = vtanh.pop %v2686
    %v2719 = vtanh.pop %v2687
    %v2720 = vtanh.pop %v2688
    %v2721 = vtanh.pop %v2689
    %v2722 = vtanh.pop %v2690
    %v2723 = vtanh.pop %v2691
    %v2724 = vtanh.pop %v2692
    %v2725 = vtanh.pop %v2693
    %v2726 = vtanh.pop %v2694
    %v2727 = vtanh.pop %v2695
    %v2728 = vtanh.pop %v2696
    %v2729 = vtanh.pop %v2697
    %v2730 = vtanh.pop %v2698
    %v2731 = vtanh.pop %v2699
    %v2732 = vtanh.pop %v2700
    %v2733 = vtanh.pop %v2701
    %v2734 = vtanh.pop %v2702
    %v2735 = vtanh.pop %v2703
    %v2736 = vtanh.pop %v2704
    %v2737 = vtanh.pop %v2705
    %v2738 = vtanh.pop %v2706
    %v2739 = vtanh.pop %v2707
    %v2740 = vtanh.pop %v2708
    %v2741 = vtanh.pop %v2709
    %v2742 = vtanh.pop %v2710
    %v2743 = vtanh.pop %v2711
    %v2744 = vtanh.pop %v2712
    %v2745 = vadd.f32 %v2713, 1.0
    %v2746 = vadd.f32 %v2714, 1.0
    %v2747 = vadd.f32 %v2715, 1.0
    %v2748 = vadd.f32 %v2716, 1.0
    %v2749 = vadd.f32 %v2717, 1.0
    %v2750 = vadd.f32 %v2718, 1.0
    %v2751 = vadd.f32 %v2719, 1.0
    %v2752 = vadd.f32 %v2720, 1.0
    %v2753 = vadd.f32 %v2721, 1.0
    %v2754 = vadd.f32 %v2722, 1.0
    %v2755 = vadd.f32 %v2723, 1.0
    %v2756 = vadd.f32 %v2724, 1.0
    %v2757 = vadd.f32 %v2725, 1.0
    %v2758 = vadd.f32 %v2726, 1.0
    %v2759 = vadd.f32 %v2727, 1.0
    %v2760 = vadd.f32 %v2728, 1.0
    %v2761 = vadd.f32 %v2729, 1.0
    %v2762 = vadd.f32 %v2730, 1.0
    %v2763 = vadd.f32 %v2731, 1.0
    %v2764 = vadd.f32 %v2732, 1.0
    %v2765 = vadd.f32 %v2733, 1.0
    %v2766 = vadd.f32 %v2734, 1.0
    %v2767 = vadd.f32 %v2735, 1.0
    %v2768 = vadd.f32 %v2736, 1.0
    %v2769 = vadd.f32 %v2737, 1.0
    %v2770 = vadd.f32 %v2738, 1.0
    %v2771 = vadd.f32 %v2739, 1.0
    %v2772 = vadd.f32 %v2740, 1.0
    %v2773 = vadd.f32 %v2741, 1.0
    %v2774 = vadd.f32 %v2742, 1.0
    %v2775 = vadd.f32 %v2743, 1.0
    %v2776 = vadd.f32 %v2744, 1.0
    %v2777 = vmul.f32 %v2745, 0.5
    %v2778 = vmul.f32 %v2746, 0.5
    %v2779 = vmul.f32 %v2747, 0.5
    %v2780 = vmul.f32 %v2748, 0.5
    %v2781 = vmul.f32 %v2749, 0.5
    %v2782 = vmul.f32 %v2750, 0.5
    %v2783 = vmul.f32 %v2751, 0.5
    %v2784 = vmul.f32 %v2752, 0.5
    %v2785 = vmul.f32 %v2753, 0.5
    %v2786 = vmul.f32 %v2754, 0.5
    %v2787 = vmul.f32 %v2755, 0.5
    %v2788 = vmul.f32 %v2756, 0.5
    %v2789 = vmul.f32 %v2757, 0.5
    %v2790 = vmul.f32 %v2758, 0.5
    %v2791 = vmul.f32 %v2759, 0.5
    %v2792 = vmul.f32 %v2760, 0.5
    %v2793 = vmul.f32 %v2761, 0.5
    %v2794 = vmul.f32 %v2762, 0.5
    %v2795 = vmul.f32 %v2763, 0.5
    %v2796 = vmul.f32 %v2764, 0.5
    %v2797 = vmul.f32 %v2765, 0.5
    %v2798 = vmul.f32 %v2766, 0.5
    %v2799 = vmul.f32 %v2767, 0.5
    %v2800 = vmul.f32 %v2768, 0.5
    %v2801 = vmul.f32 %v2769, 0.5
    %v2802 = vmul.f32 %v2770, 0.5
    %v2803 = vmul.f32 %v2771, 0.5
    %v2804 = vmul.f32 %v2772, 0.5
    %v2805 = vmul.f32 %v2773, 0.5
    %v2806 = vmul.f32 %v2774, 0.5
    %v2807 = vmul.f32 %v2775, 0.5
    %v2808 = vmul.f32 %v2776, 0.5
    %v2809 = vmul.f32 %v2442, %v2777
    %v2810 = vmul.f32 %v2444, %v2778
    %v2811 = vmul.f32 %v2515, %v2779
    %v2812 = vmul.f32 %v2517, %v2780
    %v2813 = vmul.f32 %v2446, %v2781
    %v2814 = vmul.f32 %v2448, %v2782
    %v2815 = vmul.f32 %v2519, %v2783
    %v2816 = vmul.f32 %v2521, %v2784
    %v2817 = vmul.f32 %v2452, %v2785
    %v2818 = vmul.f32 %v2454, %v2786
    %v2819 = vmul.f32 %v2525, %v2787
    %v2820 = vmul.f32 %v2527, %v2788
    %v2821 = vmul.f32 %v2456, %v2789
    %v2822 = vmul.f32 %v2458, %v2790
    %v2823 = vmul.f32 %v2529, %v2791
    %v2824 = vmul.f32 %v2531, %v2792
    %v2825 = vmul.f32 %v2462, %v2793
    %v2826 = vmul.f32 %v2464, %v2794
    %v2827 = vmul.f32 %v2535, %v2795
    %v2828 = vmul.f32 %v2537, %v2796
    %v2829 = vmul.f32 %v2466, %v2797
    %v2830 = vmul.f32 %v2468, %v2798
    %v2831 = vmul.f32 %v2539, %v2799
    %v2832 = vmul.f32 %v2541, %v2800
    %v2833 = vmul.f32 %v2472, %v2801
    %v2834 = vmul.f32 %v2474, %v2802
    %v2835 = vmul.f32 %v2545, %v2803
    %v2836 = vmul.f32 %v2547, %v2804
    %v2837 = vmul.f32 %v2476, %v2805
    %v2838 = vmul.f32 %v2478, %v2806
    %v2839 = vmul.f32 %v2549, %v2807
    %v2840 = vmul.f32 %v2551, %v2808
    %v2841 = vpack.c.bf16 %v2813, %v2809
    %v2842 = vpack.c.bf16 %v2814, %v2810
    %v2843 = vpack.c.bf16 %v2815, %v2811
    %v2844 = vpack.c.bf16 %v2816, %v2812
    %v2845 = vpack.c.bf16 %v2821, %v2817
    %v2846 = vpack.c.bf16 %v2822, %v2818
    %v2847 = vpack.c.bf16 %v2823, %v2819
    %v2848 = vpack.c.bf16 %v2824, %v2820
    %v2849 = vpack.c.bf16 %v2829, %v2825
    %v2850 = vpack.c.bf16 %v2830, %v2826
    %v2851 = vpack.c.bf16 %v2831, %v2827
    %v2852 = vpack.c.bf16 %v2832, %v2828
    %v2853 = vpack.c.bf16 %v2837, %v2833
    %v2854 = vpack.c.bf16 %v2838, %v2834
    %v2855 = vpack.c.bf16 %v2839, %v2835
    %v2856 = vpack.c.bf16 %v2840, %v2836
    %v2857 = vld [vmem:[#allocation13] sm:$0xf]
    %v2858 = vld [vmem:[#allocation13 + $0x4] sm:$0xf]
    %v2859 = vld [vmem:[#allocation13 + $0x8] sm:$0xf]
    %v2860 = vld [vmem:[#allocation13 + $0xc] sm:$0xf]
    %v2861 = vld [vmem:[#allocation13 + $0x10] sm:$0xf]
    %v2862 = vld [vmem:[#allocation13 + $0x14] sm:$0xf]
    %v2863 = vld [vmem:[#allocation13 + $0x18] sm:$0xf]
    %v2864 = vld [vmem:[#allocation13 + $0x1c] sm:$0xf]
    %v2865 = vld [vmem:[#allocation13 + $0x20] sm:$0xf]
    %v2866 = vld [vmem:[#allocation13 + $0x24] sm:$0xf]
    %v2867 = vld [vmem:[#allocation13 + $0x28] sm:$0xf]
    %v2868 = vld [vmem:[#allocation13 + $0x2c] sm:$0xf]
    %v2869 = vld [vmem:[#allocation13 + $0x30] sm:$0xf]
    %v2870 = vld [vmem:[#allocation13 + $0x34] sm:$0xf]
    %v2871 = vld [vmem:[#allocation13 + $0x38] sm:$0xf]
    %v2872 = vld [vmem:[#allocation13 + $0x3c] sm:$0xf]
    %v2873 = vld [vmem:[#allocation13 + $0x40] sm:$0xf]
    %v2874 = vld [vmem:[#allocation13 + $0x44] sm:$0xf]
    %v2875 = vld [vmem:[#allocation13 + $0x48] sm:$0xf]
    %v2876 = vld [vmem:[#allocation13 + $0x4c] sm:$0xf]
    %v2877 = vld [vmem:[#allocation13 + $0x50] sm:$0xf]
    %v2878 = vld [vmem:[#allocation13 + $0x54] sm:$0xf]
    %v2879 = vld [vmem:[#allocation13 + $0x58] sm:$0xf]
    %v2880 = vld [vmem:[#allocation13 + $0x5c] sm:$0xf]
    %v2881 = vld [vmem:[#allocation13 + $0x60] sm:$0xf]
    %v2882 = vld [vmem:[#allocation13 + $0x64] sm:$0xf]
    %v2883 = vld [vmem:[#allocation13 + $0x68] sm:$0xf]
    %v2884 = vld [vmem:[#allocation13 + $0x6c] sm:$0xf]
    %v2885 = vld [vmem:[#allocation13 + $0x70] sm:$0xf]
    %v2886 = vld [vmem:[#allocation13 + $0x74] sm:$0xf]
    %v2887 = vld [vmem:[#allocation13 + $0x78] sm:$0xf]
    %v2888 = vld [vmem:[#allocation13 + $0x7c] sm:$0xf]
    %v2889 = vld [vmem:[#allocation13 + $0x80] sm:$0xf]
    %v2890 = vld [vmem:[#allocation13 + $0x84] sm:$0xf]
    %v2891 = vld [vmem:[#allocation13 + $0x88] sm:$0xf]
    %v2892 = vld [vmem:[#allocation13 + $0x8c] sm:$0xf]
    %v2893 = vld [vmem:[#allocation13 + $0x90] sm:$0xf]
    %v2894 = vld [vmem:[#allocation13 + $0x94] sm:$0xf]
    %v2895 = vld [vmem:[#allocation13 + $0x98] sm:$0xf]
    %v2896 = vld [vmem:[#allocation13 + $0x9c] sm:$0xf]
    %v2897 = vld [vmem:[#allocation13 + $0xa0] sm:$0xf]
    %v2898 = vld [vmem:[#allocation13 + $0xa4] sm:$0xf]
    %v2899 = vld [vmem:[#allocation13 + $0xa8] sm:$0xf]
    %v2900 = vld [vmem:[#allocation13 + $0xac] sm:$0xf]
    %v2901 = vld [vmem:[#allocation13 + $0xb0] sm:$0xf]
    %v2902 = vld [vmem:[#allocation13 + $0xb4] sm:$0xf]
    %v2903 = vld [vmem:[#allocation13 + $0xb8] sm:$0xf]
    %v2904 = vld [vmem:[#allocation13 + $0xbc] sm:$0xf]
    %v2905 = vld [vmem:[#allocation13 + $0xc0] sm:$0xf]
    %v2906 = vld [vmem:[#allocation13 + $0xc4] sm:$0xf]
    %v2907 = vld [vmem:[#allocation13 + $0xc8] sm:$0xf]
    %v2908 = vld [vmem:[#allocation13 + $0xcc] sm:$0xf]
    %v2909 = vld [vmem:[#allocation13 + $0xd0] sm:$0xf]
    %v2910 = vld [vmem:[#allocation13 + $0xd4] sm:$0xf]
    %v2911 = vld [vmem:[#allocation13 + $0xd8] sm:$0xf]
    %v2912 = vld [vmem:[#allocation13 + $0xdc] sm:$0xf]
    %v2913 = vld [vmem:[#allocation13 + $0xe0] sm:$0xf]
    %v2914 = vld [vmem:[#allocation13 + $0xe4] sm:$0xf]
    %v2915 = vld [vmem:[#allocation13 + $0xe8] sm:$0xf]
    %v2916 = vld [vmem:[#allocation13 + $0xec] sm:$0xf]
    %v2917 = vld [vmem:[#allocation13 + $0xf0] sm:$0xf]
    %v2918 = vld [vmem:[#allocation13 + $0xf4] sm:$0xf]
    %v2919 = vld [vmem:[#allocation13 + $0xf8] sm:$0xf]
    %v2920 = vld [vmem:[#allocation13 + $0xfc] sm:$0xf]
    %v2921 = vld [vmem:[%s13] sm:$0x1]
    %v2923 = vlaneseq
    %v2924 = vshrl.u32 %v2923, 7
    %v2925 = vsub.s32 0, %v2924
    %v2926 = vrot.slane %v2921, %v2925
    %v2992 = vunpack.c.l.b16 %v2857
    %v2993 = vunpack.c.l.b16 %v2858
    %v2994 = vunpack.c.l.b16 %v2859
    %v2995 = vunpack.c.l.b16 %v2860
    %v2996 = vunpack.c.l.b16 %v2861
    %v2997 = vunpack.c.l.b16 %v2862
    %v2998 = vunpack.c.l.b16 %v2863
    %v2999 = vunpack.c.l.b16 %v2864
    %v3000 = vunpack.c.l.b16 %v2865
    %v3001 = vunpack.c.l.b16 %v2866
    %v3002 = vunpack.c.l.b16 %v2867
    %v3003 = vunpack.c.l.b16 %v2868
    %v3004 = vunpack.c.l.b16 %v2869
    %v3005 = vunpack.c.l.b16 %v2870
    %v3006 = vunpack.c.l.b16 %v2871
    %v3007 = vunpack.c.l.b16 %v2872
    %v3008 = vunpack.c.l.b16 %v2873
    %v3009 = vunpack.c.l.b16 %v2874
    %v3010 = vunpack.c.l.b16 %v2875
    %v3011 = vunpack.c.l.b16 %v2876
    %v3012 = vunpack.c.l.b16 %v2877
    %v3013 = vunpack.c.l.b16 %v2878
    %v3014 = vunpack.c.l.b16 %v2879
    %v3015 = vunpack.c.l.b16 %v2880
    %v3016 = vunpack.c.l.b16 %v2881
    %v3017 = vunpack.c.l.b16 %v2882
    %v3018 = vunpack.c.l.b16 %v2883
    %v3019 = vunpack.c.l.b16 %v2884
    %v3020 = vunpack.c.l.b16 %v2885
    %v3021 = vunpack.c.l.b16 %v2886
    %v3022 = vunpack.c.l.b16 %v2887
    %v3023 = vunpack.c.l.b16 %v2888
    %v3024 = vunpack.c.l.b16 %v2889
    %v3025 = vunpack.c.l.b16 %v2890
    %v3026 = vunpack.c.l.b16 %v2891
    %v3027 = vunpack.c.l.b16 %v2892
    %v3028 = vunpack.c.l.b16 %v2893
    %v3029 = vunpack.c.l.b16 %v2894
    %v3030 = vunpack.c.l.b16 %v2895
    %v3031 = vunpack.c.l.b16 %v2896
    %v3032 = vunpack.c.l.b16 %v2897
    %v3033 = vunpack.c.l.b16 %v2898
    %v3034 = vunpack.c.l.b16 %v2899
    %v3035 = vunpack.c.l.b16 %v2900
    %v3036 = vunpack.c.l.b16 %v2901
    %v3037 = vunpack.c.l.b16 %v2902
    %v3038 = vunpack.c.l.b16 %v2903
    %v3039 = vunpack.c.l.b16 %v2904
    %v3040 = vunpack.c.l.b16 %v2905
    %v3041 = vunpack.c.l.b16 %v2906
    %v3042 = vunpack.c.l.b16 %v2907
    %v3043 = vunpack.c.l.b16 %v2908
    %v3044 = vunpack.c.l.b16 %v2909
    %v3045 = vunpack.c.l.b16 %v2910
    %v3046 = vunpack.c.l.b16 %v2911
    %v3047 = vunpack.c.l.b16 %v2912
    %v3048 = vunpack.c.l.b16 %v2913
    %v3049 = vunpack.c.l.b16 %v2914
    %v3050 = vunpack.c.l.b16 %v2915
    %v3051 = vunpack.c.l.b16 %v2916
    %v3052 = vunpack.c.l.b16 %v2917
    %v3053 = vunpack.c.l.b16 %v2918
    %v3054 = vunpack.c.l.b16 %v2919
    %v3055 = vunpack.c.l.b16 %v2920
    %v3056 = vpack.c.b16 %v2993, %v2992
    %v3057 = vpack.c.b16 %v2995, %v2994
    %v3058 = vpack.c.b16 %v2997, %v2996
    %v3059 = vpack.c.b16 %v2999, %v2998
    %v3060 = vpack.c.b16 %v3001, %v3000
    %v3061 = vpack.c.b16 %v3003, %v3002
    %v3062 = vpack.c.b16 %v3005, %v3004
    %v3063 = vpack.c.b16 %v3007, %v3006
    %v3064 = vpack.c.b16 %v3009, %v3008
    %v3065 = vpack.c.b16 %v3011, %v3010
    %v3066 = vpack.c.b16 %v3013, %v3012
    %v3067 = vpack.c.b16 %v3015, %v3014
    %v3068 = vpack.c.b16 %v3017, %v3016
    %v3069 = vpack.c.b16 %v3019, %v3018
    %v3070 = vpack.c.b16 %v3021, %v3020
    %v3071 = vpack.c.b16 %v3023, %v3022
    %v3072 = vpack.c.b16 %v3025, %v3024
    %v3073 = vpack.c.b16 %v3027, %v3026
    %v3074 = vpack.c.b16 %v3029, %v3028
    %v3075 = vpack.c.b16 %v3031, %v3030
    %v3076 = vpack.c.b16 %v3033, %v3032
    %v3077 = vpack.c.b16 %v3035, %v3034
    %v3078 = vpack.c.b16 %v3037, %v3036
    %v3079 = vpack.c.b16 %v3039, %v3038
    %v3080 = vpack.c.b16 %v3041, %v3040
    %v3081 = vpack.c.b16 %v3043, %v3042
    %v3082 = vpack.c.b16 %v3045, %v3044
    %v3083 = vpack.c.b16 %v3047, %v3046
    %v3084 = vpack.c.b16 %v3049, %v3048
    %v3085 = vpack.c.b16 %v3051, %v3050
    %v3086 = vpack.c.b16 %v3053, %v3052
    %v3087 = vpack.c.b16 %v3055, %v3054
    %3120 = vmatprep.subr.bf16.mxu0 0
    %3121 = vmatpush1.bf16.msra.mxu0 %v3056
    %3122 = vmatprep.subr.bf16.mxu0 0
    %3123 = vmatpush1.bf16.msra.mxu0 %v3057
    %3124 = vmatprep.subr.bf16.mxu0 0
    %3125 = vmatpush1.bf16.msra.mxu0 %v3058
    %3126 = vmatprep.subr.bf16.mxu0 0
    %3127 = vmatpush1.bf16.msra.mxu0 %v3059
    %3128 = vmatprep.subr.bf16.mxu0 0
    %3129 = vmatpush1.bf16.msra.mxu0 %v3060
    %3130 = vmatprep.subr.bf16.mxu0 0
    %3131 = vmatpush1.bf16.msra.mxu0 %v3061
    %3132 = vmatprep.subr.bf16.mxu0 0
    %3133 = vmatpush1.bf16.msra.mxu0 %v3062
    %3134 = vmatprep.subr.bf16.mxu0 0
    %3135 = vmatpush1.bf16.msra.mxu0 %v3063
    %3136 = vmatprep.subr.bf16.mxu0 0
    %3137 = vmatpush1.bf16.msra.mxu0 %v3064
    %3138 = vmatprep.subr.bf16.mxu0 0
    %3139 = vmatpush1.bf16.msra.mxu0 %v3065
    %3140 = vmatprep.subr.bf16.mxu0 0
    %3141 = vmatpush1.bf16.msra.mxu0 %v3066
    %3142 = vmatprep.subr.bf16.mxu0 0
    %3143 = vmatpush1.bf16.msra.mxu0 %v3067
    %3144 = vmatprep.subr.bf16.mxu0 0
    %3145 = vmatpush1.bf16.msra.mxu0 %v3068
    %3146 = vmatprep.subr.bf16.mxu0 0
    %3147 = vmatpush1.bf16.msra.mxu0 %v3069
    %3148 = vmatprep.subr.bf16.mxu0 0
    %3149 = vmatpush1.bf16.msra.mxu0 %v3070
    %3150 = vmatprep.subr.bf16.mxu0 0
    %3151 = vmatpush1.bf16.msra.mxu0 %v3071
    %3152 = vmatprep.mubr.bf16.mxu0 %v2842
    %3153 = vmatmul.mubr.bf16.gmra.mrb[0].mxu0 %v2841
    %v3154 = vpop.f32.mrb[0].mxu0
    %v3155 = vadd.f32 %v2926, %v3154
    %v3156 = vpop.f32.mrb[0].mxu0
    %v3157 = vpop.f32.mrb[0].mxu0
    %v3158 = vadd.f32 %v2926, %v3157
    %v3159 = vpop.f32.mrb[0].mxu0
    %3160 = vmatprep.mubr.bf16.mxu0 %v2846
    %3161 = vmatmul.mubr.bf16.gmra.mrb[0].mxu0 %v2845
    %v3162 = vpop.f32.mrb[0].mxu0
    %v3163 = vadd.f32 %v2926, %v3162
    %v3164 = vpop.f32.mrb[0].mxu0
    %v3165 = vpop.f32.mrb[0].mxu0
    %v3166 = vadd.f32 %v2926, %v3165
    %v3167 = vpop.f32.mrb[0].mxu0
    %3168 = vmatprep.mubr.bf16.mxu0 %v2850
    %3169 = vmatmul.mubr.bf16.gmra.mrb[0].mxu0 %v2849
    %v3170 = vpop.f32.mrb[0].mxu0
    %v3171 = vadd.f32 %v2926, %v3170
    %v3172 = vpop.f32.mrb[0].mxu0
    %v3173 = vpop.f32.mrb[0].mxu0
    %v3174 = vadd.f32 %v2926, %v3173
    %v3175 = vpop.f32.mrb[0].mxu0
    %3176 = vmatprep.mubr.bf16.mxu0 %v2854
    %3177 = vmatmul.mubr.bf16.gmra.mrb[0].mxu0 %v2853
    %v3178 = vpop.f32.mrb[0].mxu0
    %v3179 = vadd.f32 %v2926, %v3178
    %v3180 = vpop.f32.mrb[0].mxu0
    %v3181 = vpop.f32.mrb[0].mxu0
    %v3182 = vadd.f32 %v2926, %v3181
    %v3183 = vpop.f32.mrb[0].mxu0
    %3184 = vdwg.mxu0
    %3185 = vmatprep.subr.bf16.mxu0 0
    %3186 = vmatpush1.bf16.msra.mxu0 %v3072
    %3187 = vmatprep.subr.bf16.mxu0 0
    %3188 = vmatpush1.bf16.msra.mxu0 %v3073
    %3189 = vmatprep.subr.bf16.mxu0 0
    %3190 = vmatpush1.bf16.msra.mxu0 %v3074
    %3191 = vmatprep.subr.bf16.mxu0 0
    %3192 = vmatpush1.bf16.msra.mxu0 %v3075
    %3193 = vmatprep.subr.bf16.mxu0 0
    %3194 = vmatpush1.bf16.msra.mxu0 %v3076
    %3195 = vmatprep.subr.bf16.mxu0 0
    %3196 = vmatpush1.bf16.msra.mxu0 %v3077
    %3197 = vmatprep.subr.bf16.mxu0 0
    %3198 = vmatpush1.bf16.msra.mxu0 %v3078
    %3199 = vmatprep.subr.bf16.mxu0 0
    %3200 = vmatpush1.bf16.msra.mxu0 %v3079
    %3201 = vmatprep.subr.bf16.mxu0 0
    %3202 = vmatpush1.bf16.msra.mxu0 %v3080
    %3203 = vmatprep.subr.bf16.mxu0 0
    %3204 = vmatpush1.bf16.msra.mxu0 %v3081
    %3205 = vmatprep.subr.bf16.mxu0 0
    %3206 = vmatpush1.bf16.msra.mxu0 %v3082
    %3207 = vmatprep.subr.bf16.mxu0 0
    %3208 = vmatpush1.bf16.msra.mxu0 %v3083
    %3209 = vmatprep.subr.bf16.mxu0 0
    %3210 = vmatpush1.bf16.msra.mxu0 %v3084
    %3211 = vmatprep.subr.bf16.mxu0 0
    %3212 = vmatpush1.bf16.msra.mxu0 %v3085
    %3213 = vmatprep.subr.bf16.mxu0 0
    %3214 = vmatpush1.bf16.msra.mxu0 %v3086
    %3215 = vmatprep.subr.bf16.mxu0 0
    %3216 = vmatpush1.bf16.msra.mxu0 %v3087
    %3217 = vmatprep.mubr.bf16.mxu0 %v2844
    %3218 = vmatmul.mubr.bf16.gmra.mrb[0].mxu0 %v2843
    %v3219 = vpop.f32.mrb[0].mxu0
    %v3220 = vadd.f32 %v3155, %v3219
    %v3221 = vpop.f32.mrb[0].mxu0
    %v3222 = vpop.f32.mrb[0].mxu0
    %v3223 = vadd.f32 %v3158, %v3222
    %v3224 = vpop.f32.mrb[0].mxu0
    %3225 = vmatprep.mubr.bf16.mxu0 %v2848
    %3226 = vmatmul.mubr.bf16.gmra.mrb[0].mxu0 %v2847
    %v3227 = vpop.f32.mrb[0].mxu0
    %v3228 = vadd.f32 %v3163, %v3227
    %v3229 = vpop.f32.mrb[0].mxu0
    %v3230 = vpop.f32.mrb[0].mxu0
    %v3231 = vadd.f32 %v3166, %v3230
    %v3232 = vpop.f32.mrb[0].mxu0
    %3233 = vmatprep.mubr.bf16.mxu0 %v2852
    %3234 = vmatmul.mubr.bf16.gmra.mrb[0].mxu0 %v2851
    %v3235 = vpop.f32.mrb[0].mxu0
    %v3236 = vadd.f32 %v3171, %v3235
    %v3237 = vpop.f32.mrb[0].mxu0
    %v3238 = vpop.f32.mrb[0].mxu0
    %v3239 = vadd.f32 %v3174, %v3238
    %v3240 = vpop.f32.mrb[0].mxu0
    %3241 = vmatprep.mubr.bf16.mxu0 %v2856
    %3242 = vmatmul.mubr.bf16.gmra.mrb[0].mxu0 %v2855
    %v3243 = vpop.f32.mrb[0].mxu0
    %v3244 = vadd.f32 %v3179, %v3243
    %v3245 = vpop.f32.mrb[0].mxu0
    %v3246 = vpop.f32.mrb[0].mxu0
    %v3247 = vadd.f32 %v3182, %v3246
    %v3248 = vpop.f32.mrb[0].mxu0
    %3249 = vdwg.mxu0
    %v3250 = vadd.f32 %v2063, %v3220
    %v3251 = vadd.f32 %v2064, %v3223
    %v3252 = vadd.f32 %v2065, %v3228
    %v3253 = vadd.f32 %v2066, %v3231
    %v3254 = vadd.f32 %v2067, %v3236
    %v3255 = vadd.f32 %v2068, %v3239
    %v3256 = vadd.f32 %v2069, %v3244
    %v3257 = vadd.f32 %v2070, %v3247
    %3258 = vst [vmem:[#allocation14] sm:$0xff] %v3250
    %3259 = vst [vmem:[#allocation14 + $0x8] sm:$0xff] %v3251
    %3260 = vst [vmem:[#allocation14 + $0x10] sm:$0xff] %v3252
    %3261 = vst [vmem:[#allocation14 + $0x18] sm:$0xff] %v3253
    %3262 = vst [vmem:[#allocation14 + $0x20] sm:$0xff] %v3254
    %3263 = vst [vmem:[#allocation14 + $0x28] sm:$0xff] %v3255
    %3264 = vst [vmem:[#allocation14 + $0x30] sm:$0xff] %v3256
    %3265 = vst [vmem:[#allocation14 + $0x38] sm:$0xff] %v3257
    // Predicated region
    $region86: #{tpu_custom_call.1} parent=1 // pred_check
      _
    $region87: #{tpu_custom_call.1} parent=1 // pred_check_branch
      %3267 = sbr.rel (0) target = $region89
    $region88: #{tpu_custom_call.1} parent=1 // pred_region
      %s3269 = ssub.s32 1024, 1024
      %3270 = vsyncadd [#allocation4], %s3269
      %s3271 = sshll.u32 [#allocation14], 4
      %s3272 = int_to_ptr.vmem [resolvable:$true] %s3271
      %3277 = dma.vmem_to_hbm [thread:$0]  %s3272, 1024, %s14, [#allocation4], 128, 128, 8
    $region89: #{tpu_custom_call.1} parent=1 // pred_fallthru
      _
    // Predicated region
    $region90: #{tpu_custom_call.1} parent=1 // pred_check
      _
    $region91: #{tpu_custom_call.1} parent=1 // pred_check_branch
      %3279 = sbr.rel (0) target = $region93
    $region92: #{tpu_custom_call.1} parent=1 // pred_region
      %3280 = dma.done [#allocation4], 1024
    $region93: #{tpu_custom_call.1} parent=1 // pred_fallthru
      _
    %3281 = vsyncpa [#allocation3], 1
    %3282 = vsyncpa [#allocation6], 1
    %3283 = vsyncpa [#allocation9], 1
    %3284 = vsyncpa [#allocation12], 1
    %3285 = vsyncpa [#allocation4], 1

</llo_original>
